<compile_context>
chip_gen: v6e
topology: v6e:2x2x1
jax: 0.10.0
libtpu: 0.0.40
codegen_flags: <defaults>
</compile_context>

<pallas_src>
import functools

import jax
import jax.numpy as jnp
from jax.experimental import pallas as pl
from jax.experimental.pallas import tpu as pltpu

_LANE = 128


def _round_up(x, m):
    return (x + m - 1) // m * m


def _pick_dblk(D, max_dblk=8):
    for cand in range(min(max_dblk, D), 0, -1):
        if D % cand == 0:
            return cand
    return 1


# ------------------------------ Pallas kernel ------------------------------

def _singleconv_kernel(x_ref, w_ref, s_ref, b_ref, o_ref, *, dblk, H):
    """relu(conv3x3x3(x) * scale + shift) for one (batch, depth-block) step.

    x_ref : (1, dblk+2, Hp, K1p)   padded input depth slab, bf16 (K1p = 128-pad of Wp*Cin)
    w_ref : (3, 3*K1p, W*Cout)     width-Toeplitz conv weights, bf16 (kd, K, N)
    s_ref : (1, W*Cout)            folded BN scale, f32 (tiled over w)
    b_ref : (1, W*Cout)            folded BN shift (incl. conv bias), f32
    o_ref : (1, dblk, H, W*Cout)   f32 output block, lane-dense and unpadded
    """
    k1p = x_ref.shape[-1]
    n = o_ref.shape[-1]
    m = dblk * H

    acc = jnp.zeros((m, n), jnp.float32)
    for kd in range(3):                         # 3 wide MXU matmuls per step
        # kh taps folded into K via lane-aligned concat (each piece is k1p=128 wide).
        xmat = jnp.concatenate(
            [x_ref[0, kd:kd + dblk, kh:kh + H, :].reshape(m, k1p)
             for kh in range(3)], axis=-1)      # (m, 3*k1p)
        acc = acc + jnp.dot(xmat, w_ref[kd],
                            preferred_element_type=jnp.float32)

    y = jnp.maximum(acc * s_ref[...] + b_ref[...], 0.0)     # fused BN + ReLU, f32
    o_ref[...] = y.reshape(o_ref.shape).astype(o_ref.dtype)


# ------------------------------ host wrapper -------------------------------

@jax.jit
def singleconv_forward(x_ncdhw, conv_w, conv_b, bn_gamma, bn_beta,
                       bn_mean, bn_var, eps=1e-5):
    """PyTorch SingleConv forward: Conv3d(3, pad=1) -> BatchNorm3d(eval) -> ReLU.

    x_ncdhw: (B, Cin, D, H, W) f32; conv_w: (Cout, Cin, 3, 3, 3); returns NCDHW f32.
    """
    B, Cin, D, H, W = x_ncdhw.shape
    Cout = conv_w.shape[0]
    Dp, Hp, Wp = D + 2, H + 2, W + 2
    dblk = _pick_dblk(D)
    nd = D // dblk
    k1 = Wp * Cin
    k1p = _round_up(k1, _LANE)
    n = W * Cout

    # Activation: NCDHW -> channels-last, zero-pad spatially, flatten rows to
    # (Hp, Wp*Cin) padded to a 128-lane multiple, then halo-duplicated depth
    # slabs of dblk+2 rows so each grid step fetches only what it needs.
    x = jnp.transpose(x_ncdhw, (0, 2, 3, 4, 1)).astype(jnp.bfloat16)
    xp = jnp.pad(x, ((0, 0), (1, 1), (1, 1), (1, 1), (0, 0)))
    xp = xp.reshape(B, Dp, Hp, k1)
    xp = jnp.pad(xp, ((0, 0), (0, 0), (0, 0), (0, k1p - k1)))
    slabs = jnp.stack([xp[:, j * dblk:j * dblk + dblk + 2] for j in range(nd)],
                      axis=1).reshape(B * nd, dblk + 2, Hp, k1p)

    # Weights: fold kw into a width-Toeplitz matrix.  T[kd, kh*K1p + p*Cin + c,
    # w*Cout + o] = conv_w[o, c, kd, kh, p-w] for 0 <= p-w < 3, else 0.
    wt = jnp.transpose(conv_w, (2, 3, 4, 1, 0))                  # (kd, kh, kw, Cin, Cout)
    ind = (jnp.arange(Wp)[:, None, None]
           == jnp.arange(3)[None, :, None] + jnp.arange(W)[None, None, :])
    toe = jnp.einsum('pkw,dhkco->dhpcwo', ind.astype(jnp.float32), wt)
    toe = toe.reshape(3, 3, k1, n)
    toe = jnp.pad(toe, ((0, 0), (0, 0), (0, k1p - k1), (0, 0)))
    toe = toe.reshape(3, 3 * k1p, n).astype(jnp.bfloat16)

    # Eval-mode BatchNorm + conv bias folded into a per-channel affine, tiled
    # over w to match the (w, cout) output lane layout.
    scale = bn_gamma / jnp.sqrt(bn_var + eps)
    shift = bn_beta + (conv_b - bn_mean) * scale
    s_vec = jnp.tile(scale, W).reshape(1, n).astype(jnp.float32)
    b_vec = jnp.tile(shift, W).reshape(1, n).astype(jnp.float32)

    kernel = functools.partial(_singleconv_kernel, dblk=dblk, H=H)
    flops = 2 * (B * nd) * 3 * (dblk * H) * (3 * k1p) * n
    bytes_accessed = (slabs.size * 2 + toe.size * 2
                      + (s_vec.size + b_vec.size) * 4 + B * D * H * n * 4)

    out = pl.pallas_call(
        kernel,
        out_shape=jax.ShapeDtypeStruct((B * nd, dblk, H, n), jnp.float32),
        grid=(B, nd),
        in_specs=[
            # depth-tiled activation slab (only dblk+2 rows per step)
            pl.BlockSpec((1, dblk + 2, Hp, k1p), lambda b, j: (b * nd + j, 0, 0, 0)),
            # grid-invariant weights / affine (constant block index -> fetched once)
            pl.BlockSpec((3, 3 * k1p, n), lambda b, j: (0, 0, 0)),
            pl.BlockSpec((1, n), lambda b, j: (0, 0)),
            pl.BlockSpec((1, n), lambda b, j: (0, 0)),
        ],
        out_specs=pl.BlockSpec((1, dblk, H, n), lambda b, j: (b * nd + j, 0, 0, 0)),
        compiler_params=pltpu.CompilerParams(
            dimension_semantics=("parallel", "parallel")),
        cost_estimate=pl.CostEstimate(
            flops=flops, transcendentals=0, bytes_accessed=bytes_accessed),
    )(slabs, toe, s_vec, b_vec)

    # (B*nd, dblk, H, W*Cout) -> PyTorch NCDHW layout (no channel padding to drop).
    out = out.reshape(B, D, H, W, Cout)
    return jnp.transpose(out, (0, 4, 1, 2, 3))


# ------------------------------ reference ----------------------------------

def _reference(x_ncdhw, conv_w, conv_b, bn_gamma, bn_beta, bn_mean, bn_var,
               eps=1e-5):
    """Pure-JAX reference with the same bf16 inputs / f32 accumulation."""
    x = jnp.transpose(x_ncdhw, (0, 2, 3, 4, 1)).astype(jnp.bfloat16)
    w = jnp.transpose(conv_w, (2, 3, 4, 1, 0)).astype(jnp.bfloat16)   # DHWIO
    y = jax.lax.conv_general_dilated(
        x, w, window_strides=(1, 1, 1),
        padding=((1, 1), (1, 1), (1, 1)),
        dimension_numbers=("NDHWC", "DHWIO", "NDHWC"),
        preferred_element_type=jnp.float32)
    scale = bn_gamma / jnp.sqrt(bn_var + eps)
    shift = bn_beta + (conv_b - bn_mean) * scale
    y = jnp.maximum(y * scale + shift, 0.0)
    return jnp.transpose(y, (0, 4, 1, 2, 3))


# --------------------------------- main -------------------------------------

if __name__ == "__main__":
    key = jax.random.PRNGKey(0)
    k1, k2, k3, k4, k5, k6, k7 = jax.random.split(key, 7)

    B, Cin, D, H, W, Cout = 2, 4, 16, 16, 16, 32
    x = jax.random.normal(k1, (B, Cin, D, H, W), jnp.float32)
    conv_w = jax.random.normal(k2, (Cout, Cin, 3, 3, 3), jnp.float32) / jnp.sqrt(27.0 * Cin)
    conv_b = 0.05 * jax.random.normal(k3, (Cout,), jnp.float32)
    gamma = 1.0 + 0.1 * jax.random.normal(k4, (Cout,), jnp.float32)
    beta = 0.1 * jax.random.normal(k5, (Cout,), jnp.float32)
    mean = 0.1 * jax.random.normal(k6, (Cout,), jnp.float32)
    var = jax.random.uniform(k7, (Cout,), jnp.float32, minval=0.5, maxval=1.5)

    out = singleconv_forward(x, conv_w, conv_b, gamma, beta, mean, var)
    out = jax.block_until_ready(out)
    assert out.shape == (B, Cout, D, H, W), out.shape
    assert bool(jnp.all(jnp.isfinite(out)))

    ref = jax.block_until_ready(_reference(x, conv_w, conv_b, gamma, beta, mean, var))
    err = float(jnp.max(jnp.abs(out - ref)))
    assert err < 2e-2, f"max abs error {err}"

    print("KERNEL_OK")
</pallas_src>

<mosaic_0001>
module attributes {stable_mosaic.version = 11 : i64} {
  func.func @_singleconv_kernel(%arg0: i32, %arg1: i32, %arg2: memref<1x10x18x128xbf16, #tpu.memory_space<vmem>>, %arg3: memref<3x384x512xbf16, #tpu.memory_space<vmem>>, %arg4: memref<1x512xf32, #tpu.memory_space<vmem>>, %arg5: memref<1x512xf32, #tpu.memory_space<vmem>>, %arg6: memref<1x8x16x512xf32, #tpu.memory_space<vmem>>) attributes {dimension_semantics = [#tpu.dimension_semantics<parallel>, #tpu.dimension_semantics<parallel>], iteration_bounds = array<i64: 2, 2>, scalar_prefetch = 0 : i64, scratch_operands = 0 : i64, tpu.core_type = #tpu.core_type<tc>, window_params = [{transform_indices = @transform_0, window_bounds = array<i64: 1, 10, 18, 128>}, {pipeline_mode = #tpu.pipeline_mode<synchronous>, transform_indices = @transform_1, window_bounds = array<i64: 3, 384, 512>}, {pipeline_mode = #tpu.pipeline_mode<synchronous>, transform_indices = @transform_2, window_bounds = array<i64: 1, 512>}, {pipeline_mode = #tpu.pipeline_mode<synchronous>, transform_indices = @transform_3, window_bounds = array<i64: 1, 512>}, {transform_indices = @transform_4, window_bounds = array<i64: 1, 8, 16, 512>}]} {
    %cst = arith.constant 0.000000e+00 : f32
    %0 = vector.broadcast %cst : f32 to vector<128x512xf32>
    %c0 = arith.constant 0 : index
    %c0_0 = arith.constant 0 : index
    %c0_1 = arith.constant 0 : index
    %c0_2 = arith.constant 0 : index
    %1 = vector.load %arg2[%c0, %c0_0, %c0_1, %c0_2] : memref<1x10x18x128xbf16, #tpu.memory_space<vmem>>, vector<1x8x16x128xbf16>
    %2 = vector.shape_cast %1 : vector<1x8x16x128xbf16> to vector<8x16x128xbf16>
    %3 = vector.shape_cast %2 : vector<8x16x128xbf16> to vector<128x128xbf16>
    %c0_3 = arith.constant 0 : index
    %c0_4 = arith.constant 0 : index
    %c1 = arith.constant 1 : index
    %c0_5 = arith.constant 0 : index
    %4 = vector.load %arg2[%c0_3, %c0_4, %c1, %c0_5] : memref<1x10x18x128xbf16, #tpu.memory_space<vmem>>, vector<1x8x16x128xbf16>
    %5 = vector.shape_cast %4 : vector<1x8x16x128xbf16> to vector<8x16x128xbf16>
    %6 = vector.shape_cast %5 : vector<8x16x128xbf16> to vector<128x128xbf16>
    %c0_6 = arith.constant 0 : index
    %c0_7 = arith.constant 0 : index
    %c2 = arith.constant 2 : index
    %c0_8 = arith.constant 0 : index
    %7 = vector.load %arg2[%c0_6, %c0_7, %c2, %c0_8] : memref<1x10x18x128xbf16, #tpu.memory_space<vmem>>, vector<1x8x16x128xbf16>
    %8 = vector.shape_cast %7 : vector<1x8x16x128xbf16> to vector<8x16x128xbf16>
    %9 = vector.shape_cast %8 : vector<8x16x128xbf16> to vector<128x128xbf16>
    %10 = tpu.concatenate %3, %6, %9 in 1 : vector<128x128xbf16>, vector<128x128xbf16>, vector<128x128xbf16> -> vector<128x384xbf16>
    %c0_9 = arith.constant 0 : index
    %c0_10 = arith.constant 0 : index
    %c0_11 = arith.constant 0 : index
    %11 = vector.load %arg3[%c0_9, %c0_10, %c0_11] : memref<3x384x512xbf16, #tpu.memory_space<vmem>>, vector<1x384x512xbf16>
    %12 = vector.shape_cast %11 : vector<1x384x512xbf16> to vector<384x512xbf16>
    %cst_12 = arith.constant dense<0.000000e+00> : vector<128x512xf32>
    %13 = tpu.matmul %10, %12, %cst_12 {dimension_numbers = #tpu.dot_dimension_numbers<[1], [0], [0], [1], [0, 0, 1, 1], [], []>} : vector<128x384xbf16>, vector<384x512xbf16>, vector<128x512xf32> -> vector<128x512xf32>
    %14 = arith.addf %0, %13 : vector<128x512xf32>
    %c0_13 = arith.constant 0 : index
    %c1_14 = arith.constant 1 : index
    %c0_15 = arith.constant 0 : index
    %c0_16 = arith.constant 0 : index
    %15 = vector.load %arg2[%c0_13, %c1_14, %c0_15, %c0_16] : memref<1x10x18x128xbf16, #tpu.memory_space<vmem>>, vector<1x8x16x128xbf16>
    %16 = vector.shape_cast %15 : vector<1x8x16x128xbf16> to vector<8x16x128xbf16>
    %17 = vector.shape_cast %16 : vector<8x16x128xbf16> to vector<128x128xbf16>
    %c0_17 = arith.constant 0 : index
    %c1_18 = arith.constant 1 : index
    %c1_19 = arith.constant 1 : index
    %c0_20 = arith.constant 0 : index
    %18 = vector.load %arg2[%c0_17, %c1_18, %c1_19, %c0_20] : memref<1x10x18x128xbf16, #tpu.memory_space<vmem>>, vector<1x8x16x128xbf16>
    %19 = vector.shape_cast %18 : vector<1x8x16x128xbf16> to vector<8x16x128xbf16>
    %20 = vector.shape_cast %19 : vector<8x16x128xbf16> to vector<128x128xbf16>
    %c0_21 = arith.constant 0 : index
    %c1_22 = arith.constant 1 : index
    %c2_23 = arith.constant 2 : index
    %c0_24 = arith.constant 0 : index
    %21 = vector.load %arg2[%c0_21, %c1_22, %c2_23, %c0_24] : memref<1x10x18x128xbf16, #tpu.memory_space<vmem>>, vector<1x8x16x128xbf16>
    %22 = vector.shape_cast %21 : vector<1x8x16x128xbf16> to vector<8x16x128xbf16>
    %23 = vector.shape_cast %22 : vector<8x16x128xbf16> to vector<128x128xbf16>
    %24 = tpu.concatenate %17, %20, %23 in 1 : vector<128x128xbf16>, vector<128x128xbf16>, vector<128x128xbf16> -> vector<128x384xbf16>
    %c1_25 = arith.constant 1 : index
    %c0_26 = arith.constant 0 : index
    %c0_27 = arith.constant 0 : index
    %25 = vector.load %arg3[%c1_25, %c0_26, %c0_27] : memref<3x384x512xbf16, #tpu.memory_space<vmem>>, vector<1x384x512xbf16>
    %26 = vector.shape_cast %25 : vector<1x384x512xbf16> to vector<384x512xbf16>
    %cst_28 = arith.constant dense<0.000000e+00> : vector<128x512xf32>
    %27 = tpu.matmul %24, %26, %cst_28 {dimension_numbers = #tpu.dot_dimension_numbers<[1], [0], [0], [1], [0, 0, 1, 1], [], []>} : vector<128x384xbf16>, vector<384x512xbf16>, vector<128x512xf32> -> vector<128x512xf32>
    %28 = arith.addf %14, %27 : vector<128x512xf32>
    %c0_29 = arith.constant 0 : index
    %c2_30 = arith.constant 2 : index
    %c0_31 = arith.constant 0 : index
    %c0_32 = arith.constant 0 : index
    %29 = vector.load %arg2[%c0_29, %c2_30, %c0_31, %c0_32] : memref<1x10x18x128xbf16, #tpu.memory_space<vmem>>, vector<1x8x16x128xbf16>
    %30 = vector.shape_cast %29 : vector<1x8x16x128xbf16> to vector<8x16x128xbf16>
    %31 = vector.shape_cast %30 : vector<8x16x128xbf16> to vector<128x128xbf16>
    %c0_33 = arith.constant 0 : index
    %c2_34 = arith.constant 2 : index
    %c1_35 = arith.constant 1 : index
    %c0_36 = arith.constant 0 : index
    %32 = vector.load %arg2[%c0_33, %c2_34, %c1_35, %c0_36] : memref<1x10x18x128xbf16, #tpu.memory_space<vmem>>, vector<1x8x16x128xbf16>
    %33 = vector.shape_cast %32 : vector<1x8x16x128xbf16> to vector<8x16x128xbf16>
    %34 = vector.shape_cast %33 : vector<8x16x128xbf16> to vector<128x128xbf16>
    %c0_37 = arith.constant 0 : index
    %c2_38 = arith.constant 2 : index
    %c2_39 = arith.constant 2 : index
    %c0_40 = arith.constant 0 : index
    %35 = vector.load %arg2[%c0_37, %c2_38, %c2_39, %c0_40] : memref<1x10x18x128xbf16, #tpu.memory_space<vmem>>, vector<1x8x16x128xbf16>
    %36 = vector.shape_cast %35 : vector<1x8x16x128xbf16> to vector<8x16x128xbf16>
    %37 = vector.shape_cast %36 : vector<8x16x128xbf16> to vector<128x128xbf16>
    %38 = tpu.concatenate %31, %34, %37 in 1 : vector<128x128xbf16>, vector<128x128xbf16>, vector<128x128xbf16> -> vector<128x384xbf16>
    %c2_41 = arith.constant 2 : index
    %c0_42 = arith.constant 0 : index
    %c0_43 = arith.constant 0 : index
    %39 = vector.load %arg3[%c2_41, %c0_42, %c0_43] : memref<3x384x512xbf16, #tpu.memory_space<vmem>>, vector<1x384x512xbf16>
    %40 = vector.shape_cast %39 : vector<1x384x512xbf16> to vector<384x512xbf16>
    %cst_44 = arith.constant dense<0.000000e+00> : vector<128x512xf32>
    %41 = tpu.matmul %38, %40, %cst_44 {dimension_numbers = #tpu.dot_dimension_numbers<[1], [0], [0], [1], [0, 0, 1, 1], [], []>} : vector<128x384xbf16>, vector<384x512xbf16>, vector<128x512xf32> -> vector<128x512xf32>
    %42 = arith.addf %28, %41 : vector<128x512xf32>
    %c0_45 = arith.constant 0 : index
    %c0_46 = arith.constant 0 : index
    %43 = vector.load %arg4[%c0_45, %c0_46] : memref<1x512xf32, #tpu.memory_space<vmem>>, vector<1x512xf32>
    %44 = vector.broadcast %43 : vector<1x512xf32> to vector<128x512xf32>
    %45 = arith.mulf %42, %44 : vector<128x512xf32>
    %c0_47 = arith.constant 0 : index
    %c0_48 = arith.constant 0 : index
    %46 = vector.load %arg5[%c0_47, %c0_48] : memref<1x512xf32, #tpu.memory_space<vmem>>, vector<1x512xf32>
    %47 = vector.broadcast %46 : vector<1x512xf32> to vector<128x512xf32>
    %48 = arith.addf %45, %47 : vector<128x512xf32>
    %cst_49 = arith.constant 0.000000e+00 : f32
    %49 = vector.broadcast %cst_49 : f32 to vector<128x512xf32>
    %50 = arith.maximumf %48, %49 : vector<128x512xf32>
    %51 = vector.shape_cast %50 : vector<128x512xf32> to vector<1x8x16x512xf32>
    %c0_50 = arith.constant 0 : index
    %c0_51 = arith.constant 0 : index
    %c0_52 = arith.constant 0 : index
    %c0_53 = arith.constant 0 : index
    %52 = vector.load %arg6[%c0_50, %c0_51, %c0_52, %c0_53] : memref<1x8x16x512xf32, #tpu.memory_space<vmem>>, vector<1x8x16x512xf32>
    tpu.vector_store %arg6[%c0_50, %c0_51, %c0_52, %c0_53], %51 {strides = array<i32>} : memref<1x8x16x512xf32, #tpu.memory_space<vmem>>, vector<1x8x16x512xf32>,
    return
  }
  func.func @transform_0(%arg0: i32, %arg1: i32) -> (i32, i32, i32, i32) {
    %c2_i32 = arith.constant 2 : i32
    %0 = arith.muli %arg0, %c2_i32 : i32
    %1 = arith.addi %0, %arg1 : i32
    %c0_i32 = arith.constant 0 : i32
    %c0_i32_0 = arith.constant 0 : i32
    %c0_i32_1 = arith.constant 0 : i32
    %c0_i32_2 = arith.constant 0 : i32
    return %1, %c0_i32, %c0_i32_0, %c0_i32_1 : i32, i32, i32, i32
  }
  func.func @transform_1(%arg0: i32, %arg1: i32) -> (i32, i32, i32) {
    %c0_i32 = arith.constant 0 : i32
    %c0_i32_0 = arith.constant 0 : i32
    %c0_i32_1 = arith.constant 0 : i32
    %c0_i32_2 = arith.constant 0 : i32
    return %c0_i32, %c0_i32_0, %c0_i32_1 : i32, i32, i32
  }
  func.func @transform_2(%arg0: i32, %arg1: i32) -> (i32, i32) {
    %c0_i32 = arith.constant 0 : i32
    %c0_i32_0 = arith.constant 0 : i32
    %c0_i32_1 = arith.constant 0 : i32
    return %c0_i32, %c0_i32_0 : i32, i32
  }
  func.func @transform_3(%arg0: i32, %arg1: i32) -> (i32, i32) {
    %c0_i32 = arith.constant 0 : i32
    %c0_i32_0 = arith.constant 0 : i32
    %c0_i32_1 = arith.constant 0 : i32
    return %c0_i32, %c0_i32_0 : i32, i32
  }
  func.func @transform_4(%arg0: i32, %arg1: i32) -> (i32, i32, i32, i32) {
    %c2_i32 = arith.constant 2 : i32
    %0 = arith.muli %arg0, %c2_i32 : i32
    %1 = arith.addi %0, %arg1 : i32
    %c0_i32 = arith.constant 0 : i32
    %c0_i32_0 = arith.constant 0 : i32
    %c0_i32_1 = arith.constant 0 : i32
    %c0_i32_2 = arith.constant 0 : i32
    return %1, %c0_i32, %c0_i32_0, %c0_i32_1 : i32, i32, i32, i32
  }
}

</mosaic_0001>

<llo_original>
// kernel: tile.13
$region0: #{tile.13}
  #allocation0 [shape = 's32[1]{0}', space=sflag, size = 0x4, scoped, tag = 'scoped memory for tile.13']
  %s0 = inlined_call_operand.vmem [shape: f32[32], index: 0, kind: input, shape index: {}]
  %s1 = inlined_call_operand.vmem [shape: f32[16,32], index: 1, kind: output, shape index: {}]
  // Predicated region
  $region2: #{tile.13} parent=0 // pred_check
    _
  $region3: #{tile.13} parent=0 // pred_check_branch
    %3 = sbr.rel (0) target = $region5
  $region4: #{tile.13} parent=0 // pred_region
    _
  $region5: #{tile.13} parent=0 // pred_fallthru
    _
  %v4 = vld [vmem:[%s0] ss:$0 sm:$0xff]
  %5 = vst [vmem:[%s1] sm:$0xff] %v4
  %s6 = scalar_lea.vmem %s1, 8
  %7 = vst [vmem:[%s6] sm:$0xff] %v4

// kernel: tile.14
$region0: #{tile.14}
  %s0 = inlined_call_operand.vmem [shape: f32[16,32], index: 0, kind: input, shape index: {}]
  %s1 = inlined_call_operand.vmem [shape: f32[1,512], index: 1, kind: output, shape index: {}]
  $region1: #{tile.14} parent=0
    #allocation0 [shape = 'u8[16384]{0}', space=vmem, size = 0x4000, scoped, tag = 'scoped mem for output reshape']
    %v2 = vld [vmem:[%s0] ss:$4 sm:$0xf]
    %vm3 = vcmask 261120
    %4 = vst.msk [vmem:[#allocation0] ss:$8 sm:$0xf] %vm3, %v2
    %s5 = scalar_lea.vmem %s0, 3
    %v6 = vld [vmem:[%s5] ss:$4 sm:$0xf]
    %7 = vrot.lane.b32.xlu0 %v6, 96
    %v8 = vpop.permute.xlu0 %7
    %vm9 = vcmask 1048320
    %10 = vst.msk [vmem:[#allocation0] ss:$8 sm:$0xf] %vm9, %v8
    %s11 = scalar_lea.vmem %s0, 2
    %v12 = vld [vmem:[%s11] ss:$4 sm:$0xf]
    %13 = vrot.lane.b32.xlu0 %v12, 64
    %v14 = vpop.permute.xlu0 %13
    %vm15 = vcmask 785920
    %16 = vst.msk [vmem:[#allocation0] ss:$8 sm:$0xf] %vm15, %v14
    %s17 = scalar_lea.vmem %s0, 1
    %v18 = vld [vmem:[%s17] ss:$4 sm:$0xf]
    %19 = vrot.lane.b32.xlu0 %v18, 32
    %v20 = vpop.permute.xlu0 %19
    %vm21 = vcmask 523520
    %22 = vst.msk [vmem:[#allocation0] ss:$8 sm:$0xf] %vm21, %v20
    %s24 = sshll.u32 1, 1
    %s25 = ssub.s32 %s24, 1
    %v27 = vld [vmem:[#allocation0] sm:%s25]
    %s28 = sshll.u32 1, 1
    %s29 = ssub.s32 %s28, 1
    %30 = vst [vmem:[%s1] sm:%s29] %v27
    %s31 = scalar_lea.vmem [#allocation0], 8
    %v32 = vld [vmem:[%s31] sm:%s25]
    %s33 = sshll.u32 1, 1
    %s34 = ssub.s32 %s33, 1
    %s35 = scalar_lea.vmem %s1, 1
    %36 = vst [vmem:[%s35] sm:%s34] %v32
    %s37 = scalar_lea.vmem [#allocation0], 16
    %v38 = vld [vmem:[%s37] sm:%s25]
    %s39 = sshll.u32 1, 1
    %s40 = ssub.s32 %s39, 1
    %s41 = smul.addr 1, 2
    %s42 = scalar_lea.vmem %s1, %s41
    %43 = vst [vmem:[%s42] sm:%s40] %v38
    %s44 = scalar_lea.vmem [#allocation0], 24
    %v45 = vld [vmem:[%s44] sm:%s25]
    %s46 = sshll.u32 1, 1
    %s47 = ssub.s32 %s46, 1
    %s48 = smul.addr 1, 3
    %s49 = scalar_lea.vmem %s1, %s48
    %50 = vst [vmem:[%s49] sm:%s47] %v45

// kernel: singleconv_forward.1
$region0: #{singleconv_forward.1}
  #allocation0 [shape = 'u32[]', space=smem, size = 0x4, offset = 0x4, fixed_abs, tag = 'smem constant byte address 0x4 - core index']
  #allocation1 [shape = 'u32[144,128]{1,0:T(1,128)}', space=vmem, size = 0x12000, scoped, tag = 'internal scratch']
  %s0 = inlined_call_operand.vmem [shape: bf16[4,10,18,128], index: 0, kind: input, shape index: {}]
  %s1 = inlined_call_operand.vmem [shape: bf16[3,384,512], index: 1, kind: input, shape index: {}]
  %s2 = inlined_call_operand.vmem [shape: f32[1,512], index: 2, kind: input, shape index: {}]
  %s3 = inlined_call_operand.vmem [shape: f32[1,512], index: 3, kind: input, shape index: {}]
  %s4 = inlined_call_operand.vmem [shape: f32[4,8,16,512], index: 4, kind: output, shape index: {}]
  %s5 = sld [smem:[#allocation0]]
  $region49: #{singleconv_forward.1} parent=0
    _
  %s7 = ssub.s32 1, %s5
  %s8 = scalar_select 0, %s7, %s5
  loop: start=0, step=1, limit=6
  $region2: #{singleconv_forward.1} parent=0 // loop_pre_header
    _
  $region3: #{singleconv_forward.1} parent=0 // loop_header
    %s10 = sphi 0, %s14
    %p11 = scmp.ge.s32.totalorder %s10, 6
    %s17 = sphi 0, %s29
    %s18 = sphi 0, %s25
    %s19 = sphi 0, %s17
    %s20 = sphi 0, %s18
    %s21 = sphi 0, %s19
    %s22 = sphi 0, %s20
    %s36 = sphi 0, %s38
    %s39 = sphi 0, %s36
    %s40 = sphi 0, %s39
    %s56 = sphi 0, %s40
    %s60 = sphi 0, %s60
    %s62 = sphi 0, %s60
    %s63 = sphi 0, %s62
    %s77 = sphi 0, %s63
    %s81 = sphi 0, %s81
    %s83 = sphi 0, %s81
    %s84 = sphi 0, %s83
    %s98 = sphi 0, %s84
    %s102 = sphi 0, %s102
    %s104 = sphi 0, %s102
    %s105 = sphi 0, %s104
    %s119 = sphi 0, %s105
    %s129 = sphi 0, %s131
    %s132 = sphi 0, %s129
    %s133 = sphi 0, %s132
    %s149 = sphi 0, %s133
  $region4: #{singleconv_forward.1} parent=0 // loop_header_branch
    %13 = sbr.rel (%p11) target = $region8
  $region5: #{singleconv_forward.1} parent=0 // loop_body
    %s15 = ssub.s32 %s10, 1
    %s16 = ssub.s32 %s10, 2
    %s23 = sadd.s32 1, %s18
    %p24 = scmp.ge.s32.totalorder %s23, 2
    %s25 = scalar_select %p24, 0, %s23
    %s26 = sadd.s32 1, %s17
    %s27 = scalar_select %p24, %s26, %s17
    %p28 = scmp.ge.s32.totalorder %s27, 2
    %s29 = scalar_select %p28, 0, %s27
    %s30 = smul.u32 %s17, 2
    %s31 = sadd.s32 %s30, %s18
    %s32 = smul.u32 %s29, 2
    %s33 = sadd.s32 %s32, %s25
    %s34 = ssub.s32 %s31, %s33
    %p35 = scmp.eq.s32.totalorder %s34, 0
    %s37 = sadd.s32 %s36, 1
    %s38 = scalar_select %p35, %s36, %s37
    %p41 = pneg %p35
    %p42 = scmp.eq.s32.totalorder %s10, 3
    %p43 = por %p41, %p42
    %p44 = scmp.ne.s32.totalorder %s36, %s39
    %p45 = scmp.eq.s32.totalorder %s10, 0
    %p46 = por %p44, %p45
    %p47 = scmp.ne.s32.totalorder %s36, %s39
    %p48 = scmp.eq.s32.totalorder %s15, 3
    %p49 = por %p47, %p48
    %p50 = scmp.ne.s32.totalorder %s39, %s40
    %p51 = scmp.eq.s32.totalorder %s15, 0
    %p52 = por %p50, %p51
    %p53 = scmp.ne.s32.totalorder %s39, %s40
    %p54 = scmp.eq.s32.totalorder %s16, 3
    %p55 = por %p53, %p54
    %p57 = scmp.ne.s32.totalorder %s40, %s56
    %p58 = scmp.eq.s32.totalorder %s16, 0
    %p59 = por %p57, %p58
    %s61 = sadd.s32 %s60, 1
    %p64 = scmp.eq.s32.totalorder %s10, 3
    %p65 = scmp.ne.s32.totalorder %s60, %s62
    %p66 = scmp.eq.s32.totalorder %s10, 0
    %p67 = por %p65, %p66
    %p68 = scmp.ne.s32.totalorder %s60, %s62
    %p69 = scmp.eq.s32.totalorder %s15, 3
    %p70 = por %p68, %p69
    %p71 = scmp.ne.s32.totalorder %s62, %s63
    %p72 = scmp.eq.s32.totalorder %s15, 0
    %p73 = por %p71, %p72
    %p74 = scmp.ne.s32.totalorder %s62, %s63
    %p75 = scmp.eq.s32.totalorder %s16, 3
    %p76 = por %p74, %p75
    %p78 = scmp.ne.s32.totalorder %s63, %s77
    %p79 = scmp.eq.s32.totalorder %s16, 0
    %p80 = por %p78, %p79
    %s82 = sadd.s32 %s81, 1
    %p85 = scmp.eq.s32.totalorder %s10, 3
    %p86 = scmp.ne.s32.totalorder %s81, %s83
    %p87 = scmp.eq.s32.totalorder %s10, 0
    %p88 = por %p86, %p87
    %p89 = scmp.ne.s32.totalorder %s81, %s83
    %p90 = scmp.eq.s32.totalorder %s15, 3
    %p91 = por %p89, %p90
    %p92 = scmp.ne.s32.totalorder %s83, %s84
    %p93 = scmp.eq.s32.totalorder %s15, 0
    %p94 = por %p92, %p93
    %p95 = scmp.ne.s32.totalorder %s83, %s84
    %p96 = scmp.eq.s32.totalorder %s16, 3
    %p97 = por %p95, %p96
    %p99 = scmp.ne.s32.totalorder %s84, %s98
    %p100 = scmp.eq.s32.totalorder %s16, 0
    %p101 = por %p99, %p100
    %s103 = sadd.s32 %s102, 1
    %p106 = scmp.eq.s32.totalorder %s10, 3
    %p107 = scmp.ne.s32.totalorder %s102, %s104
    %p108 = scmp.eq.s32.totalorder %s10, 0
    %p109 = por %p107, %p108
    %p110 = scmp.ne.s32.totalorder %s102, %s104
    %p111 = scmp.eq.s32.totalorder %s15, 3
    %p112 = por %p110, %p111
    %p113 = scmp.ne.s32.totalorder %s104, %s105
    %p114 = scmp.eq.s32.totalorder %s15, 0
    %p115 = por %p113, %p114
    %p116 = scmp.ne.s32.totalorder %s104, %s105
    %p117 = scmp.eq.s32.totalorder %s16, 3
    %p118 = por %p116, %p117
    %p120 = scmp.ne.s32.totalorder %s105, %s119
    %p121 = scmp.eq.s32.totalorder %s16, 0
    %p122 = por %p120, %p121
    %s123 = smul.u32 %s17, 2
    %s124 = sadd.s32 %s123, %s18
    %s125 = smul.u32 %s29, 2
    %s126 = sadd.s32 %s125, %s25
    %s127 = ssub.s32 %s124, %s126
    %p128 = scmp.eq.s32.totalorder %s127, 0
    %s130 = sadd.s32 %s129, 1
    %s131 = scalar_select %p128, %s129, %s130
    %p134 = pneg %p128
    %p135 = scmp.eq.s32.totalorder %s10, 3
    %p136 = por %p134, %p135
    %p137 = scmp.ne.s32.totalorder %s129, %s132
    %p138 = scmp.eq.s32.totalorder %s10, 0
    %p139 = por %p137, %p138
    %p140 = scmp.ne.s32.totalorder %s129, %s132
    %p141 = scmp.eq.s32.totalorder %s15, 3
    %p142 = por %p140, %p141
    %p143 = scmp.ne.s32.totalorder %s132, %s133
    %p144 = scmp.eq.s32.totalorder %s15, 0
    %p145 = por %p143, %p144
    %p146 = scmp.ne.s32.totalorder %s132, %s133
    %p147 = scmp.eq.s32.totalorder %s16, 3
    %p148 = por %p146, %p147
    %p150 = scmp.ne.s32.totalorder %s133, %s149
    %p151 = scmp.eq.s32.totalorder %s16, 0
    %p152 = por %p150, %p151
    %p153 = scmp.le.s32.totalorder 1, %s10
    %p154 = scmp.lt.s32.totalorder %s10, 5
    %p155 = pnand %p153, %p154
    %p156 = pneg %p155
    // Predicated region
    $region9: #{singleconv_forward.1} parent=5 // pred_check
      _
    $region10: #{singleconv_forward.1} parent=5 // pred_check_branch
      %158 = sbr.rel (%p155) target = $region12
    $region11: #{singleconv_forward.1} parent=5 // pred_region
      %s159 = ssub.s32 %s10, 1
      // Predicated region
      $region13: #{singleconv_forward.1} parent=11 // pred_check
        %p160 = pneg %p73
      $region14: #{singleconv_forward.1} parent=11 // pred_check_branch
        %162 = sbr.rel (%p160) target = $region16
      $region15: #{singleconv_forward.1} parent=11 // pred_region
        _
      $region16: #{singleconv_forward.1} parent=11 // pred_fallthru
        _
      // Predicated region
      $region17: #{singleconv_forward.1} parent=11 // pred_check
        %p163 = pneg %p94
      $region18: #{singleconv_forward.1} parent=11 // pred_check_branch
        %165 = sbr.rel (%p163) target = $region20
      $region19: #{singleconv_forward.1} parent=11 // pred_region
        _
      $region20: #{singleconv_forward.1} parent=11 // pred_fallthru
        _
      // Predicated region
      $region21: #{singleconv_forward.1} parent=11 // pred_check
        %p166 = pneg %p115
      $region22: #{singleconv_forward.1} parent=11 // pred_check_branch
        %168 = sbr.rel (%p166) target = $region24
      $region23: #{singleconv_forward.1} parent=11 // pred_region
        _
      $region24: #{singleconv_forward.1} parent=11 // pred_fallthru
        _
    $region12: #{singleconv_forward.1} parent=5 // pred_fallthru
      _
    %p169 = scmp.lt.s32.totalorder %s10, 4
    // Predicated region
    $region25: #{singleconv_forward.1} parent=5 // pred_check
      %p170 = pneg %p169
    $region26: #{singleconv_forward.1} parent=5 // pred_check_branch
      %172 = sbr.rel (%p170) target = $region28
    $region27: #{singleconv_forward.1} parent=5 // pred_region
      // Predicated region
      $region29: #{singleconv_forward.1} parent=27 // pred_check
        %p173 = pneg %p46
      $region30: #{singleconv_forward.1} parent=27 // pred_check_branch
        %175 = sbr.rel (%p173) target = $region32
      $region31: #{singleconv_forward.1} parent=27 // pred_region
        %s176 = smul.u32 %s17, 2
        %s177 = sadd.s32 %s176, %s18
        %p178 = scmp.lt.s32.totalorder %s177, 3
        %s179 = scalar_select %p178, %s177, 3
        %s180 = smul.addr %s179, 30
        %s181 = smul.addr %s180, 4
        %s182 = scalar_lea.vmem %s0, %s181
        %s183 = smul.u32 %s17, 2
        %s184 = sadd.s32 %s183, %s18
      $region32: #{singleconv_forward.1} parent=27 // pred_fallthru
        _
    $region28: #{singleconv_forward.1} parent=5 // pred_fallthru
      _
    %p185 = scmp.le.s32.totalorder 1, %s10
    %p186 = scmp.lt.s32.totalorder %s10, 5
    %p187 = pnand %p185, %p186
    %p188 = pneg %p187
    // Predicated region
    $region33: #{singleconv_forward.1} parent=5 // pred_check
      _
    $region34: #{singleconv_forward.1} parent=5 // pred_check_branch
      %190 = sbr.rel (%p187) target = $region36
    $region35: #{singleconv_forward.1} parent=5 // pred_region
      %s191 = ssub.s32 %s10, 1
      %s192 = smul.u32 %s19, 2
      %s193 = sadd.s32 %s192, %s20
      %p194 = scmp.lt.s32.totalorder %s193, 3
      %s195 = scalar_select %p194, %s193, 3
      %s196 = smul.addr %s195, 30
      %s197 = smul.addr %s196, 4
      %s198 = scalar_lea.vmem %s0, %s197
      %p199 = pneg %p52
      %p200 = pneg %p49
      %p201 = pneg %p73
      %p202 = pneg %p70
      %p203 = pneg %p94
      %p204 = pneg %p91
      %p205 = pneg %p115
      %p206 = pneg %p112
      %p207 = pneg %p145
      %p208 = pneg %p142
      %s209 = smul.u32 %s19, 2
      %s210 = sadd.s32 %s209, %s20
      %p211 = scmp.lt.s32.totalorder %s210, 3
      %s212 = scalar_select %p211, %s210, 3
      %s213 = smul.addr %s212, 64
      %s214 = smul.addr %s213, 8
      %s215 = scalar_lea.vmem %s4, %s214
      %s216 = smul.u32 %s19, 2
      %s217 = sadd.s32 %s216, %s20
      %p218 = scmp.lt.s32.totalorder %s217, 3
      %s219 = scalar_select %p218, %s217, 3
      %s220 = smul.addr %s219, 30
      %s221 = smul.addr %s220, 4
      %s222 = scalar_lea.vmem %s0, %s221
      %s223 = smul.u32 %s19, 2
      %s224 = sadd.s32 %s223, %s20
      %s225 = smul.u32 %s19, 2
      %s226 = sadd.s32 %s225, %s20
      %p227 = scmp.lt.s32.totalorder %s226, 3
      %s228 = scalar_select %p227, %s226, 3
      %s229 = smul.addr %s228, 64
      %s230 = smul.addr %s229, 8
      %s231 = scalar_lea.vmem %s4, %s230
      %s232 = smul.u32 %s19, 2
      %s233 = sadd.s32 %s232, %s20
      %v235 = vld [vmem:[%s222] sm:$0xf]
      %v236 = vld [vmem:[%s222 + $0x4] sm:$0xf]
      %v237 = vld [vmem:[%s222 + $0xc] sm:$0xf]
      %v238 = vld [vmem:[%s222 + $0x10] sm:$0xf]
      %v239 = vld [vmem:[%s222 + $0x18] sm:$0xf]
      %v240 = vld [vmem:[%s222 + $0x1c] sm:$0xf]
      %v241 = vld [vmem:[%s222 + $0x24] sm:$0xf]
      %v242 = vld [vmem:[%s222 + $0x28] sm:$0xf]
      %v243 = vld [vmem:[%s222 + $0x30] sm:$0xf]
      %v244 = vld [vmem:[%s222 + $0x34] sm:$0xf]
      %v245 = vld [vmem:[%s222 + $0x3c] sm:$0xf]
      %v246 = vld [vmem:[%s222 + $0x40] sm:$0xf]
      %v247 = vld [vmem:[%s222 + $0x48] sm:$0xf]
      %v248 = vld [vmem:[%s222 + $0x4c] sm:$0xf]
      %v249 = vld [vmem:[%s222 + $0x54] sm:$0xf]
      %v250 = vld [vmem:[%s222 + $0x58] sm:$0xf]
      %v251 = vld [vmem:[%s222 + $0x8] sm:$0x1]
      %v252 = vld [vmem:[%s222 + $0x14] sm:$0x1]
      %v253 = vld [vmem:[%s222 + $0x20] sm:$0x1]
      %v254 = vld [vmem:[%s222 + $0x2c] sm:$0x1]
      %v255 = vld [vmem:[%s222 + $0x38] sm:$0x1]
      %v256 = vld [vmem:[%s222 + $0x44] sm:$0x1]
      %v257 = vld [vmem:[%s222 + $0x50] sm:$0x1]
      %v258 = vld [vmem:[%s222 + $0x5c] sm:$0x1]
      %vm259 = vsmask.f32 3328
      %vm260 = vsmask.f32 7440
      %vm261 = vmor %vm259, %vm260
      %v263 = vshrl.u32 %v235, 16
      %v265 = vrot.slane %v263, 4
      %v266 = vshll.u32 %v235, 16
      %v268 = vrot.slane %v266, 5
      %v269 = vor.u32 %v265, %v268
      %v270 = vrot.slane %v269, 4
      %v272 = vshll.u32 %v236, 16
      %v274 = vrot.slane %v272, 5
      %v275 = vsel %vm261, %v270, %v274
      %v276 = vshrl.u32 %v236, 16
      %v278 = vrot.slane %v276, 4
      %v279 = vor.u32 %v278, %v274
      %v280 = vrot.slane %v279, 4
      %v282 = vshll.u32 %v251, 16
      %v284 = vrot.slane %v282, 5
      %v285 = vsel %vm261, %v280, %v284
      %v287 = vshrl.u32 %v237, 16
      %v289 = vrot.slane %v287, 4
      %v290 = vshll.u32 %v237, 16
      %v292 = vrot.slane %v290, 5
      %v293 = vor.u32 %v289, %v292
      %v294 = vrot.slane %v293, 4
      %v296 = vshll.u32 %v238, 16
      %v298 = vrot.slane %v296, 5
      %v299 = vsel %vm261, %v294, %v298
      %v300 = vshrl.u32 %v238, 16
      %v302 = vrot.slane %v300, 4
      %v303 = vor.u32 %v302, %v298
      %v304 = vrot.slane %v303, 4
      %v306 = vshll.u32 %v252, 16
      %v308 = vrot.slane %v306, 5
      %v309 = vsel %vm261, %v304, %v308
      %v311 = vshrl.u32 %v239, 16
      %v313 = vrot.slane %v311, 4
      %v314 = vshll.u32 %v239, 16
      %v316 = vrot.slane %v314, 5
      %v317 = vor.u32 %v313, %v316
      %v318 = vrot.slane %v317, 4
      %v320 = vshll.u32 %v240, 16
      %v322 = vrot.slane %v320, 5
      %v323 = vsel %vm261, %v318, %v322
      %v324 = vshrl.u32 %v240, 16
      %v326 = vrot.slane %v324, 4
      %v327 = vor.u32 %v326, %v322
      %v328 = vrot.slane %v327, 4
      %v330 = vshll.u32 %v253, 16
      %v332 = vrot.slane %v330, 5
      %v333 = vsel %vm261, %v328, %v332
      %v335 = vshrl.u32 %v241, 16
      %v337 = vrot.slane %v335, 4
      %v338 = vshll.u32 %v241, 16
      %v340 = vrot.slane %v338, 5
      %v341 = vor.u32 %v337, %v340
      %v342 = vrot.slane %v341, 4
      %v344 = vshll.u32 %v242, 16
      %v346 = vrot.slane %v344, 5
      %v347 = vsel %vm261, %v342, %v346
      %v348 = vshrl.u32 %v242, 16
      %v350 = vrot.slane %v348, 4
      %v351 = vor.u32 %v350, %v346
      %v352 = vrot.slane %v351, 4
      %v354 = vshll.u32 %v254, 16
      %v356 = vrot.slane %v354, 5
      %v357 = vsel %vm261, %v352, %v356
      %v359 = vshrl.u32 %v243, 16
      %v361 = vrot.slane %v359, 4
      %v362 = vshll.u32 %v243, 16
      %v364 = vrot.slane %v362, 5
      %v365 = vor.u32 %v361, %v364
      %v366 = vrot.slane %v365, 4
      %v368 = vshll.u32 %v244, 16
      %v370 = vrot.slane %v368, 5
      %v371 = vsel %vm261, %v366, %v370
      %v372 = vshrl.u32 %v244, 16
      %v374 = vrot.slane %v372, 4
      %v375 = vor.u32 %v374, %v370
      %v376 = vrot.slane %v375, 4
      %v378 = vshll.u32 %v255, 16
      %v380 = vrot.slane %v378, 5
      %v381 = vsel %vm261, %v376, %v380
      %v383 = vshrl.u32 %v245, 16
      %v385 = vrot.slane %v383, 4
      %v386 = vshll.u32 %v245, 16
      %v388 = vrot.slane %v386, 5
      %v389 = vor.u32 %v385, %v388
      %v390 = vrot.slane %v389, 4
      %v392 = vshll.u32 %v246, 16
      %v394 = vrot.slane %v392, 5
      %v395 = vsel %vm261, %v390, %v394
      %v396 = vshrl.u32 %v246, 16
      %v398 = vrot.slane %v396, 4
      %v399 = vor.u32 %v398, %v394
      %v400 = vrot.slane %v399, 4
      %v402 = vshll.u32 %v256, 16
      %v404 = vrot.slane %v402, 5
      %v405 = vsel %vm261, %v400, %v404
      %v407 = vshrl.u32 %v247, 16
      %v409 = vrot.slane %v407, 4
      %v410 = vshll.u32 %v247, 16
      %v412 = vrot.slane %v410, 5
      %v413 = vor.u32 %v409, %v412
      %v414 = vrot.slane %v413, 4
      %v416 = vshll.u32 %v248, 16
      %v418 = vrot.slane %v416, 5
      %v419 = vsel %vm261, %v414, %v418
      %v420 = vshrl.u32 %v248, 16
      %v422 = vrot.slane %v420, 4
      %v423 = vor.u32 %v422, %v418
      %v424 = vrot.slane %v423, 4
      %v426 = vshll.u32 %v257, 16
      %v428 = vrot.slane %v426, 5
      %v429 = vsel %vm261, %v424, %v428
      %v431 = vshrl.u32 %v249, 16
      %v433 = vrot.slane %v431, 4
      %v434 = vshll.u32 %v249, 16
      %v436 = vrot.slane %v434, 5
      %v437 = vor.u32 %v433, %v436
      %v438 = vrot.slane %v437, 4
      %v440 = vshll.u32 %v250, 16
      %v442 = vrot.slane %v440, 5
      %v443 = vsel %vm261, %v438, %v442
      %v444 = vshrl.u32 %v250, 16
      %v446 = vrot.slane %v444, 4
      %v447 = vor.u32 %v446, %v442
      %v448 = vrot.slane %v447, 4
      %v450 = vshll.u32 %v258, 16
      %v452 = vrot.slane %v450, 5
      %v453 = vsel %vm261, %v448, %v452
      %v454 = vld [vmem:[%s222] sm:$0xe]
      %v455 = vld [vmem:[%s222 + $0xc] sm:$0xe]
      %v456 = vld [vmem:[%s222 + $0x18] sm:$0xe]
      %v457 = vld [vmem:[%s222 + $0x24] sm:$0xe]
      %v458 = vld [vmem:[%s222 + $0x30] sm:$0xe]
      %v459 = vld [vmem:[%s222 + $0x3c] sm:$0xe]
      %v460 = vld [vmem:[%s222 + $0x48] sm:$0xe]
      %v461 = vld [vmem:[%s222 + $0x54] sm:$0xe]
      %vm486 = vcmask 1042432
      %vm487 = vcmask 1046532
      %vm488 = vmor %vm486, %vm487
      %v489 = vrot.slane %v454, 5
      %v490 = vrot.slane %v489, 4
      %v491 = vrot.slane %v236, 5
      %v492 = vsel %vm488, %v490, %v491
      %v493 = vrot.slane %v491, 4
      %v494 = vrot.slane %v251, 5
      %v495 = vsel %vm488, %v493, %v494
      %v496 = vrot.slane %v455, 5
      %v497 = vrot.slane %v496, 4
      %v498 = vrot.slane %v238, 5
      %v499 = vsel %vm488, %v497, %v498
      %v500 = vrot.slane %v498, 4
      %v501 = vrot.slane %v252, 5
      %v502 = vsel %vm488, %v500, %v501
      %v503 = vrot.slane %v456, 5
      %v504 = vrot.slane %v503, 4
      %v505 = vrot.slane %v240, 5
      %v506 = vsel %vm488, %v504, %v505
      %v507 = vrot.slane %v505, 4
      %v508 = vrot.slane %v253, 5
      %v509 = vsel %vm488, %v507, %v508
      %v510 = vrot.slane %v457, 5
      %v511 = vrot.slane %v510, 4
      %v512 = vrot.slane %v242, 5
      %v513 = vsel %vm488, %v511, %v512
      %v514 = vrot.slane %v512, 4
      %v515 = vrot.slane %v254, 5
      %v516 = vsel %vm488, %v514, %v515
      %v517 = vrot.slane %v458, 5
      %v518 = vrot.slane %v517, 4
      %v519 = vrot.slane %v244, 5
      %v520 = vsel %vm488, %v518, %v519
      %v521 = vrot.slane %v519, 4
      %v522 = vrot.slane %v255, 5
      %v523 = vsel %vm488, %v521, %v522
      %v524 = vrot.slane %v459, 5
      %v525 = vrot.slane %v524, 4
      %v526 = vrot.slane %v246, 5
      %v527 = vsel %vm488, %v525, %v526
      %v528 = vrot.slane %v526, 4
      %v529 = vrot.slane %v256, 5
      %v530 = vsel %vm488, %v528, %v529
      %v531 = vrot.slane %v460, 5
      %v532 = vrot.slane %v531, 4
      %v533 = vrot.slane %v248, 5
      %v534 = vsel %vm488, %v532, %v533
      %v535 = vrot.slane %v533, 4
      %v536 = vrot.slane %v257, 5
      %v537 = vsel %vm488, %v535, %v536
      %v538 = vrot.slane %v461, 5
      %v539 = vrot.slane %v538, 4
      %v540 = vrot.slane %v250, 5
      %v541 = vsel %vm488, %v539, %v540
      %v542 = vrot.slane %v540, 4
      %v543 = vrot.slane %v258, 5
      %v544 = vsel %vm488, %v542, %v543
      %v553 = vunpack.c.l.b16 %v235
      %v554 = vunpack.c.l.b16 %v236
      %v555 = vunpack.c.l.b16 %v237
      %v556 = vunpack.c.l.b16 %v238
      %v557 = vunpack.c.l.b16 %v239
      %v558 = vunpack.c.l.b16 %v240
      %v559 = vunpack.c.l.b16 %v241
      %v560 = vunpack.c.l.b16 %v242
      %v561 = vunpack.c.l.b16 %v243
      %v562 = vunpack.c.l.b16 %v244
      %v563 = vunpack.c.l.b16 %v245
      %v564 = vunpack.c.l.b16 %v246
      %v565 = vunpack.c.l.b16 %v247
      %v566 = vunpack.c.l.b16 %v248
      %v567 = vunpack.c.l.b16 %v249
      %v568 = vunpack.c.l.b16 %v250
      %v569 = vpack.c.b16 %v554, %v553
      %v570 = vpack.c.b16 %v556, %v555
      %v571 = vpack.c.b16 %v558, %v557
      %v572 = vpack.c.b16 %v560, %v559
      %v573 = vpack.c.b16 %v562, %v561
      %v574 = vpack.c.b16 %v564, %v563
      %v575 = vpack.c.b16 %v566, %v565
      %v576 = vpack.c.b16 %v568, %v567
      %v585 = vunpack.c.l.b16 %v275
      %v586 = vunpack.c.l.b16 %v285
      %v587 = vunpack.c.l.b16 %v299
      %v588 = vunpack.c.l.b16 %v309
      %v589 = vunpack.c.l.b16 %v323
      %v590 = vunpack.c.l.b16 %v333
      %v591 = vunpack.c.l.b16 %v347
      %v592 = vunpack.c.l.b16 %v357
      %v593 = vunpack.c.l.b16 %v371
      %v594 = vunpack.c.l.b16 %v381
      %v595 = vunpack.c.l.b16 %v395
      %v596 = vunpack.c.l.b16 %v405
      %v597 = vunpack.c.l.b16 %v419
      %v598 = vunpack.c.l.b16 %v429
      %v599 = vunpack.c.l.b16 %v443
      %v600 = vunpack.c.l.b16 %v453
      %v601 = vpack.c.b16 %v586, %v585
      %v602 = vpack.c.b16 %v588, %v587
      %v603 = vpack.c.b16 %v590, %v589
      %v604 = vpack.c.b16 %v592, %v591
      %v605 = vpack.c.b16 %v594, %v593
      %v606 = vpack.c.b16 %v596, %v595
      %v607 = vpack.c.b16 %v598, %v597
      %v608 = vpack.c.b16 %v600, %v599
      %v617 = vunpack.c.l.b16 %v492
      %v618 = vunpack.c.l.b16 %v495
      %v619 = vunpack.c.l.b16 %v499
      %v620 = vunpack.c.l.b16 %v502
      %v621 = vunpack.c.l.b16 %v506
      %v622 = vunpack.c.l.b16 %v509
      %v623 = vunpack.c.l.b16 %v513
      %v624 = vunpack.c.l.b16 %v516
      %v625 = vunpack.c.l.b16 %v520
      %v626 = vunpack.c.l.b16 %v523
      %v627 = vunpack.c.l.b16 %v527
      %v628 = vunpack.c.l.b16 %v530
      %v629 = vunpack.c.l.b16 %v534
      %v630 = vunpack.c.l.b16 %v537
      %v631 = vunpack.c.l.b16 %v541
      %v632 = vunpack.c.l.b16 %v544
      %v633 = vpack.c.b16 %v618, %v617
      %v634 = vpack.c.b16 %v620, %v619
      %v635 = vpack.c.b16 %v622, %v621
      %v636 = vpack.c.b16 %v624, %v623
      %v637 = vpack.c.b16 %v626, %v625
      %v638 = vpack.c.b16 %v628, %v627
      %v639 = vpack.c.b16 %v630, %v629
      %v640 = vpack.c.b16 %v632, %v631
      %v649 = vld [vmem:[%s1] sm:$0xff]
      %v650 = vld [vmem:[%s1 + $0x8] sm:$0xff]
      %v651 = vld [vmem:[%s1 + $0x10] sm:$0xff]
      %v652 = vld [vmem:[%s1 + $0x18] sm:$0xff]
      %v653 = vld [vmem:[%s1 + $0x20] sm:$0xff]
      %v654 = vld [vmem:[%s1 + $0x28] sm:$0xff]
      %v655 = vld [vmem:[%s1 + $0x30] sm:$0xff]
      %v656 = vld [vmem:[%s1 + $0x38] sm:$0xff]
      %v657 = vld [vmem:[%s1 + $0x40] sm:$0xff]
      %v658 = vld [vmem:[%s1 + $0x48] sm:$0xff]
      %v659 = vld [vmem:[%s1 + $0x50] sm:$0xff]
      %v660 = vld [vmem:[%s1 + $0x58] sm:$0xff]
      %v661 = vld [vmem:[%s1 + $0x60] sm:$0xff]
      %v662 = vld [vmem:[%s1 + $0x68] sm:$0xff]
      %v663 = vld [vmem:[%s1 + $0x70] sm:$0xff]
      %v664 = vld [vmem:[%s1 + $0x78] sm:$0xff]
      %v665 = vld [vmem:[%s1 + $0x80] sm:$0xff]
      %v666 = vld [vmem:[%s1 + $0x88] sm:$0xff]
      %v667 = vld [vmem:[%s1 + $0x90] sm:$0xff]
      %v668 = vld [vmem:[%s1 + $0x98] sm:$0xff]
      %v669 = vld [vmem:[%s1 + $0xa0] sm:$0xff]
      %v670 = vld [vmem:[%s1 + $0xa8] sm:$0xff]
      %v671 = vld [vmem:[%s1 + $0xb0] sm:$0xff]
      %v672 = vld [vmem:[%s1 + $0xb8] sm:$0xff]
      %v673 = vld [vmem:[%s1 + $0xc0] sm:$0xff]
      %v674 = vld [vmem:[%s1 + $0xc8] sm:$0xff]
      %v675 = vld [vmem:[%s1 + $0xd0] sm:$0xff]
      %v676 = vld [vmem:[%s1 + $0xd8] sm:$0xff]
      %v677 = vld [vmem:[%s1 + $0xe0] sm:$0xff]
      %v678 = vld [vmem:[%s1 + $0xe8] sm:$0xff]
      %v679 = vld [vmem:[%s1 + $0xf0] sm:$0xff]
      %v680 = vld [vmem:[%s1 + $0xf8] sm:$0xff]
      %v681 = vld [vmem:[%s1 + $0x100] sm:$0xff]
      %v682 = vld [vmem:[%s1 + $0x108] sm:$0xff]
      %v683 = vld [vmem:[%s1 + $0x110] sm:$0xff]
      %v684 = vld [vmem:[%s1 + $0x118] sm:$0xff]
      %v685 = vld [vmem:[%s1 + $0x120] sm:$0xff]
      %v686 = vld [vmem:[%s1 + $0x128] sm:$0xff]
      %v687 = vld [vmem:[%s1 + $0x130] sm:$0xff]
      %v688 = vld [vmem:[%s1 + $0x138] sm:$0xff]
      %v689 = vld [vmem:[%s1 + $0x140] sm:$0xff]
      %v690 = vld [vmem:[%s1 + $0x148] sm:$0xff]
      %v691 = vld [vmem:[%s1 + $0x150] sm:$0xff]
      %v692 = vld [vmem:[%s1 + $0x158] sm:$0xff]
      %v693 = vld [vmem:[%s1 + $0x160] sm:$0xff]
      %v694 = vld [vmem:[%s1 + $0x168] sm:$0xff]
      %v695 = vld [vmem:[%s1 + $0x170] sm:$0xff]
      %v696 = vld [vmem:[%s1 + $0x178] sm:$0xff]
      %v697 = vld [vmem:[%s1 + $0x180] sm:$0xff]
      %v698 = vld [vmem:[%s1 + $0x188] sm:$0xff]
      %v699 = vld [vmem:[%s1 + $0x190] sm:$0xff]
      %v700 = vld [vmem:[%s1 + $0x198] sm:$0xff]
      %v701 = vld [vmem:[%s1 + $0x1a0] sm:$0xff]
      %v702 = vld [vmem:[%s1 + $0x1a8] sm:$0xff]
      %v703 = vld [vmem:[%s1 + $0x1b0] sm:$0xff]
      %v704 = vld [vmem:[%s1 + $0x1b8] sm:$0xff]
      %v705 = vld [vmem:[%s1 + $0x1c0] sm:$0xff]
      %v706 = vld [vmem:[%s1 + $0x1c8] sm:$0xff]
      %v707 = vld [vmem:[%s1 + $0x1d0] sm:$0xff]
      %v708 = vld [vmem:[%s1 + $0x1d8] sm:$0xff]
      %v709 = vld [vmem:[%s1 + $0x1e0] sm:$0xff]
      %v710 = vld [vmem:[%s1 + $0x1e8] sm:$0xff]
      %v711 = vld [vmem:[%s1 + $0x1f0] sm:$0xff]
      %v712 = vld [vmem:[%s1 + $0x1f8] sm:$0xff]
      %v713 = vld [vmem:[%s1 + $0x200] sm:$0xff]
      %v714 = vld [vmem:[%s1 + $0x208] sm:$0xff]
      %v715 = vld [vmem:[%s1 + $0x210] sm:$0xff]
      %v716 = vld [vmem:[%s1 + $0x218] sm:$0xff]
      %v717 = vld [vmem:[%s1 + $0x220] sm:$0xff]
      %v718 = vld [vmem:[%s1 + $0x228] sm:$0xff]
      %v719 = vld [vmem:[%s1 + $0x230] sm:$0xff]
      %v720 = vld [vmem:[%s1 + $0x238] sm:$0xff]
      %v721 = vld [vmem:[%s1 + $0x240] sm:$0xff]
      %v722 = vld [vmem:[%s1 + $0x248] sm:$0xff]
      %v723 = vld [vmem:[%s1 + $0x250] sm:$0xff]
      %v724 = vld [vmem:[%s1 + $0x258] sm:$0xff]
      %v725 = vld [vmem:[%s1 + $0x260] sm:$0xff]
      %v726 = vld [vmem:[%s1 + $0x268] sm:$0xff]
      %v727 = vld [vmem:[%s1 + $0x270] sm:$0xff]
      %v728 = vld [vmem:[%s1 + $0x278] sm:$0xff]
      %v729 = vld [vmem:[%s1 + $0x280] sm:$0xff]
      %v730 = vld [vmem:[%s1 + $0x288] sm:$0xff]
      %v731 = vld [vmem:[%s1 + $0x290] sm:$0xff]
      %v732 = vld [vmem:[%s1 + $0x298] sm:$0xff]
      %v733 = vld [vmem:[%s1 + $0x2a0] sm:$0xff]
      %v734 = vld [vmem:[%s1 + $0x2a8] sm:$0xff]
      %v735 = vld [vmem:[%s1 + $0x2b0] sm:$0xff]
      %v736 = vld [vmem:[%s1 + $0x2b8] sm:$0xff]
      %v737 = vld [vmem:[%s1 + $0x2c0] sm:$0xff]
      %v738 = vld [vmem:[%s1 + $0x2c8] sm:$0xff]
      %v739 = vld [vmem:[%s1 + $0x2d0] sm:$0xff]
      %v740 = vld [vmem:[%s1 + $0x2d8] sm:$0xff]
      %v741 = vld [vmem:[%s1 + $0x2e0] sm:$0xff]
      %v742 = vld [vmem:[%s1 + $0x2e8] sm:$0xff]
      %v743 = vld [vmem:[%s1 + $0x2f0] sm:$0xff]
      %v744 = vld [vmem:[%s1 + $0x2f8] sm:$0xff]
      %s745 = scalar_lea.vmem %s222, 12
      %v746 = vld [vmem:[%s745] sm:$0xf]
      %v747 = vld [vmem:[%s745 + $0x4] sm:$0xf]
      %v748 = vld [vmem:[%s745 + $0xc] sm:$0xf]
      %v749 = vld [vmem:[%s745 + $0x10] sm:$0xf]
      %v750 = vld [vmem:[%s745 + $0x18] sm:$0xf]
      %v751 = vld [vmem:[%s745 + $0x1c] sm:$0xf]
      %v752 = vld [vmem:[%s745 + $0x24] sm:$0xf]
      %v753 = vld [vmem:[%s745 + $0x28] sm:$0xf]
      %v754 = vld [vmem:[%s745 + $0x30] sm:$0xf]
      %v755 = vld [vmem:[%s745 + $0x34] sm:$0xf]
      %v756 = vld [vmem:[%s745 + $0x3c] sm:$0xf]
      %v757 = vld [vmem:[%s745 + $0x40] sm:$0xf]
      %v758 = vld [vmem:[%s745 + $0x48] sm:$0xf]
      %v759 = vld [vmem:[%s745 + $0x4c] sm:$0xf]
      %v760 = vld [vmem:[%s745 + $0x54] sm:$0xf]
      %v761 = vld [vmem:[%s745 + $0x58] sm:$0xf]
      %v762 = vld [vmem:[%s745 + $0x8] sm:$0x1]
      %v763 = vld [vmem:[%s745 + $0x14] sm:$0x1]
      %v764 = vld [vmem:[%s745 + $0x20] sm:$0x1]
      %v765 = vld [vmem:[%s745 + $0x2c] sm:$0x1]
      %v766 = vld [vmem:[%s745 + $0x38] sm:$0x1]
      %v767 = vld [vmem:[%s745 + $0x44] sm:$0x1]
      %v768 = vld [vmem:[%s745 + $0x50] sm:$0x1]
      %v769 = vld [vmem:[%s745 + $0x5c] sm:$0x1]
      %v771 = vshrl.u32 %v746, 16
      %v773 = vrot.slane %v771, 4
      %v774 = vshll.u32 %v746, 16
      %v776 = vrot.slane %v774, 5
      %v777 = vor.u32 %v773, %v776
      %v778 = vrot.slane %v777, 4
      %v780 = vshll.u32 %v747, 16
      %v782 = vrot.slane %v780, 5
      %v783 = vsel %vm261, %v778, %v782
      %v784 = vshrl.u32 %v747, 16
      %v786 = vrot.slane %v784, 4
      %v787 = vor.u32 %v786, %v782
      %v788 = vrot.slane %v787, 4
      %v790 = vshll.u32 %v762, 16
      %v792 = vrot.slane %v790, 5
      %v793 = vsel %vm261, %v788, %v792
      %v795 = vshrl.u32 %v748, 16
      %v797 = vrot.slane %v795, 4
      %v798 = vshll.u32 %v748, 16
      %v800 = vrot.slane %v798, 5
      %v801 = vor.u32 %v797, %v800
      %v802 = vrot.slane %v801, 4
      %v804 = vshll.u32 %v749, 16
      %v806 = vrot.slane %v804, 5
      %v807 = vsel %vm261, %v802, %v806
      %v808 = vshrl.u32 %v749, 16
      %v810 = vrot.slane %v808, 4
      %v811 = vor.u32 %v810, %v806
      %v812 = vrot.slane %v811, 4
      %v814 = vshll.u32 %v763, 16
      %v816 = vrot.slane %v814, 5
      %v817 = vsel %vm261, %v812, %v816
      %v819 = vshrl.u32 %v750, 16
      %v821 = vrot.slane %v819, 4
      %v822 = vshll.u32 %v750, 16
      %v824 = vrot.slane %v822, 5
      %v825 = vor.u32 %v821, %v824
      %v826 = vrot.slane %v825, 4
      %v828 = vshll.u32 %v751, 16
      %v830 = vrot.slane %v828, 5
      %v831 = vsel %vm261, %v826, %v830
      %v832 = vshrl.u32 %v751, 16
      %v834 = vrot.slane %v832, 4
      %v835 = vor.u32 %v834, %v830
      %v836 = vrot.slane %v835, 4
      %v838 = vshll.u32 %v764, 16
      %v840 = vrot.slane %v838, 5
      %v841 = vsel %vm261, %v836, %v840
      %v843 = vshrl.u32 %v752, 16
      %v845 = vrot.slane %v843, 4
      %v846 = vshll.u32 %v752, 16
      %v848 = vrot.slane %v846, 5
      %v849 = vor.u32 %v845, %v848
      %v850 = vrot.slane %v849, 4
      %v852 = vshll.u32 %v753, 16
      %v854 = vrot.slane %v852, 5
      %v855 = vsel %vm261, %v850, %v854
      %v856 = vshrl.u32 %v753, 16
      %v858 = vrot.slane %v856, 4
      %v859 = vor.u32 %v858, %v854
      %v860 = vrot.slane %v859, 4
      %v862 = vshll.u32 %v765, 16
      %v864 = vrot.slane %v862, 5
      %v865 = vsel %vm261, %v860, %v864
      %v867 = vshrl.u32 %v754, 16
      %v869 = vrot.slane %v867, 4
      %v870 = vshll.u32 %v754, 16
      %v872 = vrot.slane %v870, 5
      %v873 = vor.u32 %v869, %v872
      %v874 = vrot.slane %v873, 4
      %v876 = vshll.u32 %v755, 16
      %v878 = vrot.slane %v876, 5
      %v879 = vsel %vm261, %v874, %v878
      %v880 = vshrl.u32 %v755, 16
      %v882 = vrot.slane %v880, 4
      %v883 = vor.u32 %v882, %v878
      %v884 = vrot.slane %v883, 4
      %v886 = vshll.u32 %v766, 16
      %v888 = vrot.slane %v886, 5
      %v889 = vsel %vm261, %v884, %v888
      %v891 = vshrl.u32 %v756, 16
      %v893 = vrot.slane %v891, 4
      %v894 = vshll.u32 %v756, 16
      %v896 = vrot.slane %v894, 5
      %v897 = vor.u32 %v893, %v896
      %v898 = vrot.slane %v897, 4
      %v900 = vshll.u32 %v757, 16
      %v902 = vrot.slane %v900, 5
      %v903 = vsel %vm261, %v898, %v902
      %v904 = vshrl.u32 %v757, 16
      %v906 = vrot.slane %v904, 4
      %v907 = vor.u32 %v906, %v902
      %v908 = vrot.slane %v907, 4
      %v910 = vshll.u32 %v767, 16
      %v912 = vrot.slane %v910, 5
      %v913 = vsel %vm261, %v908, %v912
      %v915 = vshrl.u32 %v758, 16
      %v917 = vrot.slane %v915, 4
      %v918 = vshll.u32 %v758, 16
      %v920 = vrot.slane %v918, 5
      %v921 = vor.u32 %v917, %v920
      %v922 = vrot.slane %v921, 4
      %v924 = vshll.u32 %v759, 16
      %v926 = vrot.slane %v924, 5
      %v927 = vsel %vm261, %v922, %v926
      %v928 = vshrl.u32 %v759, 16
      %v930 = vrot.slane %v928, 4
      %v931 = vor.u32 %v930, %v926
      %v932 = vrot.slane %v931, 4
      %v934 = vshll.u32 %v768, 16
      %v936 = vrot.slane %v934, 5
      %v937 = vsel %vm261, %v932, %v936
      %v939 = vshrl.u32 %v760, 16
      %v941 = vrot.slane %v939, 4
      %v942 = vshll.u32 %v760, 16
      %v944 = vrot.slane %v942, 5
      %v945 = vor.u32 %v941, %v944
      %v946 = vrot.slane %v945, 4
      %v948 = vshll.u32 %v761, 16
      %v950 = vrot.slane %v948, 5
      %v951 = vsel %vm261, %v946, %v950
      %v952 = vshrl.u32 %v761, 16
      %v954 = vrot.slane %v952, 4
      %v955 = vor.u32 %v954, %v950
      %v956 = vrot.slane %v955, 4
      %v958 = vshll.u32 %v769, 16
      %v960 = vrot.slane %v958, 5
      %v961 = vsel %vm261, %v956, %v960
      %v962 = vld [vmem:[%s745] sm:$0xe]
      %v963 = vld [vmem:[%s745 + $0xc] sm:$0xe]
      %v964 = vld [vmem:[%s745 + $0x18] sm:$0xe]
      %v965 = vld [vmem:[%s745 + $0x24] sm:$0xe]
      %v966 = vld [vmem:[%s745 + $0x30] sm:$0xe]
      %v967 = vld [vmem:[%s745 + $0x3c] sm:$0xe]
      %v968 = vld [vmem:[%s745 + $0x48] sm:$0xe]
      %v969 = vld [vmem:[%s745 + $0x54] sm:$0xe]
      %v994 = vrot.slane %v962, 5
      %v995 = vrot.slane %v994, 4
      %v996 = vrot.slane %v747, 5
      %v997 = vsel %vm488, %v995, %v996
      %v998 = vrot.slane %v996, 4
      %v999 = vrot.slane %v762, 5
      %v1000 = vsel %vm488, %v998, %v999
      %v1001 = vrot.slane %v963, 5
      %v1002 = vrot.slane %v1001, 4
      %v1003 = vrot.slane %v749, 5
      %v1004 = vsel %vm488, %v1002, %v1003
      %v1005 = vrot.slane %v1003, 4
      %v1006 = vrot.slane %v763, 5
      %v1007 = vsel %vm488, %v1005, %v1006
      %v1008 = vrot.slane %v964, 5
      %v1009 = vrot.slane %v1008, 4
      %v1010 = vrot.slane %v751, 5
      %v1011 = vsel %vm488, %v1009, %v1010
      %v1012 = vrot.slane %v1010, 4
      %v1013 = vrot.slane %v764, 5
      %v1014 = vsel %vm488, %v1012, %v1013
      %v1015 = vrot.slane %v965, 5
      %v1016 = vrot.slane %v1015, 4
      %v1017 = vrot.slane %v753, 5
      %v1018 = vsel %vm488, %v1016, %v1017
      %v1019 = vrot.slane %v1017, 4
      %v1020 = vrot.slane %v765, 5
      %v1021 = vsel %vm488, %v1019, %v1020
      %v1022 = vrot.slane %v966, 5
      %v1023 = vrot.slane %v1022, 4
      %v1024 = vrot.slane %v755, 5
      %v1025 = vsel %vm488, %v1023, %v1024
      %v1026 = vrot.slane %v1024, 4
      %v1027 = vrot.slane %v766, 5
      %v1028 = vsel %vm488, %v1026, %v1027
      %v1029 = vrot.slane %v967, 5
      %v1030 = vrot.slane %v1029, 4
      %v1031 = vrot.slane %v757, 5
      %v1032 = vsel %vm488, %v1030, %v1031
      %v1033 = vrot.slane %v1031, 4
      %v1034 = vrot.slane %v767, 5
      %v1035 = vsel %vm488, %v1033, %v1034
      %v1036 = vrot.slane %v968, 5
      %v1037 = vrot.slane %v1036, 4
      %v1038 = vrot.slane %v759, 5
      %v1039 = vsel %vm488, %v1037, %v1038
      %v1040 = vrot.slane %v1038, 4
      %v1041 = vrot.slane %v768, 5
      %v1042 = vsel %vm488, %v1040, %v1041
      %v1043 = vrot.slane %v969, 5
      %v1044 = vrot.slane %v1043, 4
      %v1045 = vrot.slane %v761, 5
      %v1046 = vsel %vm488, %v1044, %v1045
      %v1047 = vrot.slane %v1045, 4
      %v1048 = vrot.slane %v769, 5
      %v1049 = vsel %vm488, %v1047, %v1048
      %v1058 = vunpack.c.l.b16 %v746
      %v1059 = vunpack.c.l.b16 %v747
      %v1060 = vunpack.c.l.b16 %v748
      %v1061 = vunpack.c.l.b16 %v749
      %v1062 = vunpack.c.l.b16 %v750
      %v1063 = vunpack.c.l.b16 %v751
      %v1064 = vunpack.c.l.b16 %v752
      %v1065 = vunpack.c.l.b16 %v753
      %v1066 = vunpack.c.l.b16 %v754
      %v1067 = vunpack.c.l.b16 %v755
      %v1068 = vunpack.c.l.b16 %v756
      %v1069 = vunpack.c.l.b16 %v757
      %v1070 = vunpack.c.l.b16 %v758
      %v1071 = vunpack.c.l.b16 %v759
      %v1072 = vunpack.c.l.b16 %v760
      %v1073 = vunpack.c.l.b16 %v761
      %v1074 = vpack.c.b16 %v1059, %v1058
      %v1075 = vpack.c.b16 %v1061, %v1060
      %v1076 = vpack.c.b16 %v1063, %v1062
      %v1077 = vpack.c.b16 %v1065, %v1064
      %v1078 = vpack.c.b16 %v1067, %v1066
      %v1079 = vpack.c.b16 %v1069, %v1068
      %v1080 = vpack.c.b16 %v1071, %v1070
      %v1081 = vpack.c.b16 %v1073, %v1072
      %v1090 = vunpack.c.l.b16 %v783
      %v1091 = vunpack.c.l.b16 %v793
      %v1092 = vunpack.c.l.b16 %v807
      %v1093 = vunpack.c.l.b16 %v817
      %v1094 = vunpack.c.l.b16 %v831
      %v1095 = vunpack.c.l.b16 %v841
      %v1096 = vunpack.c.l.b16 %v855
      %v1097 = vunpack.c.l.b16 %v865
      %v1098 = vunpack.c.l.b16 %v879
      %v1099 = vunpack.c.l.b16 %v889
      %v1100 = vunpack.c.l.b16 %v903
      %v1101 = vunpack.c.l.b16 %v913
      %v1102 = vunpack.c.l.b16 %v927
      %v1103 = vunpack.c.l.b16 %v937
      %v1104 = vunpack.c.l.b16 %v951
      %v1105 = vunpack.c.l.b16 %v961
      %v1106 = vpack.c.b16 %v1091, %v1090
      %v1107 = vpack.c.b16 %v1093, %v1092
      %v1108 = vpack.c.b16 %v1095, %v1094
      %v1109 = vpack.c.b16 %v1097, %v1096
      %v1110 = vpack.c.b16 %v1099, %v1098
      %v1111 = vpack.c.b16 %v1101, %v1100
      %v1112 = vpack.c.b16 %v1103, %v1102
      %v1113 = vpack.c.b16 %v1105, %v1104
      %v1122 = vunpack.c.l.b16 %v997
      %v1123 = vunpack.c.l.b16 %v1000
      %v1124 = vunpack.c.l.b16 %v1004
      %v1125 = vunpack.c.l.b16 %v1007
      %v1126 = vunpack.c.l.b16 %v1011
      %v1127 = vunpack.c.l.b16 %v1014
      %v1128 = vunpack.c.l.b16 %v1018
      %v1129 = vunpack.c.l.b16 %v1021
      %v1130 = vunpack.c.l.b16 %v1025
      %v1131 = vunpack.c.l.b16 %v1028
      %v1132 = vunpack.c.l.b16 %v1032
      %v1133 = vunpack.c.l.b16 %v1035
      %v1134 = vunpack.c.l.b16 %v1039
      %v1135 = vunpack.c.l.b16 %v1042
      %v1136 = vunpack.c.l.b16 %v1046
      %v1137 = vunpack.c.l.b16 %v1049
      %v1138 = vpack.c.b16 %v1123, %v1122
      %v1139 = vpack.c.b16 %v1125, %v1124
      %v1140 = vpack.c.b16 %v1127, %v1126
      %v1141 = vpack.c.b16 %v1129, %v1128
      %v1142 = vpack.c.b16 %v1131, %v1130
      %v1143 = vpack.c.b16 %v1133, %v1132
      %v1144 = vpack.c.b16 %v1135, %v1134
      %v1145 = vpack.c.b16 %v1137, %v1136
      %s1154 = scalar_lea.vmem %s1, 768
      %v1155 = vld [vmem:[%s1154] sm:$0xff]
      %v1156 = vld [vmem:[%s1154 + $0x8] sm:$0xff]
      %v1157 = vld [vmem:[%s1154 + $0x10] sm:$0xff]
      %v1158 = vld [vmem:[%s1154 + $0x18] sm:$0xff]
      %v1159 = vld [vmem:[%s1154 + $0x20] sm:$0xff]
      %v1160 = vld [vmem:[%s1154 + $0x28] sm:$0xff]
      %v1161 = vld [vmem:[%s1154 + $0x30] sm:$0xff]
      %v1162 = vld [vmem:[%s1154 + $0x38] sm:$0xff]
      %v1163 = vld [vmem:[%s1154 + $0x40] sm:$0xff]
      %v1164 = vld [vmem:[%s1154 + $0x48] sm:$0xff]
      %v1165 = vld [vmem:[%s1154 + $0x50] sm:$0xff]
      %v1166 = vld [vmem:[%s1154 + $0x58] sm:$0xff]
      %v1167 = vld [vmem:[%s1154 + $0x60] sm:$0xff]
      %v1168 = vld [vmem:[%s1154 + $0x68] sm:$0xff]
      %v1169 = vld [vmem:[%s1154 + $0x70] sm:$0xff]
      %v1170 = vld [vmem:[%s1154 + $0x78] sm:$0xff]
      %v1171 = vld [vmem:[%s1154 + $0x80] sm:$0xff]
      %v1172 = vld [vmem:[%s1154 + $0x88] sm:$0xff]
      %v1173 = vld [vmem:[%s1154 + $0x90] sm:$0xff]
      %v1174 = vld [vmem:[%s1154 + $0x98] sm:$0xff]
      %v1175 = vld [vmem:[%s1154 + $0xa0] sm:$0xff]
      %v1176 = vld [vmem:[%s1154 + $0xa8] sm:$0xff]
      %v1177 = vld [vmem:[%s1154 + $0xb0] sm:$0xff]
      %v1178 = vld [vmem:[%s1154 + $0xb8] sm:$0xff]
      %v1179 = vld [vmem:[%s1154 + $0xc0] sm:$0xff]
      %v1180 = vld [vmem:[%s1154 + $0xc8] sm:$0xff]
      %v1181 = vld [vmem:[%s1154 + $0xd0] sm:$0xff]
      %v1182 = vld [vmem:[%s1154 + $0xd8] sm:$0xff]
      %v1183 = vld [vmem:[%s1154 + $0xe0] sm:$0xff]
      %v1184 = vld [vmem:[%s1154 + $0xe8] sm:$0xff]
      %v1185 = vld [vmem:[%s1154 + $0xf0] sm:$0xff]
      %v1186 = vld [vmem:[%s1154 + $0xf8] sm:$0xff]
      %v1187 = vld [vmem:[%s1154 + $0x100] sm:$0xff]
      %v1188 = vld [vmem:[%s1154 + $0x108] sm:$0xff]
      %v1189 = vld [vmem:[%s1154 + $0x110] sm:$0xff]
      %v1190 = vld [vmem:[%s1154 + $0x118] sm:$0xff]
      %v1191 = vld [vmem:[%s1154 + $0x120] sm:$0xff]
      %v1192 = vld [vmem:[%s1154 + $0x128] sm:$0xff]
      %v1193 = vld [vmem:[%s1154 + $0x130] sm:$0xff]
      %v1194 = vld [vmem:[%s1154 + $0x138] sm:$0xff]
      %v1195 = vld [vmem:[%s1154 + $0x140] sm:$0xff]
      %v1196 = vld [vmem:[%s1154 + $0x148] sm:$0xff]
      %v1197 = vld [vmem:[%s1154 + $0x150] sm:$0xff]
      %v1198 = vld [vmem:[%s1154 + $0x158] sm:$0xff]
      %v1199 = vld [vmem:[%s1154 + $0x160] sm:$0xff]
      %v1200 = vld [vmem:[%s1154 + $0x168] sm:$0xff]
      %v1201 = vld [vmem:[%s1154 + $0x170] sm:$0xff]
      %v1202 = vld [vmem:[%s1154 + $0x178] sm:$0xff]
      %v1203 = vld [vmem:[%s1154 + $0x180] sm:$0xff]
      %v1204 = vld [vmem:[%s1154 + $0x188] sm:$0xff]
      %v1205 = vld [vmem:[%s1154 + $0x190] sm:$0xff]
      %v1206 = vld [vmem:[%s1154 + $0x198] sm:$0xff]
      %v1207 = vld [vmem:[%s1154 + $0x1a0] sm:$0xff]
      %v1208 = vld [vmem:[%s1154 + $0x1a8] sm:$0xff]
      %v1209 = vld [vmem:[%s1154 + $0x1b0] sm:$0xff]
      %v1210 = vld [vmem:[%s1154 + $0x1b8] sm:$0xff]
      %v1211 = vld [vmem:[%s1154 + $0x1c0] sm:$0xff]
      %v1212 = vld [vmem:[%s1154 + $0x1c8] sm:$0xff]
      %v1213 = vld [vmem:[%s1154 + $0x1d0] sm:$0xff]
      %v1214 = vld [vmem:[%s1154 + $0x1d8] sm:$0xff]
      %v1215 = vld [vmem:[%s1154 + $0x1e0] sm:$0xff]
      %v1216 = vld [vmem:[%s1154 + $0x1e8] sm:$0xff]
      %v1217 = vld [vmem:[%s1154 + $0x1f0] sm:$0xff]
      %v1218 = vld [vmem:[%s1154 + $0x1f8] sm:$0xff]
      %v1219 = vld [vmem:[%s1154 + $0x200] sm:$0xff]
      %v1220 = vld [vmem:[%s1154 + $0x208] sm:$0xff]
      %v1221 = vld [vmem:[%s1154 + $0x210] sm:$0xff]
      %v1222 = vld [vmem:[%s1154 + $0x218] sm:$0xff]
      %v1223 = vld [vmem:[%s1154 + $0x220] sm:$0xff]
      %v1224 = vld [vmem:[%s1154 + $0x228] sm:$0xff]
      %v1225 = vld [vmem:[%s1154 + $0x230] sm:$0xff]
      %v1226 = vld [vmem:[%s1154 + $0x238] sm:$0xff]
      %v1227 = vld [vmem:[%s1154 + $0x240] sm:$0xff]
      %v1228 = vld [vmem:[%s1154 + $0x248] sm:$0xff]
      %v1229 = vld [vmem:[%s1154 + $0x250] sm:$0xff]
      %v1230 = vld [vmem:[%s1154 + $0x258] sm:$0xff]
      %v1231 = vld [vmem:[%s1154 + $0x260] sm:$0xff]
      %v1232 = vld [vmem:[%s1154 + $0x268] sm:$0xff]
      %v1233 = vld [vmem:[%s1154 + $0x270] sm:$0xff]
      %v1234 = vld [vmem:[%s1154 + $0x278] sm:$0xff]
      %v1235 = vld [vmem:[%s1154 + $0x280] sm:$0xff]
      %v1236 = vld [vmem:[%s1154 + $0x288] sm:$0xff]
      %v1237 = vld [vmem:[%s1154 + $0x290] sm:$0xff]
      %v1238 = vld [vmem:[%s1154 + $0x298] sm:$0xff]
      %v1239 = vld [vmem:[%s1154 + $0x2a0] sm:$0xff]
      %v1240 = vld [vmem:[%s1154 + $0x2a8] sm:$0xff]
      %v1241 = vld [vmem:[%s1154 + $0x2b0] sm:$0xff]
      %v1242 = vld [vmem:[%s1154 + $0x2b8] sm:$0xff]
      %v1243 = vld [vmem:[%s1154 + $0x2c0] sm:$0xff]
      %v1244 = vld [vmem:[%s1154 + $0x2c8] sm:$0xff]
      %v1245 = vld [vmem:[%s1154 + $0x2d0] sm:$0xff]
      %v1246 = vld [vmem:[%s1154 + $0x2d8] sm:$0xff]
      %v1247 = vld [vmem:[%s1154 + $0x2e0] sm:$0xff]
      %v1248 = vld [vmem:[%s1154 + $0x2e8] sm:$0xff]
      %v1249 = vld [vmem:[%s1154 + $0x2f0] sm:$0xff]
      %v1250 = vld [vmem:[%s1154 + $0x2f8] sm:$0xff]
      %v1347 = vunpack.c.l.b16 %v1155
      %v1348 = vunpack.c.h.b16 %v1155
      %v1349 = vunpack.c.l.b16 %v1156
      %v1350 = vunpack.c.h.b16 %v1156
      %v1351 = vunpack.c.l.b16 %v1157
      %v1352 = vunpack.c.h.b16 %v1157
      %v1353 = vunpack.c.l.b16 %v1158
      %v1354 = vunpack.c.h.b16 %v1158
      %v1355 = vunpack.c.l.b16 %v1159
      %v1356 = vunpack.c.h.b16 %v1159
      %v1357 = vunpack.c.l.b16 %v1160
      %v1358 = vunpack.c.h.b16 %v1160
      %v1359 = vunpack.c.l.b16 %v1161
      %v1360 = vunpack.c.h.b16 %v1161
      %v1361 = vunpack.c.l.b16 %v1162
      %v1362 = vunpack.c.h.b16 %v1162
      %v1363 = vunpack.c.l.b16 %v1163
      %v1364 = vunpack.c.h.b16 %v1163
      %v1365 = vunpack.c.l.b16 %v1164
      %v1366 = vunpack.c.h.b16 %v1164
      %v1367 = vunpack.c.l.b16 %v1165
      %v1368 = vunpack.c.h.b16 %v1165
      %v1369 = vunpack.c.l.b16 %v1166
      %v1370 = vunpack.c.h.b16 %v1166
      %v1371 = vunpack.c.l.b16 %v1167
      %v1372 = vunpack.c.h.b16 %v1167
      %v1373 = vunpack.c.l.b16 %v1168
      %v1374 = vunpack.c.h.b16 %v1168
      %v1375 = vunpack.c.l.b16 %v1169
      %v1376 = vunpack.c.h.b16 %v1169
      %v1377 = vunpack.c.l.b16 %v1170
      %v1378 = vunpack.c.h.b16 %v1170
      %v1379 = vunpack.c.l.b16 %v1171
      %v1380 = vunpack.c.h.b16 %v1171
      %v1381 = vunpack.c.l.b16 %v1172
      %v1382 = vunpack.c.h.b16 %v1172
      %v1383 = vunpack.c.l.b16 %v1173
      %v1384 = vunpack.c.h.b16 %v1173
      %v1385 = vunpack.c.l.b16 %v1174
      %v1386 = vunpack.c.h.b16 %v1174
      %v1387 = vunpack.c.l.b16 %v1175
      %v1388 = vunpack.c.h.b16 %v1175
      %v1389 = vunpack.c.l.b16 %v1176
      %v1390 = vunpack.c.h.b16 %v1176
      %v1391 = vunpack.c.l.b16 %v1177
      %v1392 = vunpack.c.h.b16 %v1177
      %v1393 = vunpack.c.l.b16 %v1178
      %v1394 = vunpack.c.h.b16 %v1178
      %v1395 = vunpack.c.l.b16 %v1179
      %v1396 = vunpack.c.h.b16 %v1179
      %v1397 = vunpack.c.l.b16 %v1180
      %v1398 = vunpack.c.h.b16 %v1180
      %v1399 = vunpack.c.l.b16 %v1181
      %v1400 = vunpack.c.h.b16 %v1181
      %v1401 = vunpack.c.l.b16 %v1182
      %v1402 = vunpack.c.h.b16 %v1182
      %v1403 = vunpack.c.l.b16 %v1183
      %v1404 = vunpack.c.h.b16 %v1183
      %v1405 = vunpack.c.l.b16 %v1184
      %v1406 = vunpack.c.h.b16 %v1184
      %v1407 = vunpack.c.l.b16 %v1185
      %v1408 = vunpack.c.h.b16 %v1185
      %v1409 = vunpack.c.l.b16 %v1186
      %v1410 = vunpack.c.h.b16 %v1186
      %v1411 = vunpack.c.l.b16 %v1187
      %v1412 = vunpack.c.h.b16 %v1187
      %v1413 = vunpack.c.l.b16 %v1188
      %v1414 = vunpack.c.h.b16 %v1188
      %v1415 = vunpack.c.l.b16 %v1189
      %v1416 = vunpack.c.h.b16 %v1189
      %v1417 = vunpack.c.l.b16 %v1190
      %v1418 = vunpack.c.h.b16 %v1190
      %v1419 = vunpack.c.l.b16 %v1191
      %v1420 = vunpack.c.h.b16 %v1191
      %v1421 = vunpack.c.l.b16 %v1192
      %v1422 = vunpack.c.h.b16 %v1192
      %v1423 = vunpack.c.l.b16 %v1193
      %v1424 = vunpack.c.h.b16 %v1193
      %v1425 = vunpack.c.l.b16 %v1194
      %v1426 = vunpack.c.h.b16 %v1194
      %v1427 = vunpack.c.l.b16 %v1195
      %v1428 = vunpack.c.h.b16 %v1195
      %v1429 = vunpack.c.l.b16 %v1196
      %v1430 = vunpack.c.h.b16 %v1196
      %v1431 = vunpack.c.l.b16 %v1197
      %v1432 = vunpack.c.h.b16 %v1197
      %v1433 = vunpack.c.l.b16 %v1198
      %v1434 = vunpack.c.h.b16 %v1198
      %v1435 = vunpack.c.l.b16 %v1199
      %v1436 = vunpack.c.h.b16 %v1199
      %v1437 = vunpack.c.l.b16 %v1200
      %v1438 = vunpack.c.h.b16 %v1200
      %v1439 = vunpack.c.l.b16 %v1201
      %v1440 = vunpack.c.h.b16 %v1201
      %v1441 = vunpack.c.l.b16 %v1202
      %v1442 = vunpack.c.h.b16 %v1202
      %v1443 = vunpack.c.l.b16 %v1203
      %v1444 = vunpack.c.h.b16 %v1203
      %v1445 = vunpack.c.l.b16 %v1204
      %v1446 = vunpack.c.h.b16 %v1204
      %v1447 = vunpack.c.l.b16 %v1205
      %v1448 = vunpack.c.h.b16 %v1205
      %v1449 = vunpack.c.l.b16 %v1206
      %v1450 = vunpack.c.h.b16 %v1206
      %v1451 = vunpack.c.l.b16 %v1207
      %v1452 = vunpack.c.h.b16 %v1207
      %v1453 = vunpack.c.l.b16 %v1208
      %v1454 = vunpack.c.h.b16 %v1208
      %v1455 = vunpack.c.l.b16 %v1209
      %v1456 = vunpack.c.h.b16 %v1209
      %v1457 = vunpack.c.l.b16 %v1210
      %v1458 = vunpack.c.h.b16 %v1210
      %v1459 = vunpack.c.l.b16 %v1211
      %v1460 = vunpack.c.h.b16 %v1211
      %v1461 = vunpack.c.l.b16 %v1212
      %v1462 = vunpack.c.h.b16 %v1212
      %v1463 = vunpack.c.l.b16 %v1213
      %v1464 = vunpack.c.h.b16 %v1213
      %v1465 = vunpack.c.l.b16 %v1214
      %v1466 = vunpack.c.h.b16 %v1214
      %v1467 = vunpack.c.l.b16 %v1215
      %v1468 = vunpack.c.h.b16 %v1215
      %v1469 = vunpack.c.l.b16 %v1216
      %v1470 = vunpack.c.h.b16 %v1216
      %v1471 = vunpack.c.l.b16 %v1217
      %v1472 = vunpack.c.h.b16 %v1217
      %v1473 = vunpack.c.l.b16 %v1218
      %v1474 = vunpack.c.h.b16 %v1218
      %v1475 = vunpack.c.l.b16 %v1219
      %v1476 = vunpack.c.h.b16 %v1219
      %v1477 = vunpack.c.l.b16 %v1220
      %v1478 = vunpack.c.h.b16 %v1220
      %v1479 = vunpack.c.l.b16 %v1221
      %v1480 = vunpack.c.h.b16 %v1221
      %v1481 = vunpack.c.l.b16 %v1222
      %v1482 = vunpack.c.h.b16 %v1222
      %v1483 = vunpack.c.l.b16 %v1223
      %v1484 = vunpack.c.h.b16 %v1223
      %v1485 = vunpack.c.l.b16 %v1224
      %v1486 = vunpack.c.h.b16 %v1224
      %v1487 = vunpack.c.l.b16 %v1225
      %v1488 = vunpack.c.h.b16 %v1225
      %v1489 = vunpack.c.l.b16 %v1226
      %v1490 = vunpack.c.h.b16 %v1226
      %v1491 = vunpack.c.l.b16 %v1227
      %v1492 = vunpack.c.h.b16 %v1227
      %v1493 = vunpack.c.l.b16 %v1228
      %v1494 = vunpack.c.h.b16 %v1228
      %v1495 = vunpack.c.l.b16 %v1229
      %v1496 = vunpack.c.h.b16 %v1229
      %v1497 = vunpack.c.l.b16 %v1230
      %v1498 = vunpack.c.h.b16 %v1230
      %v1499 = vunpack.c.l.b16 %v1231
      %v1500 = vunpack.c.h.b16 %v1231
      %v1501 = vunpack.c.l.b16 %v1232
      %v1502 = vunpack.c.h.b16 %v1232
      %v1503 = vunpack.c.l.b16 %v1233
      %v1504 = vunpack.c.h.b16 %v1233
      %v1505 = vunpack.c.l.b16 %v1234
      %v1506 = vunpack.c.h.b16 %v1234
      %v1507 = vunpack.c.l.b16 %v1235
      %v1508 = vunpack.c.h.b16 %v1235
      %v1509 = vunpack.c.l.b16 %v1236
      %v1510 = vunpack.c.h.b16 %v1236
      %v1511 = vunpack.c.l.b16 %v1237
      %v1512 = vunpack.c.h.b16 %v1237
      %v1513 = vunpack.c.l.b16 %v1238
      %v1514 = vunpack.c.h.b16 %v1238
      %v1515 = vunpack.c.l.b16 %v1239
      %v1516 = vunpack.c.h.b16 %v1239
      %v1517 = vunpack.c.l.b16 %v1240
      %v1518 = vunpack.c.h.b16 %v1240
      %v1519 = vunpack.c.l.b16 %v1241
      %v1520 = vunpack.c.h.b16 %v1241
      %v1521 = vunpack.c.l.b16 %v1242
      %v1522 = vunpack.c.h.b16 %v1242
      %v1523 = vunpack.c.l.b16 %v1243
      %v1524 = vunpack.c.h.b16 %v1243
      %v1525 = vunpack.c.l.b16 %v1244
      %v1526 = vunpack.c.h.b16 %v1244
      %v1527 = vunpack.c.l.b16 %v1245
      %v1528 = vunpack.c.h.b16 %v1245
      %v1529 = vunpack.c.l.b16 %v1246
      %v1530 = vunpack.c.h.b16 %v1246
      %v1531 = vunpack.c.l.b16 %v1247
      %v1532 = vunpack.c.h.b16 %v1247
      %v1533 = vunpack.c.l.b16 %v1248
      %v1534 = vunpack.c.h.b16 %v1248
      %v1535 = vunpack.c.l.b16 %v1249
      %v1536 = vunpack.c.h.b16 %v1249
      %v1537 = vunpack.c.l.b16 %v1250
      %v1538 = vunpack.c.h.b16 %v1250
      %v1539 = vpack.c.b16 %v1351, %v1347
      %v1540 = vpack.c.b16 %v1352, %v1348
      %v1541 = vpack.c.b16 %v1353, %v1349
      %v1542 = vpack.c.b16 %v1354, %v1350
      %v1543 = vpack.c.b16 %v1359, %v1355
      %v1544 = vpack.c.b16 %v1360, %v1356
      %v1545 = vpack.c.b16 %v1361, %v1357
      %v1546 = vpack.c.b16 %v1362, %v1358
      %v1547 = vpack.c.b16 %v1367, %v1363
      %v1548 = vpack.c.b16 %v1368, %v1364
      %v1549 = vpack.c.b16 %v1369, %v1365
      %v1550 = vpack.c.b16 %v1370, %v1366
      %v1551 = vpack.c.b16 %v1375, %v1371
      %v1552 = vpack.c.b16 %v1376, %v1372
      %v1553 = vpack.c.b16 %v1377, %v1373
      %v1554 = vpack.c.b16 %v1378, %v1374
      %v1555 = vpack.c.b16 %v1383, %v1379
      %v1556 = vpack.c.b16 %v1384, %v1380
      %v1557 = vpack.c.b16 %v1385, %v1381
      %v1558 = vpack.c.b16 %v1386, %v1382
      %v1559 = vpack.c.b16 %v1391, %v1387
      %v1560 = vpack.c.b16 %v1392, %v1388
      %v1561 = vpack.c.b16 %v1393, %v1389
      %v1562 = vpack.c.b16 %v1394, %v1390
      %v1563 = vpack.c.b16 %v1399, %v1395
      %v1564 = vpack.c.b16 %v1400, %v1396
      %v1565 = vpack.c.b16 %v1401, %v1397
      %v1566 = vpack.c.b16 %v1402, %v1398
      %v1567 = vpack.c.b16 %v1407, %v1403
      %v1568 = vpack.c.b16 %v1408, %v1404
      %v1569 = vpack.c.b16 %v1409, %v1405
      %v1570 = vpack.c.b16 %v1410, %v1406
      %v1571 = vpack.c.b16 %v1415, %v1411
      %v1572 = vpack.c.b16 %v1416, %v1412
      %v1573 = vpack.c.b16 %v1417, %v1413
      %v1574 = vpack.c.b16 %v1418, %v1414
      %v1575 = vpack.c.b16 %v1423, %v1419
      %v1576 = vpack.c.b16 %v1424, %v1420
      %v1577 = vpack.c.b16 %v1425, %v1421
      %v1578 = vpack.c.b16 %v1426, %v1422
      %v1579 = vpack.c.b16 %v1431, %v1427
      %v1580 = vpack.c.b16 %v1432, %v1428
      %v1581 = vpack.c.b16 %v1433, %v1429
      %v1582 = vpack.c.b16 %v1434, %v1430
      %v1583 = vpack.c.b16 %v1439, %v1435
      %v1584 = vpack.c.b16 %v1440, %v1436
      %v1585 = vpack.c.b16 %v1441, %v1437
      %v1586 = vpack.c.b16 %v1442, %v1438
      %v1587 = vpack.c.b16 %v1447, %v1443
      %v1588 = vpack.c.b16 %v1448, %v1444
      %v1589 = vpack.c.b16 %v1449, %v1445
      %v1590 = vpack.c.b16 %v1450, %v1446
      %v1591 = vpack.c.b16 %v1455, %v1451
      %v1592 = vpack.c.b16 %v1456, %v1452
      %v1593 = vpack.c.b16 %v1457, %v1453
      %v1594 = vpack.c.b16 %v1458, %v1454
      %v1595 = vpack.c.b16 %v1463, %v1459
      %v1596 = vpack.c.b16 %v1464, %v1460
      %v1597 = vpack.c.b16 %v1465, %v1461
      %v1598 = vpack.c.b16 %v1466, %v1462
      %v1599 = vpack.c.b16 %v1471, %v1467
      %v1600 = vpack.c.b16 %v1472, %v1468
      %v1601 = vpack.c.b16 %v1473, %v1469
      %v1602 = vpack.c.b16 %v1474, %v1470
      %v1603 = vpack.c.b16 %v1479, %v1475
      %v1604 = vpack.c.b16 %v1480, %v1476
      %v1605 = vpack.c.b16 %v1481, %v1477
      %v1606 = vpack.c.b16 %v1482, %v1478
      %v1607 = vpack.c.b16 %v1487, %v1483
      %v1608 = vpack.c.b16 %v1488, %v1484
      %v1609 = vpack.c.b16 %v1489, %v1485
      %v1610 = vpack.c.b16 %v1490, %v1486
      %v1611 = vpack.c.b16 %v1495, %v1491
      %v1612 = vpack.c.b16 %v1496, %v1492
      %v1613 = vpack.c.b16 %v1497, %v1493
      %v1614 = vpack.c.b16 %v1498, %v1494
      %v1615 = vpack.c.b16 %v1503, %v1499
      %v1616 = vpack.c.b16 %v1504, %v1500
      %v1617 = vpack.c.b16 %v1505, %v1501
      %v1618 = vpack.c.b16 %v1506, %v1502
      %v1619 = vpack.c.b16 %v1511, %v1507
      %v1620 = vpack.c.b16 %v1512, %v1508
      %v1621 = vpack.c.b16 %v1513, %v1509
      %v1622 = vpack.c.b16 %v1514, %v1510
      %v1623 = vpack.c.b16 %v1519, %v1515
      %v1624 = vpack.c.b16 %v1520, %v1516
      %v1625 = vpack.c.b16 %v1521, %v1517
      %v1626 = vpack.c.b16 %v1522, %v1518
      %v1627 = vpack.c.b16 %v1527, %v1523
      %v1628 = vpack.c.b16 %v1528, %v1524
      %v1629 = vpack.c.b16 %v1529, %v1525
      %v1630 = vpack.c.b16 %v1530, %v1526
      %v1631 = vpack.c.b16 %v1535, %v1531
      %v1632 = vpack.c.b16 %v1536, %v1532
      %v1633 = vpack.c.b16 %v1537, %v1533
      %v1634 = vpack.c.b16 %v1538, %v1534
      %1731 = vmatprep.subr.bf16.mxu0 %v1568
      %1732 = vmatpush1.bf16.msra.mxu0 %v1567
      %1733 = vmatprep.subr.bf16.mxu0 %v1564
      %1734 = vmatpush1.bf16.msra.mxu0 %v1563
      %1735 = vmatprep.subr.bf16.mxu0 %v1560
      %1736 = vmatpush1.bf16.msra.mxu0 %v1559
      %1737 = vmatprep.subr.bf16.mxu0 %v1556
      %1738 = vmatpush1.bf16.msra.mxu0 %v1555
      %1739 = vmatprep.subr.bf16.mxu0 %v1552
      %1740 = vmatpush1.bf16.msra.mxu0 %v1551
      %1741 = vmatprep.subr.bf16.mxu0 %v1548
      %1742 = vmatpush1.bf16.msra.mxu0 %v1547
      %1743 = vmatprep.subr.bf16.mxu0 %v1544
      %1744 = vmatpush1.bf16.msra.mxu0 %v1543
      %1745 = vmatprep.subr.bf16.mxu0 %v1540
      %1746 = vmatpush1.bf16.msra.mxu0 %v1539
      %1747 = vmatprep.subr.bf16.mxu0 %v1600
      %1748 = vmatpush2.bf16.msra.mxu0 %v1599
      %1749 = vmatprep.subr.bf16.mxu0 %v1596
      %1750 = vmatpush2.bf16.msra.mxu0 %v1595
      %1751 = vmatprep.subr.bf16.mxu0 %v1592
      %1752 = vmatpush2.bf16.msra.mxu0 %v1591
      %1753 = vmatprep.subr.bf16.mxu0 %v1588
      %1754 = vmatpush2.bf16.msra.mxu0 %v1587
      %1755 = vmatprep.subr.bf16.mxu0 %v1584
      %1756 = vmatpush2.bf16.msra.mxu0 %v1583
      %1757 = vmatprep.subr.bf16.mxu0 %v1580
      %1758 = vmatpush2.bf16.msra.mxu0 %v1579
      %1759 = vmatprep.subr.bf16.mxu0 %v1576
      %1760 = vmatpush2.bf16.msra.mxu0 %v1575
      %1761 = vmatprep.subr.bf16.mxu0 %v1572
      %1762 = vmatpush2.bf16.msra.mxu0 %v1571
      %1763 = vmatprep.mubr.bf16.mxu0 %v1106
      %1764 = vmatmul.mubr.bf16.gmra.mxu0 %v1074
      %v1765 = vpop.f32.mrf.mxu0
      %v1766 = vadd.f32 0.0, %v1765
      %v1767 = vpop.f32.mrf.mxu0
      %v1768 = vadd.f32 0.0, %v1767
      %v1769 = vpop.f32.mrf.mxu0
      %v1770 = vadd.f32 0.0, %v1769
      %v1771 = vpop.f32.mrf.mxu0
      %v1772 = vadd.f32 0.0, %v1771
      %1773 = vmatprep.mubr.bf16.mxu0 %v1107
      %1774 = vmatmul.mubr.bf16.gmra.mxu0 %v1075
      %v1775 = vpop.f32.mrf.mxu0
      %v1776 = vadd.f32 0.0, %v1775
      %v1777 = vpop.f32.mrf.mxu0
      %v1778 = vadd.f32 0.0, %v1777
      %v1779 = vpop.f32.mrf.mxu0
      %v1780 = vadd.f32 0.0, %v1779
      %v1781 = vpop.f32.mrf.mxu0
      %v1782 = vadd.f32 0.0, %v1781
      %1783 = vmatprep.mubr.bf16.mxu0 %v1108
      %1784 = vmatmul.mubr.bf16.gmra.mxu0 %v1076
      %v1785 = vpop.f32.mrf.mxu0
      %v1786 = vadd.f32 0.0, %v1785
      %v1787 = vpop.f32.mrf.mxu0
      %v1788 = vadd.f32 0.0, %v1787
      %v1789 = vpop.f32.mrf.mxu0
      %v1790 = vadd.f32 0.0, %v1789
      %v1791 = vpop.f32.mrf.mxu0
      %v1792 = vadd.f32 0.0, %v1791
      %1793 = vmatprep.mubr.bf16.mxu0 %v1109
      %1794 = vmatmul.mubr.bf16.gmra.mxu0 %v1077
      %v1795 = vpop.f32.mrf.mxu0
      %v1796 = vadd.f32 0.0, %v1795
      %v1797 = vpop.f32.mrf.mxu0
      %v1798 = vadd.f32 0.0, %v1797
      %v1799 = vpop.f32.mrf.mxu0
      %v1800 = vadd.f32 0.0, %v1799
      %v1801 = vpop.f32.mrf.mxu0
      %v1802 = vadd.f32 0.0, %v1801
      %1803 = vmatprep.mubr.bf16.mxu0 %v1110
      %1804 = vmatmul.mubr.bf16.gmra.mxu0 %v1078
      %v1805 = vpop.f32.mrf.mxu0
      %v1806 = vadd.f32 0.0, %v1805
      %v1807 = vpop.f32.mrf.mxu0
      %v1808 = vadd.f32 0.0, %v1807
      %v1809 = vpop.f32.mrf.mxu0
      %v1810 = vadd.f32 0.0, %v1809
      %v1811 = vpop.f32.mrf.mxu0
      %v1812 = vadd.f32 0.0, %v1811
      %1813 = vmatprep.mubr.bf16.mxu0 %v1111
      %1814 = vmatmul.mubr.bf16.gmra.mxu0 %v1079
      %v1815 = vpop.f32.mrf.mxu0
      %v1816 = vadd.f32 0.0, %v1815
      %v1817 = vpop.f32.mrf.mxu0
      %v1818 = vadd.f32 0.0, %v1817
      %v1819 = vpop.f32.mrf.mxu0
      %v1820 = vadd.f32 0.0, %v1819
      %v1821 = vpop.f32.mrf.mxu0
      %v1822 = vadd.f32 0.0, %v1821
      %1823 = vmatprep.mubr.bf16.mxu0 %v1112
      %1824 = vmatmul.mubr.bf16.gmra.mxu0 %v1080
      %v1825 = vpop.f32.mrf.mxu0
      %v1826 = vadd.f32 0.0, %v1825
      %v1827 = vpop.f32.mrf.mxu0
      %v1828 = vadd.f32 0.0, %v1827
      %v1829 = vpop.f32.mrf.mxu0
      %v1830 = vadd.f32 0.0, %v1829
      %v1831 = vpop.f32.mrf.mxu0
      %v1832 = vadd.f32 0.0, %v1831
      %1833 = vmatprep.mubr.bf16.mxu0 %v1113
      %1834 = vmatmul.mubr.bf16.gmra.mxu0 %v1081
      %v1835 = vpop.f32.mrf.mxu0
      %v1836 = vadd.f32 0.0, %v1835
      %v1837 = vpop.f32.mrf.mxu0
      %v1838 = vadd.f32 0.0, %v1837
      %v1839 = vpop.f32.mrf.mxu0
      %v1840 = vadd.f32 0.0, %v1839
      %v1841 = vpop.f32.mrf.mxu0
      %v1842 = vadd.f32 0.0, %v1841
      %1843 = vdwg.mxu0
      %1844 = vmatprep.subr.bf16.mxu0 %v1632
      %1845 = vmatpush1.bf16.msra.mxu0 %v1631
      %1846 = vmatprep.subr.bf16.mxu0 %v1628
      %1847 = vmatpush1.bf16.msra.mxu0 %v1627
      %1848 = vmatprep.subr.bf16.mxu0 %v1624
      %1849 = vmatpush1.bf16.msra.mxu0 %v1623
      %1850 = vmatprep.subr.bf16.mxu0 %v1620
      %1851 = vmatpush1.bf16.msra.mxu0 %v1619
      %1852 = vmatprep.subr.bf16.mxu0 %v1616
      %1853 = vmatpush1.bf16.msra.mxu0 %v1615
      %1854 = vmatprep.subr.bf16.mxu0 %v1612
      %1855 = vmatpush1.bf16.msra.mxu0 %v1611
      %1856 = vmatprep.subr.bf16.mxu0 %v1608
      %1857 = vmatpush1.bf16.msra.mxu0 %v1607
      %1858 = vmatprep.subr.bf16.mxu0 %v1604
      %1859 = vmatpush1.bf16.msra.mxu0 %v1603
      %1860 = vmatprep.subr.bf16.mxu0 0
      %1861 = vmatpush2.bf16.msra.mxu0 0
      %1862 = vmatprep.subr.bf16.mxu0 0
      %1863 = vmatpush2.bf16.msra.mxu0 0
      %1864 = vmatprep.subr.bf16.mxu0 0
      %1865 = vmatpush2.bf16.msra.mxu0 0
      %1866 = vmatprep.subr.bf16.mxu0 0
      %1867 = vmatpush2.bf16.msra.mxu0 0
      %1868 = vmatprep.subr.bf16.mxu0 0
      %1869 = vmatpush2.bf16.msra.mxu0 0
      %1870 = vmatprep.subr.bf16.mxu0 0
      %1871 = vmatpush2.bf16.msra.mxu0 0
      %1872 = vmatprep.subr.bf16.mxu0 0
      %1873 = vmatpush2.bf16.msra.mxu0 0
      %1874 = vmatprep.subr.bf16.mxu0 0
      %1875 = vmatpush2.bf16.msra.mxu0 0
      %1876 = vmatprep.mubr.bf16.mxu0 0
      %1877 = vmatmul.mubr.bf16.gmra.mxu0 %v1138
      %v1878 = vpop.f32.mrf.mxu0
      %v1879 = vadd.f32 %v1766, %v1878
      %v1880 = vpop.f32.mrf.mxu0
      %v1881 = vadd.f32 %v1768, %v1880
      %v1882 = vpop.f32.mrf.mxu0
      %v1883 = vadd.f32 %v1770, %v1882
      %v1884 = vpop.f32.mrf.mxu0
      %v1885 = vadd.f32 %v1772, %v1884
      %1886 = vmatprep.mubr.bf16.mxu0 0
      %1887 = vmatmul.mubr.bf16.gmra.mxu0 %v1139
      %v1888 = vpop.f32.mrf.mxu0
      %v1889 = vadd.f32 %v1776, %v1888
      %v1890 = vpop.f32.mrf.mxu0
      %v1891 = vadd.f32 %v1778, %v1890
      %v1892 = vpop.f32.mrf.mxu0
      %v1893 = vadd.f32 %v1780, %v1892
      %v1894 = vpop.f32.mrf.mxu0
      %v1895 = vadd.f32 %v1782, %v1894
      %1896 = vmatprep.mubr.bf16.mxu0 0
      %1897 = vmatmul.mubr.bf16.gmra.mxu0 %v1140
      %v1898 = vpop.f32.mrf.mxu0
      %v1899 = vadd.f32 %v1786, %v1898
      %v1900 = vpop.f32.mrf.mxu0
      %v1901 = vadd.f32 %v1788, %v1900
      %v1902 = vpop.f32.mrf.mxu0
      %v1903 = vadd.f32 %v1790, %v1902
      %v1904 = vpop.f32.mrf.mxu0
      %v1905 = vadd.f32 %v1792, %v1904
      %1906 = vmatprep.mubr.bf16.mxu0 0
      %1907 = vmatmul.mubr.bf16.gmra.mxu0 %v1141
      %v1908 = vpop.f32.mrf.mxu0
      %v1909 = vadd.f32 %v1796, %v1908
      %v1910 = vpop.f32.mrf.mxu0
      %v1911 = vadd.f32 %v1798, %v1910
      %v1912 = vpop.f32.mrf.mxu0
      %v1913 = vadd.f32 %v1800, %v1912
      %v1914 = vpop.f32.mrf.mxu0
      %v1915 = vadd.f32 %v1802, %v1914
      %1916 = vmatprep.mubr.bf16.mxu0 0
      %1917 = vmatmul.mubr.bf16.gmra.mxu0 %v1142
      %v1918 = vpop.f32.mrf.mxu0
      %v1919 = vadd.f32 %v1806, %v1918
      %v1920 = vpop.f32.mrf.mxu0
      %v1921 = vadd.f32 %v1808, %v1920
      %v1922 = vpop.f32.mrf.mxu0
      %v1923 = vadd.f32 %v1810, %v1922
      %v1924 = vpop.f32.mrf.mxu0
      %v1925 = vadd.f32 %v1812, %v1924
      %1926 = vmatprep.mubr.bf16.mxu0 0
      %1927 = vmatmul.mubr.bf16.gmra.mxu0 %v1143
      %v1928 = vpop.f32.mrf.mxu0
      %v1929 = vadd.f32 %v1816, %v1928
      %v1930 = vpop.f32.mrf.mxu0
      %v1931 = vadd.f32 %v1818, %v1930
      %v1932 = vpop.f32.mrf.mxu0
      %v1933 = vadd.f32 %v1820, %v1932
      %v1934 = vpop.f32.mrf.mxu0
      %v1935 = vadd.f32 %v1822, %v1934
      %1936 = vmatprep.mubr.bf16.mxu0 0
      %1937 = vmatmul.mubr.bf16.gmra.mxu0 %v1144
      %v1938 = vpop.f32.mrf.mxu0
      %v1939 = vadd.f32 %v1826, %v1938
      %v1940 = vpop.f32.mrf.mxu0
      %v1941 = vadd.f32 %v1828, %v1940
      %v1942 = vpop.f32.mrf.mxu0
      %v1943 = vadd.f32 %v1830, %v1942
      %v1944 = vpop.f32.mrf.mxu0
      %v1945 = vadd.f32 %v1832, %v1944
      %1946 = vmatprep.mubr.bf16.mxu0 0
      %1947 = vmatmul.mubr.bf16.gmra.mxu0 %v1145
      %v1948 = vpop.f32.mrf.mxu0
      %v1949 = vadd.f32 %v1836, %v1948
      %v1950 = vpop.f32.mrf.mxu0
      %v1951 = vadd.f32 %v1838, %v1950
      %v1952 = vpop.f32.mrf.mxu0
      %v1953 = vadd.f32 %v1840, %v1952
      %v1954 = vpop.f32.mrf.mxu0
      %v1955 = vadd.f32 %v1842, %v1954
      %1956 = vdwg.mxu0
      %1957 = vmatprep.subr.bf16.mxu0 %v1570
      %1958 = vmatpush1.bf16.msra.mxu0 %v1569
      %1959 = vmatprep.subr.bf16.mxu0 %v1566
      %1960 = vmatpush1.bf16.msra.mxu0 %v1565
      %1961 = vmatprep.subr.bf16.mxu0 %v1562
      %1962 = vmatpush1.bf16.msra.mxu0 %v1561
      %1963 = vmatprep.subr.bf16.mxu0 %v1558
      %1964 = vmatpush1.bf16.msra.mxu0 %v1557
      %1965 = vmatprep.subr.bf16.mxu0 %v1554
      %1966 = vmatpush1.bf16.msra.mxu0 %v1553
      %1967 = vmatprep.subr.bf16.mxu0 %v1550
      %1968 = vmatpush1.bf16.msra.mxu0 %v1549
      %1969 = vmatprep.subr.bf16.mxu0 %v1546
      %1970 = vmatpush1.bf16.msra.mxu0 %v1545
      %1971 = vmatprep.subr.bf16.mxu0 %v1542
      %1972 = vmatpush1.bf16.msra.mxu0 %v1541
      %1973 = vmatprep.subr.bf16.mxu0 %v1602
      %1974 = vmatpush2.bf16.msra.mxu0 %v1601
      %1975 = vmatprep.subr.bf16.mxu0 %v1598
      %1976 = vmatpush2.bf16.msra.mxu0 %v1597
      %1977 = vmatprep.subr.bf16.mxu0 %v1594
      %1978 = vmatpush2.bf16.msra.mxu0 %v1593
      %1979 = vmatprep.subr.bf16.mxu0 %v1590
      %1980 = vmatpush2.bf16.msra.mxu0 %v1589
      %1981 = vmatprep.subr.bf16.mxu0 %v1586
      %1982 = vmatpush2.bf16.msra.mxu0 %v1585
      %1983 = vmatprep.subr.bf16.mxu0 %v1582
      %1984 = vmatpush2.bf16.msra.mxu0 %v1581
      %1985 = vmatprep.subr.bf16.mxu0 %v1578
      %1986 = vmatpush2.bf16.msra.mxu0 %v1577
      %1987 = vmatprep.subr.bf16.mxu0 %v1574
      %1988 = vmatpush2.bf16.msra.mxu0 %v1573
      %1989 = vmatprep.mubr.bf16.mxu0 %v1106
      %1990 = vmatmul.mubr.bf16.gmra.mxu0 %v1074
      %v1991 = vpop.f32.mrf.mxu0
      %v1992 = vadd.f32 0.0, %v1991
      %v1993 = vpop.f32.mrf.mxu0
      %v1994 = vadd.f32 0.0, %v1993
      %v1995 = vpop.f32.mrf.mxu0
      %v1996 = vadd.f32 0.0, %v1995
      %v1997 = vpop.f32.mrf.mxu0
      %v1998 = vadd.f32 0.0, %v1997
      %1999 = vmatprep.mubr.bf16.mxu0 %v1107
      %2000 = vmatmul.mubr.bf16.gmra.mxu0 %v1075
      %v2001 = vpop.f32.mrf.mxu0
      %v2002 = vadd.f32 0.0, %v2001
      %v2003 = vpop.f32.mrf.mxu0
      %v2004 = vadd.f32 0.0, %v2003
      %v2005 = vpop.f32.mrf.mxu0
      %v2006 = vadd.f32 0.0, %v2005
      %v2007 = vpop.f32.mrf.mxu0
      %v2008 = vadd.f32 0.0, %v2007
      %2009 = vmatprep.mubr.bf16.mxu0 %v1108
      %2010 = vmatmul.mubr.bf16.gmra.mxu0 %v1076
      %v2011 = vpop.f32.mrf.mxu0
      %v2012 = vadd.f32 0.0, %v2011
      %v2013 = vpop.f32.mrf.mxu0
      %v2014 = vadd.f32 0.0, %v2013
      %v2015 = vpop.f32.mrf.mxu0
      %v2016 = vadd.f32 0.0, %v2015
      %v2017 = vpop.f32.mrf.mxu0
      %v2018 = vadd.f32 0.0, %v2017
      %2019 = vmatprep.mubr.bf16.mxu0 %v1109
      %2020 = vmatmul.mubr.bf16.gmra.mxu0 %v1077
      %v2021 = vpop.f32.mrf.mxu0
      %v2022 = vadd.f32 0.0, %v2021
      %v2023 = vpop.f32.mrf.mxu0
      %v2024 = vadd.f32 0.0, %v2023
      %v2025 = vpop.f32.mrf.mxu0
      %v2026 = vadd.f32 0.0, %v2025
      %v2027 = vpop.f32.mrf.mxu0
      %v2028 = vadd.f32 0.0, %v2027
      %2029 = vmatprep.mubr.bf16.mxu0 %v1110
      %2030 = vmatmul.mubr.bf16.gmra.mxu0 %v1078
      %v2031 = vpop.f32.mrf.mxu0
      %v2032 = vadd.f32 0.0, %v2031
      %v2033 = vpop.f32.mrf.mxu0
      %v2034 = vadd.f32 0.0, %v2033
      %v2035 = vpop.f32.mrf.mxu0
      %v2036 = vadd.f32 0.0, %v2035
      %v2037 = vpop.f32.mrf.mxu0
      %v2038 = vadd.f32 0.0, %v2037
      %2039 = vmatprep.mubr.bf16.mxu0 %v1111
      %2040 = vmatmul.mubr.bf16.gmra.mxu0 %v1079
      %v2041 = vpop.f32.mrf.mxu0
      %v2042 = vadd.f32 0.0, %v2041
      %v2043 = vpop.f32.mrf.mxu0
      %v2044 = vadd.f32 0.0, %v2043
      %v2045 = vpop.f32.mrf.mxu0
      %v2046 = vadd.f32 0.0, %v2045
      %v2047 = vpop.f32.mrf.mxu0
      %v2048 = vadd.f32 0.0, %v2047
      %2049 = vmatprep.mubr.bf16.mxu0 %v1112
      %2050 = vmatmul.mubr.bf16.gmra.mxu0 %v1080
      %v2051 = vpop.f32.mrf.mxu0
      %v2052 = vadd.f32 0.0, %v2051
      %v2053 = vpop.f32.mrf.mxu0
      %v2054 = vadd.f32 0.0, %v2053
      %v2055 = vpop.f32.mrf.mxu0
      %v2056 = vadd.f32 0.0, %v2055
      %v2057 = vpop.f32.mrf.mxu0
      %v2058 = vadd.f32 0.0, %v2057
      %2059 = vmatprep.mubr.bf16.mxu0 %v1113
      %2060 = vmatmul.mubr.bf16.gmra.mxu0 %v1081
      %v2061 = vpop.f32.mrf.mxu0
      %v2062 = vadd.f32 0.0, %v2061
      %v2063 = vpop.f32.mrf.mxu0
      %v2064 = vadd.f32 0.0, %v2063
      %v2065 = vpop.f32.mrf.mxu0
      %v2066 = vadd.f32 0.0, %v2065
      %v2067 = vpop.f32.mrf.mxu0
      %v2068 = vadd.f32 0.0, %v2067
      %2069 = vdwg.mxu0
      %2070 = vmatprep.subr.bf16.mxu0 %v1634
      %2071 = vmatpush1.bf16.msra.mxu0 %v1633
      %2072 = vmatprep.subr.bf16.mxu0 %v1630
      %2073 = vmatpush1.bf16.msra.mxu0 %v1629
      %2074 = vmatprep.subr.bf16.mxu0 %v1626
      %2075 = vmatpush1.bf16.msra.mxu0 %v1625
      %2076 = vmatprep.subr.bf16.mxu0 %v1622
      %2077 = vmatpush1.bf16.msra.mxu0 %v1621
      %2078 = vmatprep.subr.bf16.mxu0 %v1618
      %2079 = vmatpush1.bf16.msra.mxu0 %v1617
      %2080 = vmatprep.subr.bf16.mxu0 %v1614
      %2081 = vmatpush1.bf16.msra.mxu0 %v1613
      %2082 = vmatprep.subr.bf16.mxu0 %v1610
      %2083 = vmatpush1.bf16.msra.mxu0 %v1609
      %2084 = vmatprep.subr.bf16.mxu0 %v1606
      %2085 = vmatpush1.bf16.msra.mxu0 %v1605
      %2086 = vmatprep.subr.bf16.mxu0 0
      %2087 = vmatpush2.bf16.msra.mxu0 0
      %2088 = vmatprep.subr.bf16.mxu0 0
      %2089 = vmatpush2.bf16.msra.mxu0 0
      %2090 = vmatprep.subr.bf16.mxu0 0
      %2091 = vmatpush2.bf16.msra.mxu0 0
      %2092 = vmatprep.subr.bf16.mxu0 0
      %2093 = vmatpush2.bf16.msra.mxu0 0
      %2094 = vmatprep.subr.bf16.mxu0 0
      %2095 = vmatpush2.bf16.msra.mxu0 0
      %2096 = vmatprep.subr.bf16.mxu0 0
      %2097 = vmatpush2.bf16.msra.mxu0 0
      %2098 = vmatprep.subr.bf16.mxu0 0
      %2099 = vmatpush2.bf16.msra.mxu0 0
      %2100 = vmatprep.subr.bf16.mxu0 0
      %2101 = vmatpush2.bf16.msra.mxu0 0
      %2102 = vmatprep.mubr.bf16.mxu0 0
      %2103 = vmatmul.mubr.bf16.gmra.mxu0 %v1138
      %v2104 = vpop.f32.mrf.mxu0
      %v2105 = vadd.f32 %v1992, %v2104
      %v2106 = vpop.f32.mrf.mxu0
      %v2107 = vadd.f32 %v1994, %v2106
      %v2108 = vpop.f32.mrf.mxu0
      %v2109 = vadd.f32 %v1996, %v2108
      %v2110 = vpop.f32.mrf.mxu0
      %v2111 = vadd.f32 %v1998, %v2110
      %2112 = vmatprep.mubr.bf16.mxu0 0
      %2113 = vmatmul.mubr.bf16.gmra.mxu0 %v1139
      %v2114 = vpop.f32.mrf.mxu0
      %v2115 = vadd.f32 %v2002, %v2114
      %v2116 = vpop.f32.mrf.mxu0
      %v2117 = vadd.f32 %v2004, %v2116
      %v2118 = vpop.f32.mrf.mxu0
      %v2119 = vadd.f32 %v2006, %v2118
      %v2120 = vpop.f32.mrf.mxu0
      %v2121 = vadd.f32 %v2008, %v2120
      %2122 = vmatprep.mubr.bf16.mxu0 0
      %2123 = vmatmul.mubr.bf16.gmra.mxu0 %v1140
      %v2124 = vpop.f32.mrf.mxu0
      %v2125 = vadd.f32 %v2012, %v2124
      %v2126 = vpop.f32.mrf.mxu0
      %v2127 = vadd.f32 %v2014, %v2126
      %v2128 = vpop.f32.mrf.mxu0
      %v2129 = vadd.f32 %v2016, %v2128
      %v2130 = vpop.f32.mrf.mxu0
      %v2131 = vadd.f32 %v2018, %v2130
      %2132 = vmatprep.mubr.bf16.mxu0 0
      %2133 = vmatmul.mubr.bf16.gmra.mxu0 %v1141
      %v2134 = vpop.f32.mrf.mxu0
      %v2135 = vadd.f32 %v2022, %v2134
      %v2136 = vpop.f32.mrf.mxu0
      %v2137 = vadd.f32 %v2024, %v2136
      %v2138 = vpop.f32.mrf.mxu0
      %v2139 = vadd.f32 %v2026, %v2138
      %v2140 = vpop.f32.mrf.mxu0
      %v2141 = vadd.f32 %v2028, %v2140
      %2142 = vmatprep.mubr.bf16.mxu0 0
      %2143 = vmatmul.mubr.bf16.gmra.mxu0 %v1142
      %v2144 = vpop.f32.mrf.mxu0
      %v2145 = vadd.f32 %v2032, %v2144
      %v2146 = vpop.f32.mrf.mxu0
      %v2147 = vadd.f32 %v2034, %v2146
      %v2148 = vpop.f32.mrf.mxu0
      %v2149 = vadd.f32 %v2036, %v2148
      %v2150 = vpop.f32.mrf.mxu0
      %v2151 = vadd.f32 %v2038, %v2150
      %2152 = vmatprep.mubr.bf16.mxu0 0
      %2153 = vmatmul.mubr.bf16.gmra.mxu0 %v1143
      %v2154 = vpop.f32.mrf.mxu0
      %v2155 = vadd.f32 %v2042, %v2154
      %v2156 = vpop.f32.mrf.mxu0
      %v2157 = vadd.f32 %v2044, %v2156
      %v2158 = vpop.f32.mrf.mxu0
      %v2159 = vadd.f32 %v2046, %v2158
      %v2160 = vpop.f32.mrf.mxu0
      %v2161 = vadd.f32 %v2048, %v2160
      %2162 = vmatprep.mubr.bf16.mxu0 0
      %2163 = vmatmul.mubr.bf16.gmra.mxu0 %v1144
      %v2164 = vpop.f32.mrf.mxu0
      %v2165 = vadd.f32 %v2052, %v2164
      %v2166 = vpop.f32.mrf.mxu0
      %v2167 = vadd.f32 %v2054, %v2166
      %v2168 = vpop.f32.mrf.mxu0
      %v2169 = vadd.f32 %v2056, %v2168
      %v2170 = vpop.f32.mrf.mxu0
      %v2171 = vadd.f32 %v2058, %v2170
      %2172 = vmatprep.mubr.bf16.mxu0 0
      %2173 = vmatmul.mubr.bf16.gmra.mxu0 %v1145
      %v2174 = vpop.f32.mrf.mxu0
      %v2175 = vadd.f32 %v2062, %v2174
      %v2176 = vpop.f32.mrf.mxu0
      %v2177 = vadd.f32 %v2064, %v2176
      %v2178 = vpop.f32.mrf.mxu0
      %v2179 = vadd.f32 %v2066, %v2178
      %v2180 = vpop.f32.mrf.mxu0
      %v2181 = vadd.f32 %v2068, %v2180
      %2182 = vdwg.mxu0
      %v2279 = vunpack.c.l.b16 %v649
      %v2280 = vunpack.c.h.b16 %v649
      %v2281 = vunpack.c.l.b16 %v650
      %v2282 = vunpack.c.h.b16 %v650
      %v2283 = vunpack.c.l.b16 %v651
      %v2284 = vunpack.c.h.b16 %v651
      %v2285 = vunpack.c.l.b16 %v652
      %v2286 = vunpack.c.h.b16 %v652
      %v2287 = vunpack.c.l.b16 %v653
      %v2288 = vunpack.c.h.b16 %v653
      %v2289 = vunpack.c.l.b16 %v654
      %v2290 = vunpack.c.h.b16 %v654
      %v2291 = vunpack.c.l.b16 %v655
      %v2292 = vunpack.c.h.b16 %v655
      %v2293 = vunpack.c.l.b16 %v656
      %v2294 = vunpack.c.h.b16 %v656
      %v2295 = vunpack.c.l.b16 %v657
      %v2296 = vunpack.c.h.b16 %v657
      %v2297 = vunpack.c.l.b16 %v658
      %v2298 = vunpack.c.h.b16 %v658
      %v2299 = vunpack.c.l.b16 %v659
      %v2300 = vunpack.c.h.b16 %v659
      %v2301 = vunpack.c.l.b16 %v660
      %v2302 = vunpack.c.h.b16 %v660
      %v2303 = vunpack.c.l.b16 %v661
      %v2304 = vunpack.c.h.b16 %v661
      %v2305 = vunpack.c.l.b16 %v662
      %v2306 = vunpack.c.h.b16 %v662
      %v2307 = vunpack.c.l.b16 %v663
      %v2308 = vunpack.c.h.b16 %v663
      %v2309 = vunpack.c.l.b16 %v664
      %v2310 = vunpack.c.h.b16 %v664
      %v2311 = vunpack.c.l.b16 %v665
      %v2312 = vunpack.c.h.b16 %v665
      %v2313 = vunpack.c.l.b16 %v666
      %v2314 = vunpack.c.h.b16 %v666
      %v2315 = vunpack.c.l.b16 %v667
      %v2316 = vunpack.c.h.b16 %v667
      %v2317 = vunpack.c.l.b16 %v668
      %v2318 = vunpack.c.h.b16 %v668
      %v2319 = vunpack.c.l.b16 %v669
      %v2320 = vunpack.c.h.b16 %v669
      %v2321 = vunpack.c.l.b16 %v670
      %v2322 = vunpack.c.h.b16 %v670
      %v2323 = vunpack.c.l.b16 %v671
      %v2324 = vunpack.c.h.b16 %v671
      %v2325 = vunpack.c.l.b16 %v672
      %v2326 = vunpack.c.h.b16 %v672
      %v2327 = vunpack.c.l.b16 %v673
      %v2328 = vunpack.c.h.b16 %v673
      %v2329 = vunpack.c.l.b16 %v674
      %v2330 = vunpack.c.h.b16 %v674
      %v2331 = vunpack.c.l.b16 %v675
      %v2332 = vunpack.c.h.b16 %v675
      %v2333 = vunpack.c.l.b16 %v676
      %v2334 = vunpack.c.h.b16 %v676
      %v2335 = vunpack.c.l.b16 %v677
      %v2336 = vunpack.c.h.b16 %v677
      %v2337 = vunpack.c.l.b16 %v678
      %v2338 = vunpack.c.h.b16 %v678
      %v2339 = vunpack.c.l.b16 %v679
      %v2340 = vunpack.c.h.b16 %v679
      %v2341 = vunpack.c.l.b16 %v680
      %v2342 = vunpack.c.h.b16 %v680
      %v2343 = vunpack.c.l.b16 %v681
      %v2344 = vunpack.c.h.b16 %v681
      %v2345 = vunpack.c.l.b16 %v682
      %v2346 = vunpack.c.h.b16 %v682
      %v2347 = vunpack.c.l.b16 %v683
      %v2348 = vunpack.c.h.b16 %v683
      %v2349 = vunpack.c.l.b16 %v684
      %v2350 = vunpack.c.h.b16 %v684
      %v2351 = vunpack.c.l.b16 %v685
      %v2352 = vunpack.c.h.b16 %v685
      %v2353 = vunpack.c.l.b16 %v686
      %v2354 = vunpack.c.h.b16 %v686
      %v2355 = vunpack.c.l.b16 %v687
      %v2356 = vunpack.c.h.b16 %v687
      %v2357 = vunpack.c.l.b16 %v688
      %v2358 = vunpack.c.h.b16 %v688
      %v2359 = vunpack.c.l.b16 %v689
      %v2360 = vunpack.c.h.b16 %v689
      %v2361 = vunpack.c.l.b16 %v690
      %v2362 = vunpack.c.h.b16 %v690
      %v2363 = vunpack.c.l.b16 %v691
      %v2364 = vunpack.c.h.b16 %v691
      %v2365 = vunpack.c.l.b16 %v692
      %v2366 = vunpack.c.h.b16 %v692
      %v2367 = vunpack.c.l.b16 %v693
      %v2368 = vunpack.c.h.b16 %v693
      %v2369 = vunpack.c.l.b16 %v694
      %v2370 = vunpack.c.h.b16 %v694
      %v2371 = vunpack.c.l.b16 %v695
      %v2372 = vunpack.c.h.b16 %v695
      %v2373 = vunpack.c.l.b16 %v696
      %v2374 = vunpack.c.h.b16 %v696
      %v2375 = vunpack.c.l.b16 %v697
      %v2376 = vunpack.c.h.b16 %v697
      %v2377 = vunpack.c.l.b16 %v698
      %v2378 = vunpack.c.h.b16 %v698
      %v2379 = vunpack.c.l.b16 %v699
      %v2380 = vunpack.c.h.b16 %v699
      %v2381 = vunpack.c.l.b16 %v700
      %v2382 = vunpack.c.h.b16 %v700
      %v2383 = vunpack.c.l.b16 %v701
      %v2384 = vunpack.c.h.b16 %v701
      %v2385 = vunpack.c.l.b16 %v702
      %v2386 = vunpack.c.h.b16 %v702
      %v2387 = vunpack.c.l.b16 %v703
      %v2388 = vunpack.c.h.b16 %v703
      %v2389 = vunpack.c.l.b16 %v704
      %v2390 = vunpack.c.h.b16 %v704
      %v2391 = vunpack.c.l.b16 %v705
      %v2392 = vunpack.c.h.b16 %v705
      %v2393 = vunpack.c.l.b16 %v706
      %v2394 = vunpack.c.h.b16 %v706
      %v2395 = vunpack.c.l.b16 %v707
      %v2396 = vunpack.c.h.b16 %v707
      %v2397 = vunpack.c.l.b16 %v708
      %v2398 = vunpack.c.h.b16 %v708
      %v2399 = vunpack.c.l.b16 %v709
      %v2400 = vunpack.c.h.b16 %v709
      %v2401 = vunpack.c.l.b16 %v710
      %v2402 = vunpack.c.h.b16 %v710
      %v2403 = vunpack.c.l.b16 %v711
      %v2404 = vunpack.c.h.b16 %v711
      %v2405 = vunpack.c.l.b16 %v712
      %v2406 = vunpack.c.h.b16 %v712
      %v2407 = vunpack.c.l.b16 %v713
      %v2408 = vunpack.c.h.b16 %v713
      %v2409 = vunpack.c.l.b16 %v714
      %v2410 = vunpack.c.h.b16 %v714
      %v2411 = vunpack.c.l.b16 %v715
      %v2412 = vunpack.c.h.b16 %v715
      %v2413 = vunpack.c.l.b16 %v716
      %v2414 = vunpack.c.h.b16 %v716
      %v2415 = vunpack.c.l.b16 %v717
      %v2416 = vunpack.c.h.b16 %v717
      %v2417 = vunpack.c.l.b16 %v718
      %v2418 = vunpack.c.h.b16 %v718
      %v2419 = vunpack.c.l.b16 %v719
      %v2420 = vunpack.c.h.b16 %v719
      %v2421 = vunpack.c.l.b16 %v720
      %v2422 = vunpack.c.h.b16 %v720
      %v2423 = vunpack.c.l.b16 %v721
      %v2424 = vunpack.c.h.b16 %v721
      %v2425 = vunpack.c.l.b16 %v722
      %v2426 = vunpack.c.h.b16 %v722
      %v2427 = vunpack.c.l.b16 %v723
      %v2428 = vunpack.c.h.b16 %v723
      %v2429 = vunpack.c.l.b16 %v724
      %v2430 = vunpack.c.h.b16 %v724
      %v2431 = vunpack.c.l.b16 %v725
      %v2432 = vunpack.c.h.b16 %v725
      %v2433 = vunpack.c.l.b16 %v726
      %v2434 = vunpack.c.h.b16 %v726
      %v2435 = vunpack.c.l.b16 %v727
      %v2436 = vunpack.c.h.b16 %v727
      %v2437 = vunpack.c.l.b16 %v728
      %v2438 = vunpack.c.h.b16 %v728
      %v2439 = vunpack.c.l.b16 %v729
      %v2440 = vunpack.c.h.b16 %v729
      %v2441 = vunpack.c.l.b16 %v730
      %v2442 = vunpack.c.h.b16 %v730
      %v2443 = vunpack.c.l.b16 %v731
      %v2444 = vunpack.c.h.b16 %v731
      %v2445 = vunpack.c.l.b16 %v732
      %v2446 = vunpack.c.h.b16 %v732
      %v2447 = vunpack.c.l.b16 %v733
      %v2448 = vunpack.c.h.b16 %v733
      %v2449 = vunpack.c.l.b16 %v734
      %v2450 = vunpack.c.h.b16 %v734
      %v2451 = vunpack.c.l.b16 %v735
      %v2452 = vunpack.c.h.b16 %v735
      %v2453 = vunpack.c.l.b16 %v736
      %v2454 = vunpack.c.h.b16 %v736
      %v2455 = vunpack.c.l.b16 %v737
      %v2456 = vunpack.c.h.b16 %v737
      %v2457 = vunpack.c.l.b16 %v738
      %v2458 = vunpack.c.h.b16 %v738
      %v2459 = vunpack.c.l.b16 %v739
      %v2460 = vunpack.c.h.b16 %v739
      %v2461 = vunpack.c.l.b16 %v740
      %v2462 = vunpack.c.h.b16 %v740
      %v2463 = vunpack.c.l.b16 %v741
      %v2464 = vunpack.c.h.b16 %v741
      %v2465 = vunpack.c.l.b16 %v742
      %v2466 = vunpack.c.h.b16 %v742
      %v2467 = vunpack.c.l.b16 %v743
      %v2468 = vunpack.c.h.b16 %v743
      %v2469 = vunpack.c.l.b16 %v744
      %v2470 = vunpack.c.h.b16 %v744
      %v2471 = vpack.c.b16 %v2283, %v2279
      %v2472 = vpack.c.b16 %v2284, %v2280
      %v2473 = vpack.c.b16 %v2285, %v2281
      %v2474 = vpack.c.b16 %v2286, %v2282
      %v2475 = vpack.c.b16 %v2291, %v2287
      %v2476 = vpack.c.b16 %v2292, %v2288
      %v2477 = vpack.c.b16 %v2293, %v2289
      %v2478 = vpack.c.b16 %v2294, %v2290
      %v2479 = vpack.c.b16 %v2299, %v2295
      %v2480 = vpack.c.b16 %v2300, %v2296
      %v2481 = vpack.c.b16 %v2301, %v2297
      %v2482 = vpack.c.b16 %v2302, %v2298
      %v2483 = vpack.c.b16 %v2307, %v2303
      %v2484 = vpack.c.b16 %v2308, %v2304
      %v2485 = vpack.c.b16 %v2309, %v2305
      %v2486 = vpack.c.b16 %v2310, %v2306
      %v2487 = vpack.c.b16 %v2315, %v2311
      %v2488 = vpack.c.b16 %v2316, %v2312
      %v2489 = vpack.c.b16 %v2317, %v2313
      %v2490 = vpack.c.b16 %v2318, %v2314
      %v2491 = vpack.c.b16 %v2323, %v2319
      %v2492 = vpack.c.b16 %v2324, %v2320
      %v2493 = vpack.c.b16 %v2325, %v2321
      %v2494 = vpack.c.b16 %v2326, %v2322
      %v2495 = vpack.c.b16 %v2331, %v2327
      %v2496 = vpack.c.b16 %v2332, %v2328
      %v2497 = vpack.c.b16 %v2333, %v2329
      %v2498 = vpack.c.b16 %v2334, %v2330
      %v2499 = vpack.c.b16 %v2339, %v2335
      %v2500 = vpack.c.b16 %v2340, %v2336
      %v2501 = vpack.c.b16 %v2341, %v2337
      %v2502 = vpack.c.b16 %v2342, %v2338
      %v2503 = vpack.c.b16 %v2347, %v2343
      %v2504 = vpack.c.b16 %v2348, %v2344
      %v2505 = vpack.c.b16 %v2349, %v2345
      %v2506 = vpack.c.b16 %v2350, %v2346
      %v2507 = vpack.c.b16 %v2355, %v2351
      %v2508 = vpack.c.b16 %v2356, %v2352
      %v2509 = vpack.c.b16 %v2357, %v2353
      %v2510 = vpack.c.b16 %v2358, %v2354
      %v2511 = vpack.c.b16 %v2363, %v2359
      %v2512 = vpack.c.b16 %v2364, %v2360
      %v2513 = vpack.c.b16 %v2365, %v2361
      %v2514 = vpack.c.b16 %v2366, %v2362
      %v2515 = vpack.c.b16 %v2371, %v2367
      %v2516 = vpack.c.b16 %v2372, %v2368
      %v2517 = vpack.c.b16 %v2373, %v2369
      %v2518 = vpack.c.b16 %v2374, %v2370
      %v2519 = vpack.c.b16 %v2379, %v2375
      %v2520 = vpack.c.b16 %v2380, %v2376
      %v2521 = vpack.c.b16 %v2381, %v2377
      %v2522 = vpack.c.b16 %v2382, %v2378
      %v2523 = vpack.c.b16 %v2387, %v2383
      %v2524 = vpack.c.b16 %v2388, %v2384
      %v2525 = vpack.c.b16 %v2389, %v2385
      %v2526 = vpack.c.b16 %v2390, %v2386
      %v2527 = vpack.c.b16 %v2395, %v2391
      %v2528 = vpack.c.b16 %v2396, %v2392
      %v2529 = vpack.c.b16 %v2397, %v2393
      %v2530 = vpack.c.b16 %v2398, %v2394
      %v2531 = vpack.c.b16 %v2403, %v2399
      %v2532 = vpack.c.b16 %v2404, %v2400
      %v2533 = vpack.c.b16 %v2405, %v2401
      %v2534 = vpack.c.b16 %v2406, %v2402
      %v2535 = vpack.c.b16 %v2411, %v2407
      %v2536 = vpack.c.b16 %v2412, %v2408
      %v2537 = vpack.c.b16 %v2413, %v2409
      %v2538 = vpack.c.b16 %v2414, %v2410
      %v2539 = vpack.c.b16 %v2419, %v2415
      %v2540 = vpack.c.b16 %v2420, %v2416
      %v2541 = vpack.c.b16 %v2421, %v2417
      %v2542 = vpack.c.b16 %v2422, %v2418
      %v2543 = vpack.c.b16 %v2427, %v2423
      %v2544 = vpack.c.b16 %v2428, %v2424
      %v2545 = vpack.c.b16 %v2429, %v2425
      %v2546 = vpack.c.b16 %v2430, %v2426
      %v2547 = vpack.c.b16 %v2435, %v2431
      %v2548 = vpack.c.b16 %v2436, %v2432
      %v2549 = vpack.c.b16 %v2437, %v2433
      %v2550 = vpack.c.b16 %v2438, %v2434
      %v2551 = vpack.c.b16 %v2443, %v2439
      %v2552 = vpack.c.b16 %v2444, %v2440
      %v2553 = vpack.c.b16 %v2445, %v2441
      %v2554 = vpack.c.b16 %v2446, %v2442
      %v2555 = vpack.c.b16 %v2451, %v2447
      %v2556 = vpack.c.b16 %v2452, %v2448
      %v2557 = vpack.c.b16 %v2453, %v2449
      %v2558 = vpack.c.b16 %v2454, %v2450
      %v2559 = vpack.c.b16 %v2459, %v2455
      %v2560 = vpack.c.b16 %v2460, %v2456
      %v2561 = vpack.c.b16 %v2461, %v2457
      %v2562 = vpack.c.b16 %v2462, %v2458
      %v2563 = vpack.c.b16 %v2467, %v2463
      %v2564 = vpack.c.b16 %v2468, %v2464
      %v2565 = vpack.c.b16 %v2469, %v2465
      %v2566 = vpack.c.b16 %v2470, %v2466
      %2663 = vmatprep.subr.bf16.mxu0 %v2500
      %2664 = vmatpush1.bf16.msra.mxu0 %v2499
      %2665 = vmatprep.subr.bf16.mxu0 %v2496
      %2666 = vmatpush1.bf16.msra.mxu0 %v2495
      %2667 = vmatprep.subr.bf16.mxu0 %v2492
      %2668 = vmatpush1.bf16.msra.mxu0 %v2491
      %2669 = vmatprep.subr.bf16.mxu0 %v2488
      %2670 = vmatpush1.bf16.msra.mxu0 %v2487
      %2671 = vmatprep.subr.bf16.mxu0 %v2484
      %2672 = vmatpush1.bf16.msra.mxu0 %v2483
      %2673 = vmatprep.subr.bf16.mxu0 %v2480
      %2674 = vmatpush1.bf16.msra.mxu0 %v2479
      %2675 = vmatprep.subr.bf16.mxu0 %v2476
      %2676 = vmatpush1.bf16.msra.mxu0 %v2475
      %2677 = vmatprep.subr.bf16.mxu0 %v2472
      %2678 = vmatpush1.bf16.msra.mxu0 %v2471
      %2679 = vmatprep.subr.bf16.mxu0 %v2532
      %2680 = vmatpush2.bf16.msra.mxu0 %v2531
      %2681 = vmatprep.subr.bf16.mxu0 %v2528
      %2682 = vmatpush2.bf16.msra.mxu0 %v2527
      %2683 = vmatprep.subr.bf16.mxu0 %v2524
      %2684 = vmatpush2.bf16.msra.mxu0 %v2523
      %2685 = vmatprep.subr.bf16.mxu0 %v2520
      %2686 = vmatpush2.bf16.msra.mxu0 %v2519
      %2687 = vmatprep.subr.bf16.mxu0 %v2516
      %2688 = vmatpush2.bf16.msra.mxu0 %v2515
      %2689 = vmatprep.subr.bf16.mxu0 %v2512
      %2690 = vmatpush2.bf16.msra.mxu0 %v2511
      %2691 = vmatprep.subr.bf16.mxu0 %v2508
      %2692 = vmatpush2.bf16.msra.mxu0 %v2507
      %2693 = vmatprep.subr.bf16.mxu0 %v2504
      %2694 = vmatpush2.bf16.msra.mxu0 %v2503
      %2695 = vmatprep.mubr.bf16.mxu0 %v601
      %2696 = vmatmul.mubr.bf16.gmra.mxu0 %v569
      %v2697 = vpop.f32.mrf.mxu0
      %v2698 = vadd.f32 %v1879, %v2697
      %v2699 = vpop.f32.mrf.mxu0
      %v2700 = vadd.f32 %v1881, %v2699
      %v2701 = vpop.f32.mrf.mxu0
      %v2702 = vadd.f32 %v1883, %v2701
      %v2703 = vpop.f32.mrf.mxu0
      %v2704 = vadd.f32 %v1885, %v2703
      %2705 = vmatprep.mubr.bf16.mxu0 %v602
      %2706 = vmatmul.mubr.bf16.gmra.mxu0 %v570
      %v2707 = vpop.f32.mrf.mxu0
      %v2708 = vadd.f32 %v1889, %v2707
      %v2709 = vpop.f32.mrf.mxu0
      %v2710 = vadd.f32 %v1891, %v2709
      %v2711 = vpop.f32.mrf.mxu0
      %v2712 = vadd.f32 %v1893, %v2711
      %v2713 = vpop.f32.mrf.mxu0
      %v2714 = vadd.f32 %v1895, %v2713
      %2715 = vmatprep.mubr.bf16.mxu0 %v603
      %2716 = vmatmul.mubr.bf16.gmra.mxu0 %v571
      %v2717 = vpop.f32.mrf.mxu0
      %v2718 = vadd.f32 %v1899, %v2717
      %v2719 = vpop.f32.mrf.mxu0
      %v2720 = vadd.f32 %v1901, %v2719
      %v2721 = vpop.f32.mrf.mxu0
      %v2722 = vadd.f32 %v1903, %v2721
      %v2723 = vpop.f32.mrf.mxu0
      %v2724 = vadd.f32 %v1905, %v2723
      %2725 = vmatprep.mubr.bf16.mxu0 %v604
      %2726 = vmatmul.mubr.bf16.gmra.mxu0 %v572
      %v2727 = vpop.f32.mrf.mxu0
      %v2728 = vadd.f32 %v1909, %v2727
      %v2729 = vpop.f32.mrf.mxu0
      %v2730 = vadd.f32 %v1911, %v2729
      %v2731 = vpop.f32.mrf.mxu0
      %v2732 = vadd.f32 %v1913, %v2731
      %v2733 = vpop.f32.mrf.mxu0
      %v2734 = vadd.f32 %v1915, %v2733
      %2735 = vmatprep.mubr.bf16.mxu0 %v605
      %2736 = vmatmul.mubr.bf16.gmra.mxu0 %v573
      %v2737 = vpop.f32.mrf.mxu0
      %v2738 = vadd.f32 %v1919, %v2737
      %v2739 = vpop.f32.mrf.mxu0
      %v2740 = vadd.f32 %v1921, %v2739
      %v2741 = vpop.f32.mrf.mxu0
      %v2742 = vadd.f32 %v1923, %v2741
      %v2743 = vpop.f32.mrf.mxu0
      %v2744 = vadd.f32 %v1925, %v2743
      %2745 = vmatprep.mubr.bf16.mxu0 %v606
      %2746 = vmatmul.mubr.bf16.gmra.mxu0 %v574
      %v2747 = vpop.f32.mrf.mxu0
      %v2748 = vadd.f32 %v1929, %v2747
      %v2749 = vpop.f32.mrf.mxu0
      %v2750 = vadd.f32 %v1931, %v2749
      %v2751 = vpop.f32.mrf.mxu0
      %v2752 = vadd.f32 %v1933, %v2751
      %v2753 = vpop.f32.mrf.mxu0
      %v2754 = vadd.f32 %v1935, %v2753
      %2755 = vmatprep.mubr.bf16.mxu0 %v607
      %2756 = vmatmul.mubr.bf16.gmra.mxu0 %v575
      %v2757 = vpop.f32.mrf.mxu0
      %v2758 = vadd.f32 %v1939, %v2757
      %v2759 = vpop.f32.mrf.mxu0
      %v2760 = vadd.f32 %v1941, %v2759
      %v2761 = vpop.f32.mrf.mxu0
      %v2762 = vadd.f32 %v1943, %v2761
      %v2763 = vpop.f32.mrf.mxu0
      %v2764 = vadd.f32 %v1945, %v2763
      %2765 = vmatprep.mubr.bf16.mxu0 %v608
      %2766 = vmatmul.mubr.bf16.gmra.mxu0 %v576
      %v2767 = vpop.f32.mrf.mxu0
      %v2768 = vadd.f32 %v1949, %v2767
      %v2769 = vpop.f32.mrf.mxu0
      %v2770 = vadd.f32 %v1951, %v2769
      %v2771 = vpop.f32.mrf.mxu0
      %v2772 = vadd.f32 %v1953, %v2771
      %v2773 = vpop.f32.mrf.mxu0
      %v2774 = vadd.f32 %v1955, %v2773
      %2775 = vdwg.mxu0
      %2776 = vmatprep.subr.bf16.mxu0 %v2564
      %2777 = vmatpush1.bf16.msra.mxu0 %v2563
      %2778 = vmatprep.subr.bf16.mxu0 %v2560
      %2779 = vmatpush1.bf16.msra.mxu0 %v2559
      %2780 = vmatprep.subr.bf16.mxu0 %v2556
      %2781 = vmatpush1.bf16.msra.mxu0 %v2555
      %2782 = vmatprep.subr.bf16.mxu0 %v2552
      %2783 = vmatpush1.bf16.msra.mxu0 %v2551
      %2784 = vmatprep.subr.bf16.mxu0 %v2548
      %2785 = vmatpush1.bf16.msra.mxu0 %v2547
      %2786 = vmatprep.subr.bf16.mxu0 %v2544
      %2787 = vmatpush1.bf16.msra.mxu0 %v2543
      %2788 = vmatprep.subr.bf16.mxu0 %v2540
      %2789 = vmatpush1.bf16.msra.mxu0 %v2539
      %2790 = vmatprep.subr.bf16.mxu0 %v2536
      %2791 = vmatpush1.bf16.msra.mxu0 %v2535
      %2792 = vmatprep.subr.bf16.mxu0 0
      %2793 = vmatpush2.bf16.msra.mxu0 0
      %2794 = vmatprep.subr.bf16.mxu0 0
      %2795 = vmatpush2.bf16.msra.mxu0 0
      %2796 = vmatprep.subr.bf16.mxu0 0
      %2797 = vmatpush2.bf16.msra.mxu0 0
      %2798 = vmatprep.subr.bf16.mxu0 0
      %2799 = vmatpush2.bf16.msra.mxu0 0
      %2800 = vmatprep.subr.bf16.mxu0 0
      %2801 = vmatpush2.bf16.msra.mxu0 0
      %2802 = vmatprep.subr.bf16.mxu0 0
      %2803 = vmatpush2.bf16.msra.mxu0 0
      %2804 = vmatprep.subr.bf16.mxu0 0
      %2805 = vmatpush2.bf16.msra.mxu0 0
      %2806 = vmatprep.subr.bf16.mxu0 0
      %2807 = vmatpush2.bf16.msra.mxu0 0
      %2808 = vmatprep.mubr.bf16.mxu0 0
      %2809 = vmatmul.mubr.bf16.gmra.mxu0 %v633
      %v2810 = vpop.f32.mrf.mxu0
      %v2811 = vadd.f32 %v2698, %v2810
      %v2812 = vpop.f32.mrf.mxu0
      %v2813 = vadd.f32 %v2700, %v2812
      %v2814 = vpop.f32.mrf.mxu0
      %v2815 = vadd.f32 %v2702, %v2814
      %v2816 = vpop.f32.mrf.mxu0
      %v2817 = vadd.f32 %v2704, %v2816
      %2818 = vmatprep.mubr.bf16.mxu0 0
      %2819 = vmatmul.mubr.bf16.gmra.mxu0 %v634
      %v2820 = vpop.f32.mrf.mxu0
      %v2821 = vadd.f32 %v2708, %v2820
      %v2822 = vpop.f32.mrf.mxu0
      %v2823 = vadd.f32 %v2710, %v2822
      %v2824 = vpop.f32.mrf.mxu0
      %v2825 = vadd.f32 %v2712, %v2824
      %v2826 = vpop.f32.mrf.mxu0
      %v2827 = vadd.f32 %v2714, %v2826
      %2828 = vmatprep.mubr.bf16.mxu0 0
      %2829 = vmatmul.mubr.bf16.gmra.mxu0 %v635
      %v2830 = vpop.f32.mrf.mxu0
      %v2831 = vadd.f32 %v2718, %v2830
      %v2832 = vpop.f32.mrf.mxu0
      %v2833 = vadd.f32 %v2720, %v2832
      %v2834 = vpop.f32.mrf.mxu0
      %v2835 = vadd.f32 %v2722, %v2834
      %v2836 = vpop.f32.mrf.mxu0
      %v2837 = vadd.f32 %v2724, %v2836
      %2838 = vmatprep.mubr.bf16.mxu0 0
      %2839 = vmatmul.mubr.bf16.gmra.mxu0 %v636
      %v2840 = vpop.f32.mrf.mxu0
      %v2841 = vadd.f32 %v2728, %v2840
      %v2842 = vpop.f32.mrf.mxu0
      %v2843 = vadd.f32 %v2730, %v2842
      %v2844 = vpop.f32.mrf.mxu0
      %v2845 = vadd.f32 %v2732, %v2844
      %v2846 = vpop.f32.mrf.mxu0
      %v2847 = vadd.f32 %v2734, %v2846
      %2848 = vmatprep.mubr.bf16.mxu0 0
      %2849 = vmatmul.mubr.bf16.gmra.mxu0 %v637
      %v2850 = vpop.f32.mrf.mxu0
      %v2851 = vadd.f32 %v2738, %v2850
      %v2852 = vpop.f32.mrf.mxu0
      %v2853 = vadd.f32 %v2740, %v2852
      %v2854 = vpop.f32.mrf.mxu0
      %v2855 = vadd.f32 %v2742, %v2854
      %v2856 = vpop.f32.mrf.mxu0
      %v2857 = vadd.f32 %v2744, %v2856
      %2858 = vmatprep.mubr.bf16.mxu0 0
      %2859 = vmatmul.mubr.bf16.gmra.mxu0 %v638
      %v2860 = vpop.f32.mrf.mxu0
      %v2861 = vadd.f32 %v2748, %v2860
      %v2862 = vpop.f32.mrf.mxu0
      %v2863 = vadd.f32 %v2750, %v2862
      %v2864 = vpop.f32.mrf.mxu0
      %v2865 = vadd.f32 %v2752, %v2864
      %v2866 = vpop.f32.mrf.mxu0
      %v2867 = vadd.f32 %v2754, %v2866
      %2868 = vmatprep.mubr.bf16.mxu0 0
      %2869 = vmatmul.mubr.bf16.gmra.mxu0 %v639
      %v2870 = vpop.f32.mrf.mxu0
      %v2871 = vadd.f32 %v2758, %v2870
      %v2872 = vpop.f32.mrf.mxu0
      %v2873 = vadd.f32 %v2760, %v2872
      %v2874 = vpop.f32.mrf.mxu0
      %v2875 = vadd.f32 %v2762, %v2874
      %v2876 = vpop.f32.mrf.mxu0
      %v2877 = vadd.f32 %v2764, %v2876
      %2878 = vmatprep.mubr.bf16.mxu0 0
      %2879 = vmatmul.mubr.bf16.gmra.mxu0 %v640
      %v2880 = vpop.f32.mrf.mxu0
      %v2881 = vadd.f32 %v2768, %v2880
      %v2882 = vpop.f32.mrf.mxu0
      %v2883 = vadd.f32 %v2770, %v2882
      %v2884 = vpop.f32.mrf.mxu0
      %v2885 = vadd.f32 %v2772, %v2884
      %v2886 = vpop.f32.mrf.mxu0
      %v2887 = vadd.f32 %v2774, %v2886
      %2888 = vdwg.mxu0
      %2889 = vmatprep.subr.bf16.mxu0 %v2502
      %2890 = vmatpush1.bf16.msra.mxu0 %v2501
      %2891 = vmatprep.subr.bf16.mxu0 %v2498
      %2892 = vmatpush1.bf16.msra.mxu0 %v2497
      %2893 = vmatprep.subr.bf16.mxu0 %v2494
      %2894 = vmatpush1.bf16.msra.mxu0 %v2493
      %2895 = vmatprep.subr.bf16.mxu0 %v2490
      %2896 = vmatpush1.bf16.msra.mxu0 %v2489
      %2897 = vmatprep.subr.bf16.mxu0 %v2486
      %2898 = vmatpush1.bf16.msra.mxu0 %v2485
      %2899 = vmatprep.subr.bf16.mxu0 %v2482
      %2900 = vmatpush1.bf16.msra.mxu0 %v2481
      %2901 = vmatprep.subr.bf16.mxu0 %v2478
      %2902 = vmatpush1.bf16.msra.mxu0 %v2477
      %2903 = vmatprep.subr.bf16.mxu0 %v2474
      %2904 = vmatpush1.bf16.msra.mxu0 %v2473
      %2905 = vmatprep.subr.bf16.mxu0 %v2534
      %2906 = vmatpush2.bf16.msra.mxu0 %v2533
      %2907 = vmatprep.subr.bf16.mxu0 %v2530
      %2908 = vmatpush2.bf16.msra.mxu0 %v2529
      %2909 = vmatprep.subr.bf16.mxu0 %v2526
      %2910 = vmatpush2.bf16.msra.mxu0 %v2525
      %2911 = vmatprep.subr.bf16.mxu0 %v2522
      %2912 = vmatpush2.bf16.msra.mxu0 %v2521
      %2913 = vmatprep.subr.bf16.mxu0 %v2518
      %2914 = vmatpush2.bf16.msra.mxu0 %v2517
      %2915 = vmatprep.subr.bf16.mxu0 %v2514
      %2916 = vmatpush2.bf16.msra.mxu0 %v2513
      %2917 = vmatprep.subr.bf16.mxu0 %v2510
      %2918 = vmatpush2.bf16.msra.mxu0 %v2509
      %2919 = vmatprep.subr.bf16.mxu0 %v2506
      %2920 = vmatpush2.bf16.msra.mxu0 %v2505
      %2921 = vmatprep.mubr.bf16.mxu0 %v601
      %2922 = vmatmul.mubr.bf16.gmra.mxu0 %v569
      %v2923 = vpop.f32.mrf.mxu0
      %v2924 = vadd.f32 %v2105, %v2923
      %v2925 = vpop.f32.mrf.mxu0
      %v2926 = vadd.f32 %v2107, %v2925
      %v2927 = vpop.f32.mrf.mxu0
      %v2928 = vadd.f32 %v2109, %v2927
      %v2929 = vpop.f32.mrf.mxu0
      %v2930 = vadd.f32 %v2111, %v2929
      %2931 = vmatprep.mubr.bf16.mxu0 %v602
      %2932 = vmatmul.mubr.bf16.gmra.mxu0 %v570
      %v2933 = vpop.f32.mrf.mxu0
      %v2934 = vadd.f32 %v2115, %v2933
      %v2935 = vpop.f32.mrf.mxu0
      %v2936 = vadd.f32 %v2117, %v2935
      %v2937 = vpop.f32.mrf.mxu0
      %v2938 = vadd.f32 %v2119, %v2937
      %v2939 = vpop.f32.mrf.mxu0
      %v2940 = vadd.f32 %v2121, %v2939
      %2941 = vmatprep.mubr.bf16.mxu0 %v603
      %2942 = vmatmul.mubr.bf16.gmra.mxu0 %v571
      %v2943 = vpop.f32.mrf.mxu0
      %v2944 = vadd.f32 %v2125, %v2943
      %v2945 = vpop.f32.mrf.mxu0
      %v2946 = vadd.f32 %v2127, %v2945
      %v2947 = vpop.f32.mrf.mxu0
      %v2948 = vadd.f32 %v2129, %v2947
      %v2949 = vpop.f32.mrf.mxu0
      %v2950 = vadd.f32 %v2131, %v2949
      %2951 = vmatprep.mubr.bf16.mxu0 %v604
      %2952 = vmatmul.mubr.bf16.gmra.mxu0 %v572
      %v2953 = vpop.f32.mrf.mxu0
      %v2954 = vadd.f32 %v2135, %v2953
      %v2955 = vpop.f32.mrf.mxu0
      %v2956 = vadd.f32 %v2137, %v2955
      %v2957 = vpop.f32.mrf.mxu0
      %v2958 = vadd.f32 %v2139, %v2957
      %v2959 = vpop.f32.mrf.mxu0
      %v2960 = vadd.f32 %v2141, %v2959
      %2961 = vmatprep.mubr.bf16.mxu0 %v605
      %2962 = vmatmul.mubr.bf16.gmra.mxu0 %v573
      %v2963 = vpop.f32.mrf.mxu0
      %v2964 = vadd.f32 %v2145, %v2963
      %v2965 = vpop.f32.mrf.mxu0
      %v2966 = vadd.f32 %v2147, %v2965
      %v2967 = vpop.f32.mrf.mxu0
      %v2968 = vadd.f32 %v2149, %v2967
      %v2969 = vpop.f32.mrf.mxu0
      %v2970 = vadd.f32 %v2151, %v2969
      %2971 = vmatprep.mubr.bf16.mxu0 %v606
      %2972 = vmatmul.mubr.bf16.gmra.mxu0 %v574
      %v2973 = vpop.f32.mrf.mxu0
      %v2974 = vadd.f32 %v2155, %v2973
      %v2975 = vpop.f32.mrf.mxu0
      %v2976 = vadd.f32 %v2157, %v2975
      %v2977 = vpop.f32.mrf.mxu0
      %v2978 = vadd.f32 %v2159, %v2977
      %v2979 = vpop.f32.mrf.mxu0
      %v2980 = vadd.f32 %v2161, %v2979
      %2981 = vmatprep.mubr.bf16.mxu0 %v607
      %2982 = vmatmul.mubr.bf16.gmra.mxu0 %v575
      %v2983 = vpop.f32.mrf.mxu0
      %v2984 = vadd.f32 %v2165, %v2983
      %v2985 = vpop.f32.mrf.mxu0
      %v2986 = vadd.f32 %v2167, %v2985
      %v2987 = vpop.f32.mrf.mxu0
      %v2988 = vadd.f32 %v2169, %v2987
      %v2989 = vpop.f32.mrf.mxu0
      %v2990 = vadd.f32 %v2171, %v2989
      %2991 = vmatprep.mubr.bf16.mxu0 %v608
      %2992 = vmatmul.mubr.bf16.gmra.mxu0 %v576
      %v2993 = vpop.f32.mrf.mxu0
      %v2994 = vadd.f32 %v2175, %v2993
      %v2995 = vpop.f32.mrf.mxu0
      %v2996 = vadd.f32 %v2177, %v2995
      %v2997 = vpop.f32.mrf.mxu0
      %v2998 = vadd.f32 %v2179, %v2997
      %v2999 = vpop.f32.mrf.mxu0
      %v3000 = vadd.f32 %v2181, %v2999
      %3001 = vdwg.mxu0
      %3002 = vmatprep.subr.bf16.mxu0 %v2566
      %3003 = vmatpush1.bf16.msra.mxu0 %v2565
      %3004 = vmatprep.subr.bf16.mxu0 %v2562
      %3005 = vmatpush1.bf16.msra.mxu0 %v2561
      %3006 = vmatprep.subr.bf16.mxu0 %v2558
      %3007 = vmatpush1.bf16.msra.mxu0 %v2557
      %3008 = vmatprep.subr.bf16.mxu0 %v2554
      %3009 = vmatpush1.bf16.msra.mxu0 %v2553
      %3010 = vmatprep.subr.bf16.mxu0 %v2550
      %3011 = vmatpush1.bf16.msra.mxu0 %v2549
      %3012 = vmatprep.subr.bf16.mxu0 %v2546
      %3013 = vmatpush1.bf16.msra.mxu0 %v2545
      %3014 = vmatprep.subr.bf16.mxu0 %v2542
      %3015 = vmatpush1.bf16.msra.mxu0 %v2541
      %3016 = vmatprep.subr.bf16.mxu0 %v2538
      %3017 = vmatpush1.bf16.msra.mxu0 %v2537
      %3018 = vmatprep.subr.bf16.mxu0 0
      %3019 = vmatpush2.bf16.msra.mxu0 0
      %3020 = vmatprep.subr.bf16.mxu0 0
      %3021 = vmatpush2.bf16.msra.mxu0 0
      %3022 = vmatprep.subr.bf16.mxu0 0
      %3023 = vmatpush2.bf16.msra.mxu0 0
      %3024 = vmatprep.subr.bf16.mxu0 0
      %3025 = vmatpush2.bf16.msra.mxu0 0
      %3026 = vmatprep.subr.bf16.mxu0 0
      %3027 = vmatpush2.bf16.msra.mxu0 0
      %3028 = vmatprep.subr.bf16.mxu0 0
      %3029 = vmatpush2.bf16.msra.mxu0 0
      %3030 = vmatprep.subr.bf16.mxu0 0
      %3031 = vmatpush2.bf16.msra.mxu0 0
      %3032 = vmatprep.subr.bf16.mxu0 0
      %3033 = vmatpush2.bf16.msra.mxu0 0
      %3034 = vmatprep.mubr.bf16.mxu0 0
      %3035 = vmatmul.mubr.bf16.gmra.mxu0 %v633
      %v3036 = vpop.f32.mrf.mxu0
      %v3037 = vadd.f32 %v2924, %v3036
      %v3038 = vpop.f32.mrf.mxu0
      %v3039 = vadd.f32 %v2926, %v3038
      %v3040 = vpop.f32.mrf.mxu0
      %v3041 = vadd.f32 %v2928, %v3040
      %v3042 = vpop.f32.mrf.mxu0
      %v3043 = vadd.f32 %v2930, %v3042
      %3044 = vmatprep.mubr.bf16.mxu0 0
      %3045 = vmatmul.mubr.bf16.gmra.mxu0 %v634
      %v3046 = vpop.f32.mrf.mxu0
      %v3047 = vadd.f32 %v2934, %v3046
      %v3048 = vpop.f32.mrf.mxu0
      %v3049 = vadd.f32 %v2936, %v3048
      %v3050 = vpop.f32.mrf.mxu0
      %v3051 = vadd.f32 %v2938, %v3050
      %v3052 = vpop.f32.mrf.mxu0
      %v3053 = vadd.f32 %v2940, %v3052
      %3054 = vmatprep.mubr.bf16.mxu0 0
      %3055 = vmatmul.mubr.bf16.gmra.mxu0 %v635
      %v3056 = vpop.f32.mrf.mxu0
      %v3057 = vadd.f32 %v2944, %v3056
      %v3058 = vpop.f32.mrf.mxu0
      %v3059 = vadd.f32 %v2946, %v3058
      %v3060 = vpop.f32.mrf.mxu0
      %v3061 = vadd.f32 %v2948, %v3060
      %v3062 = vpop.f32.mrf.mxu0
      %v3063 = vadd.f32 %v2950, %v3062
      %3064 = vmatprep.mubr.bf16.mxu0 0
      %3065 = vmatmul.mubr.bf16.gmra.mxu0 %v636
      %v3066 = vpop.f32.mrf.mxu0
      %v3067 = vadd.f32 %v2954, %v3066
      %v3068 = vpop.f32.mrf.mxu0
      %v3069 = vadd.f32 %v2956, %v3068
      %v3070 = vpop.f32.mrf.mxu0
      %v3071 = vadd.f32 %v2958, %v3070
      %v3072 = vpop.f32.mrf.mxu0
      %v3073 = vadd.f32 %v2960, %v3072
      %3074 = vmatprep.mubr.bf16.mxu0 0
      %3075 = vmatmul.mubr.bf16.gmra.mxu0 %v637
      %v3076 = vpop.f32.mrf.mxu0
      %v3077 = vadd.f32 %v2964, %v3076
      %v3078 = vpop.f32.mrf.mxu0
      %v3079 = vadd.f32 %v2966, %v3078
      %v3080 = vpop.f32.mrf.mxu0
      %v3081 = vadd.f32 %v2968, %v3080
      %v3082 = vpop.f32.mrf.mxu0
      %v3083 = vadd.f32 %v2970, %v3082
      %3084 = vmatprep.mubr.bf16.mxu0 0
      %3085 = vmatmul.mubr.bf16.gmra.mxu0 %v638
      %v3086 = vpop.f32.mrf.mxu0
      %v3087 = vadd.f32 %v2974, %v3086
      %v3088 = vpop.f32.mrf.mxu0
      %v3089 = vadd.f32 %v2976, %v3088
      %v3090 = vpop.f32.mrf.mxu0
      %v3091 = vadd.f32 %v2978, %v3090
      %v3092 = vpop.f32.mrf.mxu0
      %v3093 = vadd.f32 %v2980, %v3092
      %3094 = vmatprep.mubr.bf16.mxu0 0
      %3095 = vmatmul.mubr.bf16.gmra.mxu0 %v639
      %v3096 = vpop.f32.mrf.mxu0
      %v3097 = vadd.f32 %v2984, %v3096
      %v3098 = vpop.f32.mrf.mxu0
      %v3099 = vadd.f32 %v2986, %v3098
      %v3100 = vpop.f32.mrf.mxu0
      %v3101 = vadd.f32 %v2988, %v3100
      %v3102 = vpop.f32.mrf.mxu0
      %v3103 = vadd.f32 %v2990, %v3102
      %3104 = vmatprep.mubr.bf16.mxu0 0
      %3105 = vmatmul.mubr.bf16.gmra.mxu0 %v640
      %v3106 = vpop.f32.mrf.mxu0
      %v3107 = vadd.f32 %v2994, %v3106
      %v3108 = vpop.f32.mrf.mxu0
      %v3109 = vadd.f32 %v2996, %v3108
      %v3110 = vpop.f32.mrf.mxu0
      %v3111 = vadd.f32 %v2998, %v3110
      %v3112 = vpop.f32.mrf.mxu0
      %v3113 = vadd.f32 %v3000, %v3112
      %3114 = vdwg.mxu0
      %s3115 = scalar_lea.vmem %s222, 24
      %v3116 = vld [vmem:[%s3115] sm:$0xf]
      %v3117 = vld [vmem:[%s3115 + $0x4] sm:$0xf]
      %v3118 = vld [vmem:[%s3115 + $0xc] sm:$0xf]
      %v3119 = vld [vmem:[%s3115 + $0x10] sm:$0xf]
      %v3120 = vld [vmem:[%s3115 + $0x18] sm:$0xf]
      %v3121 = vld [vmem:[%s3115 + $0x1c] sm:$0xf]
      %v3122 = vld [vmem:[%s3115 + $0x24] sm:$0xf]
      %v3123 = vld [vmem:[%s3115 + $0x28] sm:$0xf]
      %v3124 = vld [vmem:[%s3115 + $0x30] sm:$0xf]
      %v3125 = vld [vmem:[%s3115 + $0x34] sm:$0xf]
      %v3126 = vld [vmem:[%s3115 + $0x3c] sm:$0xf]
      %v3127 = vld [vmem:[%s3115 + $0x40] sm:$0xf]
      %v3128 = vld [vmem:[%s3115 + $0x48] sm:$0xf]
      %v3129 = vld [vmem:[%s3115 + $0x4c] sm:$0xf]
      %v3130 = vld [vmem:[%s3115 + $0x54] sm:$0xf]
      %v3131 = vld [vmem:[%s3115 + $0x58] sm:$0xf]
      %v3132 = vld [vmem:[%s3115 + $0x8] sm:$0x1]
      %v3133 = vld [vmem:[%s3115 + $0x14] sm:$0x1]
      %v3134 = vld [vmem:[%s3115 + $0x20] sm:$0x1]
      %v3135 = vld [vmem:[%s3115 + $0x2c] sm:$0x1]
      %v3136 = vld [vmem:[%s3115 + $0x38] sm:$0x1]
      %v3137 = vld [vmem:[%s3115 + $0x44] sm:$0x1]
      %v3138 = vld [vmem:[%s3115 + $0x50] sm:$0x1]
      %v3139 = vld [vmem:[%s3115 + $0x5c] sm:$0x1]
      %v3141 = vshrl.u32 %v3116, 16
      %v3143 = vrot.slane %v3141, 4
      %v3144 = vshll.u32 %v3116, 16
      %v3146 = vrot.slane %v3144, 5
      %v3147 = vor.u32 %v3143, %v3146
      %v3148 = vrot.slane %v3147, 4
      %v3150 = vshll.u32 %v3117, 16
      %v3152 = vrot.slane %v3150, 5
      %v3153 = vsel %vm261, %v3148, %v3152
      %v3154 = vshrl.u32 %v3117, 16
      %v3156 = vrot.slane %v3154, 4
      %v3157 = vor.u32 %v3156, %v3152
      %v3158 = vrot.slane %v3157, 4
      %v3160 = vshll.u32 %v3132, 16
      %v3162 = vrot.slane %v3160, 5
      %v3163 = vsel %vm261, %v3158, %v3162
      %v3165 = vshrl.u32 %v3118, 16
      %v3167 = vrot.slane %v3165, 4
      %v3168 = vshll.u32 %v3118, 16
      %v3170 = vrot.slane %v3168, 5
      %v3171 = vor.u32 %v3167, %v3170
      %v3172 = vrot.slane %v3171, 4
      %v3174 = vshll.u32 %v3119, 16
      %v3176 = vrot.slane %v3174, 5
      %v3177 = vsel %vm261, %v3172, %v3176
      %v3178 = vshrl.u32 %v3119, 16
      %v3180 = vrot.slane %v3178, 4
      %v3181 = vor.u32 %v3180, %v3176
      %v3182 = vrot.slane %v3181, 4
      %v3184 = vshll.u32 %v3133, 16
      %v3186 = vrot.slane %v3184, 5
      %v3187 = vsel %vm261, %v3182, %v3186
      %v3189 = vshrl.u32 %v3120, 16
      %v3191 = vrot.slane %v3189, 4
      %v3192 = vshll.u32 %v3120, 16
      %v3194 = vrot.slane %v3192, 5
      %v3195 = vor.u32 %v3191, %v3194
      %v3196 = vrot.slane %v3195, 4
      %v3198 = vshll.u32 %v3121, 16
      %v3200 = vrot.slane %v3198, 5
      %v3201 = vsel %vm261, %v3196, %v3200
      %v3202 = vshrl.u32 %v3121, 16
      %v3204 = vrot.slane %v3202, 4
      %v3205 = vor.u32 %v3204, %v3200
      %v3206 = vrot.slane %v3205, 4
      %v3208 = vshll.u32 %v3134, 16
      %v3210 = vrot.slane %v3208, 5
      %v3211 = vsel %vm261, %v3206, %v3210
      %v3213 = vshrl.u32 %v3122, 16
      %v3215 = vrot.slane %v3213, 4
      %v3216 = vshll.u32 %v3122, 16
      %v3218 = vrot.slane %v3216, 5
      %v3219 = vor.u32 %v3215, %v3218
      %v3220 = vrot.slane %v3219, 4
      %v3222 = vshll.u32 %v3123, 16
      %v3224 = vrot.slane %v3222, 5
      %v3225 = vsel %vm261, %v3220, %v3224
      %v3226 = vshrl.u32 %v3123, 16
      %v3228 = vrot.slane %v3226, 4
      %v3229 = vor.u32 %v3228, %v3224
      %v3230 = vrot.slane %v3229, 4
      %v3232 = vshll.u32 %v3135, 16
      %v3234 = vrot.slane %v3232, 5
      %v3235 = vsel %vm261, %v3230, %v3234
      %v3237 = vshrl.u32 %v3124, 16
      %v3239 = vrot.slane %v3237, 4
      %v3240 = vshll.u32 %v3124, 16
      %v3242 = vrot.slane %v3240, 5
      %v3243 = vor.u32 %v3239, %v3242
      %v3244 = vrot.slane %v3243, 4
      %v3246 = vshll.u32 %v3125, 16
      %v3248 = vrot.slane %v3246, 5
      %v3249 = vsel %vm261, %v3244, %v3248
      %v3250 = vshrl.u32 %v3125, 16
      %v3252 = vrot.slane %v3250, 4
      %v3253 = vor.u32 %v3252, %v3248
      %v3254 = vrot.slane %v3253, 4
      %v3256 = vshll.u32 %v3136, 16
      %v3258 = vrot.slane %v3256, 5
      %v3259 = vsel %vm261, %v3254, %v3258
      %v3261 = vshrl.u32 %v3126, 16
      %v3263 = vrot.slane %v3261, 4
      %v3264 = vshll.u32 %v3126, 16
      %v3266 = vrot.slane %v3264, 5
      %v3267 = vor.u32 %v3263, %v3266
      %v3268 = vrot.slane %v3267, 4
      %v3270 = vshll.u32 %v3127, 16
      %v3272 = vrot.slane %v3270, 5
      %v3273 = vsel %vm261, %v3268, %v3272
      %v3274 = vshrl.u32 %v3127, 16
      %v3276 = vrot.slane %v3274, 4
      %v3277 = vor.u32 %v3276, %v3272
      %v3278 = vrot.slane %v3277, 4
      %v3280 = vshll.u32 %v3137, 16
      %v3282 = vrot.slane %v3280, 5
      %v3283 = vsel %vm261, %v3278, %v3282
      %v3285 = vshrl.u32 %v3128, 16
      %v3287 = vrot.slane %v3285, 4
      %v3288 = vshll.u32 %v3128, 16
      %v3290 = vrot.slane %v3288, 5
      %v3291 = vor.u32 %v3287, %v3290
      %v3292 = vrot.slane %v3291, 4
      %v3294 = vshll.u32 %v3129, 16
      %v3296 = vrot.slane %v3294, 5
      %v3297 = vsel %vm261, %v3292, %v3296
      %v3298 = vshrl.u32 %v3129, 16
      %v3300 = vrot.slane %v3298, 4
      %v3301 = vor.u32 %v3300, %v3296
      %v3302 = vrot.slane %v3301, 4
      %v3304 = vshll.u32 %v3138, 16
      %v3306 = vrot.slane %v3304, 5
      %v3307 = vsel %vm261, %v3302, %v3306
      %v3309 = vshrl.u32 %v3130, 16
      %v3311 = vrot.slane %v3309, 4
      %v3312 = vshll.u32 %v3130, 16
      %v3314 = vrot.slane %v3312, 5
      %v3315 = vor.u32 %v3311, %v3314
      %v3316 = vrot.slane %v3315, 4
      %v3318 = vshll.u32 %v3131, 16
      %v3320 = vrot.slane %v3318, 5
      %v3321 = vsel %vm261, %v3316, %v3320
      %v3322 = vshrl.u32 %v3131, 16
      %v3324 = vrot.slane %v3322, 4
      %v3325 = vor.u32 %v3324, %v3320
      %v3326 = vrot.slane %v3325, 4
      %v3328 = vshll.u32 %v3139, 16
      %v3330 = vrot.slane %v3328, 5
      %v3331 = vsel %vm261, %v3326, %v3330
      %v3332 = vld [vmem:[%s3115] sm:$0xe]
      %v3333 = vld [vmem:[%s3115 + $0xc] sm:$0xe]
      %v3334 = vld [vmem:[%s3115 + $0x18] sm:$0xe]
      %v3335 = vld [vmem:[%s3115 + $0x24] sm:$0xe]
      %v3336 = vld [vmem:[%s3115 + $0x30] sm:$0xe]
      %v3337 = vld [vmem:[%s3115 + $0x3c] sm:$0xe]
      %v3338 = vld [vmem:[%s3115 + $0x48] sm:$0xe]
      %v3339 = vld [vmem:[%s3115 + $0x54] sm:$0xe]
      %v3364 = vrot.slane %v3332, 5
      %v3365 = vrot.slane %v3364, 4
      %v3366 = vrot.slane %v3117, 5
      %v3367 = vsel %vm488, %v3365, %v3366
      %v3368 = vrot.slane %v3366, 4
      %v3369 = vrot.slane %v3132, 5
      %v3370 = vsel %vm488, %v3368, %v3369
      %v3371 = vrot.slane %v3333, 5
      %v3372 = vrot.slane %v3371, 4
      %v3373 = vrot.slane %v3119, 5
      %v3374 = vsel %vm488, %v3372, %v3373
      %v3375 = vrot.slane %v3373, 4
      %v3376 = vrot.slane %v3133, 5
      %v3377 = vsel %vm488, %v3375, %v3376
      %v3378 = vrot.slane %v3334, 5
      %v3379 = vrot.slane %v3378, 4
      %v3380 = vrot.slane %v3121, 5
      %v3381 = vsel %vm488, %v3379, %v3380
      %v3382 = vrot.slane %v3380, 4
      %v3383 = vrot.slane %v3134, 5
      %v3384 = vsel %vm488, %v3382, %v3383
      %v3385 = vrot.slane %v3335, 5
      %v3386 = vrot.slane %v3385, 4
      %v3387 = vrot.slane %v3123, 5
      %v3388 = vsel %vm488, %v3386, %v3387
      %v3389 = vrot.slane %v3387, 4
      %v3390 = vrot.slane %v3135, 5
      %v3391 = vsel %vm488, %v3389, %v3390
      %v3392 = vrot.slane %v3336, 5
      %v3393 = vrot.slane %v3392, 4
      %v3394 = vrot.slane %v3125, 5
      %v3395 = vsel %vm488, %v3393, %v3394
      %v3396 = vrot.slane %v3394, 4
      %v3397 = vrot.slane %v3136, 5
      %v3398 = vsel %vm488, %v3396, %v3397
      %v3399 = vrot.slane %v3337, 5
      %v3400 = vrot.slane %v3399, 4
      %v3401 = vrot.slane %v3127, 5
      %v3402 = vsel %vm488, %v3400, %v3401
      %v3403 = vrot.slane %v3401, 4
      %v3404 = vrot.slane %v3137, 5
      %v3405 = vsel %vm488, %v3403, %v3404
      %v3406 = vrot.slane %v3338, 5
      %v3407 = vrot.slane %v3406, 4
      %v3408 = vrot.slane %v3129, 5
      %v3409 = vsel %vm488, %v3407, %v3408
      %v3410 = vrot.slane %v3408, 4
      %v3411 = vrot.slane %v3138, 5
      %v3412 = vsel %vm488, %v3410, %v3411
      %v3413 = vrot.slane %v3339, 5
      %v3414 = vrot.slane %v3413, 4
      %v3415 = vrot.slane %v3131, 5
      %v3416 = vsel %vm488, %v3414, %v3415
      %v3417 = vrot.slane %v3415, 4
      %v3418 = vrot.slane %v3139, 5
      %v3419 = vsel %vm488, %v3417, %v3418
      %v3428 = vunpack.c.l.b16 %v3116
      %v3429 = vunpack.c.l.b16 %v3117
      %v3430 = vunpack.c.l.b16 %v3118
      %v3431 = vunpack.c.l.b16 %v3119
      %v3432 = vunpack.c.l.b16 %v3120
      %v3433 = vunpack.c.l.b16 %v3121
      %v3434 = vunpack.c.l.b16 %v3122
      %v3435 = vunpack.c.l.b16 %v3123
      %v3436 = vunpack.c.l.b16 %v3124
      %v3437 = vunpack.c.l.b16 %v3125
      %v3438 = vunpack.c.l.b16 %v3126
      %v3439 = vunpack.c.l.b16 %v3127
      %v3440 = vunpack.c.l.b16 %v3128
      %v3441 = vunpack.c.l.b16 %v3129
      %v3442 = vunpack.c.l.b16 %v3130
      %v3443 = vunpack.c.l.b16 %v3131
      %v3444 = vpack.c.b16 %v3429, %v3428
      %v3445 = vpack.c.b16 %v3431, %v3430
      %v3446 = vpack.c.b16 %v3433, %v3432
      %v3447 = vpack.c.b16 %v3435, %v3434
      %v3448 = vpack.c.b16 %v3437, %v3436
      %v3449 = vpack.c.b16 %v3439, %v3438
      %v3450 = vpack.c.b16 %v3441, %v3440
      %v3451 = vpack.c.b16 %v3443, %v3442
      %v3460 = vunpack.c.l.b16 %v3153
      %v3461 = vunpack.c.l.b16 %v3163
      %v3462 = vunpack.c.l.b16 %v3177
      %v3463 = vunpack.c.l.b16 %v3187
      %v3464 = vunpack.c.l.b16 %v3201
      %v3465 = vunpack.c.l.b16 %v3211
      %v3466 = vunpack.c.l.b16 %v3225
      %v3467 = vunpack.c.l.b16 %v3235
      %v3468 = vunpack.c.l.b16 %v3249
      %v3469 = vunpack.c.l.b16 %v3259
      %v3470 = vunpack.c.l.b16 %v3273
      %v3471 = vunpack.c.l.b16 %v3283
      %v3472 = vunpack.c.l.b16 %v3297
      %v3473 = vunpack.c.l.b16 %v3307
      %v3474 = vunpack.c.l.b16 %v3321
      %v3475 = vunpack.c.l.b16 %v3331
      %v3476 = vpack.c.b16 %v3461, %v3460
      %v3477 = vpack.c.b16 %v3463, %v3462
      %v3478 = vpack.c.b16 %v3465, %v3464
      %v3479 = vpack.c.b16 %v3467, %v3466
      %v3480 = vpack.c.b16 %v3469, %v3468
      %v3481 = vpack.c.b16 %v3471, %v3470
      %v3482 = vpack.c.b16 %v3473, %v3472
      %v3483 = vpack.c.b16 %v3475, %v3474
      %v3492 = vunpack.c.l.b16 %v3367
      %v3493 = vunpack.c.l.b16 %v3370
      %v3494 = vunpack.c.l.b16 %v3374
      %v3495 = vunpack.c.l.b16 %v3377
      %v3496 = vunpack.c.l.b16 %v3381
      %v3497 = vunpack.c.l.b16 %v3384
      %v3498 = vunpack.c.l.b16 %v3388
      %v3499 = vunpack.c.l.b16 %v3391
      %v3500 = vunpack.c.l.b16 %v3395
      %v3501 = vunpack.c.l.b16 %v3398
      %v3502 = vunpack.c.l.b16 %v3402
      %v3503 = vunpack.c.l.b16 %v3405
      %v3504 = vunpack.c.l.b16 %v3409
      %v3505 = vunpack.c.l.b16 %v3412
      %v3506 = vunpack.c.l.b16 %v3416
      %v3507 = vunpack.c.l.b16 %v3419
      %v3508 = vpack.c.b16 %v3493, %v3492
      %v3509 = vpack.c.b16 %v3495, %v3494
      %v3510 = vpack.c.b16 %v3497, %v3496
      %v3511 = vpack.c.b16 %v3499, %v3498
      %v3512 = vpack.c.b16 %v3501, %v3500
      %v3513 = vpack.c.b16 %v3503, %v3502
      %v3514 = vpack.c.b16 %v3505, %v3504
      %v3515 = vpack.c.b16 %v3507, %v3506
      %s3524 = scalar_lea.vmem %s1, 1536
      %v3525 = vld [vmem:[%s3524] sm:$0xff]
      %v3526 = vld [vmem:[%s3524 + $0x8] sm:$0xff]
      %v3527 = vld [vmem:[%s3524 + $0x10] sm:$0xff]
      %v3528 = vld [vmem:[%s3524 + $0x18] sm:$0xff]
      %v3529 = vld [vmem:[%s3524 + $0x20] sm:$0xff]
      %v3530 = vld [vmem:[%s3524 + $0x28] sm:$0xff]
      %v3531 = vld [vmem:[%s3524 + $0x30] sm:$0xff]
      %v3532 = vld [vmem:[%s3524 + $0x38] sm:$0xff]
      %v3533 = vld [vmem:[%s3524 + $0x40] sm:$0xff]
      %v3534 = vld [vmem:[%s3524 + $0x48] sm:$0xff]
      %v3535 = vld [vmem:[%s3524 + $0x50] sm:$0xff]
      %v3536 = vld [vmem:[%s3524 + $0x58] sm:$0xff]
      %v3537 = vld [vmem:[%s3524 + $0x60] sm:$0xff]
      %v3538 = vld [vmem:[%s3524 + $0x68] sm:$0xff]
      %v3539 = vld [vmem:[%s3524 + $0x70] sm:$0xff]
      %v3540 = vld [vmem:[%s3524 + $0x78] sm:$0xff]
      %v3541 = vld [vmem:[%s3524 + $0x80] sm:$0xff]
      %v3542 = vld [vmem:[%s3524 + $0x88] sm:$0xff]
      %v3543 = vld [vmem:[%s3524 + $0x90] sm:$0xff]
      %v3544 = vld [vmem:[%s3524 + $0x98] sm:$0xff]
      %v3545 = vld [vmem:[%s3524 + $0xa0] sm:$0xff]
      %v3546 = vld [vmem:[%s3524 + $0xa8] sm:$0xff]
      %v3547 = vld [vmem:[%s3524 + $0xb0] sm:$0xff]
      %v3548 = vld [vmem:[%s3524 + $0xb8] sm:$0xff]
      %v3549 = vld [vmem:[%s3524 + $0xc0] sm:$0xff]
      %v3550 = vld [vmem:[%s3524 + $0xc8] sm:$0xff]
      %v3551 = vld [vmem:[%s3524 + $0xd0] sm:$0xff]
      %v3552 = vld [vmem:[%s3524 + $0xd8] sm:$0xff]
      %v3553 = vld [vmem:[%s3524 + $0xe0] sm:$0xff]
      %v3554 = vld [vmem:[%s3524 + $0xe8] sm:$0xff]
      %v3555 = vld [vmem:[%s3524 + $0xf0] sm:$0xff]
      %v3556 = vld [vmem:[%s3524 + $0xf8] sm:$0xff]
      %v3557 = vld [vmem:[%s3524 + $0x100] sm:$0xff]
      %v3558 = vld [vmem:[%s3524 + $0x108] sm:$0xff]
      %v3559 = vld [vmem:[%s3524 + $0x110] sm:$0xff]
      %v3560 = vld [vmem:[%s3524 + $0x118] sm:$0xff]
      %v3561 = vld [vmem:[%s3524 + $0x120] sm:$0xff]
      %v3562 = vld [vmem:[%s3524 + $0x128] sm:$0xff]
      %v3563 = vld [vmem:[%s3524 + $0x130] sm:$0xff]
      %v3564 = vld [vmem:[%s3524 + $0x138] sm:$0xff]
      %v3565 = vld [vmem:[%s3524 + $0x140] sm:$0xff]
      %v3566 = vld [vmem:[%s3524 + $0x148] sm:$0xff]
      %v3567 = vld [vmem:[%s3524 + $0x150] sm:$0xff]
      %v3568 = vld [vmem:[%s3524 + $0x158] sm:$0xff]
      %v3569 = vld [vmem:[%s3524 + $0x160] sm:$0xff]
      %v3570 = vld [vmem:[%s3524 + $0x168] sm:$0xff]
      %v3571 = vld [vmem:[%s3524 + $0x170] sm:$0xff]
      %v3572 = vld [vmem:[%s3524 + $0x178] sm:$0xff]
      %v3573 = vld [vmem:[%s3524 + $0x180] sm:$0xff]
      %v3574 = vld [vmem:[%s3524 + $0x188] sm:$0xff]
      %v3575 = vld [vmem:[%s3524 + $0x190] sm:$0xff]
      %v3576 = vld [vmem:[%s3524 + $0x198] sm:$0xff]
      %v3577 = vld [vmem:[%s3524 + $0x1a0] sm:$0xff]
      %v3578 = vld [vmem:[%s3524 + $0x1a8] sm:$0xff]
      %v3579 = vld [vmem:[%s3524 + $0x1b0] sm:$0xff]
      %v3580 = vld [vmem:[%s3524 + $0x1b8] sm:$0xff]
      %v3581 = vld [vmem:[%s3524 + $0x1c0] sm:$0xff]
      %v3582 = vld [vmem:[%s3524 + $0x1c8] sm:$0xff]
      %v3583 = vld [vmem:[%s3524 + $0x1d0] sm:$0xff]
      %v3584 = vld [vmem:[%s3524 + $0x1d8] sm:$0xff]
      %v3585 = vld [vmem:[%s3524 + $0x1e0] sm:$0xff]
      %v3586 = vld [vmem:[%s3524 + $0x1e8] sm:$0xff]
      %v3587 = vld [vmem:[%s3524 + $0x1f0] sm:$0xff]
      %v3588 = vld [vmem:[%s3524 + $0x1f8] sm:$0xff]
      %v3589 = vld [vmem:[%s3524 + $0x200] sm:$0xff]
      %v3590 = vld [vmem:[%s3524 + $0x208] sm:$0xff]
      %v3591 = vld [vmem:[%s3524 + $0x210] sm:$0xff]
      %v3592 = vld [vmem:[%s3524 + $0x218] sm:$0xff]
      %v3593 = vld [vmem:[%s3524 + $0x220] sm:$0xff]
      %v3594 = vld [vmem:[%s3524 + $0x228] sm:$0xff]
      %v3595 = vld [vmem:[%s3524 + $0x230] sm:$0xff]
      %v3596 = vld [vmem:[%s3524 + $0x238] sm:$0xff]
      %v3597 = vld [vmem:[%s3524 + $0x240] sm:$0xff]
      %v3598 = vld [vmem:[%s3524 + $0x248] sm:$0xff]
      %v3599 = vld [vmem:[%s3524 + $0x250] sm:$0xff]
      %v3600 = vld [vmem:[%s3524 + $0x258] sm:$0xff]
      %v3601 = vld [vmem:[%s3524 + $0x260] sm:$0xff]
      %v3602 = vld [vmem:[%s3524 + $0x268] sm:$0xff]
      %v3603 = vld [vmem:[%s3524 + $0x270] sm:$0xff]
      %v3604 = vld [vmem:[%s3524 + $0x278] sm:$0xff]
      %v3605 = vld [vmem:[%s3524 + $0x280] sm:$0xff]
      %v3606 = vld [vmem:[%s3524 + $0x288] sm:$0xff]
      %v3607 = vld [vmem:[%s3524 + $0x290] sm:$0xff]
      %v3608 = vld [vmem:[%s3524 + $0x298] sm:$0xff]
      %v3609 = vld [vmem:[%s3524 + $0x2a0] sm:$0xff]
      %v3610 = vld [vmem:[%s3524 + $0x2a8] sm:$0xff]
      %v3611 = vld [vmem:[%s3524 + $0x2b0] sm:$0xff]
      %v3612 = vld [vmem:[%s3524 + $0x2b8] sm:$0xff]
      %v3613 = vld [vmem:[%s3524 + $0x2c0] sm:$0xff]
      %v3614 = vld [vmem:[%s3524 + $0x2c8] sm:$0xff]
      %v3615 = vld [vmem:[%s3524 + $0x2d0] sm:$0xff]
      %v3616 = vld [vmem:[%s3524 + $0x2d8] sm:$0xff]
      %v3617 = vld [vmem:[%s3524 + $0x2e0] sm:$0xff]
      %v3618 = vld [vmem:[%s3524 + $0x2e8] sm:$0xff]
      %v3619 = vld [vmem:[%s3524 + $0x2f0] sm:$0xff]
      %v3620 = vld [vmem:[%s3524 + $0x2f8] sm:$0xff]
      %v3717 = vunpack.c.l.b16 %v3525
      %v3718 = vunpack.c.h.b16 %v3525
      %v3719 = vunpack.c.l.b16 %v3526
      %v3720 = vunpack.c.h.b16 %v3526
      %v3721 = vunpack.c.l.b16 %v3527
      %v3722 = vunpack.c.h.b16 %v3527
      %v3723 = vunpack.c.l.b16 %v3528
      %v3724 = vunpack.c.h.b16 %v3528
      %v3725 = vunpack.c.l.b16 %v3529
      %v3726 = vunpack.c.h.b16 %v3529
      %v3727 = vunpack.c.l.b16 %v3530
      %v3728 = vunpack.c.h.b16 %v3530
      %v3729 = vunpack.c.l.b16 %v3531
      %v3730 = vunpack.c.h.b16 %v3531
      %v3731 = vunpack.c.l.b16 %v3532
      %v3732 = vunpack.c.h.b16 %v3532
      %v3733 = vunpack.c.l.b16 %v3533
      %v3734 = vunpack.c.h.b16 %v3533
      %v3735 = vunpack.c.l.b16 %v3534
      %v3736 = vunpack.c.h.b16 %v3534
      %v3737 = vunpack.c.l.b16 %v3535
      %v3738 = vunpack.c.h.b16 %v3535
      %v3739 = vunpack.c.l.b16 %v3536
      %v3740 = vunpack.c.h.b16 %v3536
      %v3741 = vunpack.c.l.b16 %v3537
      %v3742 = vunpack.c.h.b16 %v3537
      %v3743 = vunpack.c.l.b16 %v3538
      %v3744 = vunpack.c.h.b16 %v3538
      %v3745 = vunpack.c.l.b16 %v3539
      %v3746 = vunpack.c.h.b16 %v3539
      %v3747 = vunpack.c.l.b16 %v3540
      %v3748 = vunpack.c.h.b16 %v3540
      %v3749 = vunpack.c.l.b16 %v3541
      %v3750 = vunpack.c.h.b16 %v3541
      %v3751 = vunpack.c.l.b16 %v3542
      %v3752 = vunpack.c.h.b16 %v3542
      %v3753 = vunpack.c.l.b16 %v3543
      %v3754 = vunpack.c.h.b16 %v3543
      %v3755 = vunpack.c.l.b16 %v3544
      %v3756 = vunpack.c.h.b16 %v3544
      %v3757 = vunpack.c.l.b16 %v3545
      %v3758 = vunpack.c.h.b16 %v3545
      %v3759 = vunpack.c.l.b16 %v3546
      %v3760 = vunpack.c.h.b16 %v3546
      %v3761 = vunpack.c.l.b16 %v3547
      %v3762 = vunpack.c.h.b16 %v3547
      %v3763 = vunpack.c.l.b16 %v3548
      %v3764 = vunpack.c.h.b16 %v3548
      %v3765 = vunpack.c.l.b16 %v3549
      %v3766 = vunpack.c.h.b16 %v3549
      %v3767 = vunpack.c.l.b16 %v3550
      %v3768 = vunpack.c.h.b16 %v3550
      %v3769 = vunpack.c.l.b16 %v3551
      %v3770 = vunpack.c.h.b16 %v3551
      %v3771 = vunpack.c.l.b16 %v3552
      %v3772 = vunpack.c.h.b16 %v3552
      %v3773 = vunpack.c.l.b16 %v3553
      %v3774 = vunpack.c.h.b16 %v3553
      %v3775 = vunpack.c.l.b16 %v3554
      %v3776 = vunpack.c.h.b16 %v3554
      %v3777 = vunpack.c.l.b16 %v3555
      %v3778 = vunpack.c.h.b16 %v3555
      %v3779 = vunpack.c.l.b16 %v3556
      %v3780 = vunpack.c.h.b16 %v3556
      %v3781 = vunpack.c.l.b16 %v3557
      %v3782 = vunpack.c.h.b16 %v3557
      %v3783 = vunpack.c.l.b16 %v3558
      %v3784 = vunpack.c.h.b16 %v3558
      %v3785 = vunpack.c.l.b16 %v3559
      %v3786 = vunpack.c.h.b16 %v3559
      %v3787 = vunpack.c.l.b16 %v3560
      %v3788 = vunpack.c.h.b16 %v3560
      %v3789 = vunpack.c.l.b16 %v3561
      %v3790 = vunpack.c.h.b16 %v3561
      %v3791 = vunpack.c.l.b16 %v3562
      %v3792 = vunpack.c.h.b16 %v3562
      %v3793 = vunpack.c.l.b16 %v3563
      %v3794 = vunpack.c.h.b16 %v3563
      %v3795 = vunpack.c.l.b16 %v3564
      %v3796 = vunpack.c.h.b16 %v3564
      %v3797 = vunpack.c.l.b16 %v3565
      %v3798 = vunpack.c.h.b16 %v3565
      %v3799 = vunpack.c.l.b16 %v3566
      %v3800 = vunpack.c.h.b16 %v3566
      %v3801 = vunpack.c.l.b16 %v3567
      %v3802 = vunpack.c.h.b16 %v3567
      %v3803 = vunpack.c.l.b16 %v3568
      %v3804 = vunpack.c.h.b16 %v3568
      %v3805 = vunpack.c.l.b16 %v3569
      %v3806 = vunpack.c.h.b16 %v3569
      %v3807 = vunpack.c.l.b16 %v3570
      %v3808 = vunpack.c.h.b16 %v3570
      %v3809 = vunpack.c.l.b16 %v3571
      %v3810 = vunpack.c.h.b16 %v3571
      %v3811 = vunpack.c.l.b16 %v3572
      %v3812 = vunpack.c.h.b16 %v3572
      %v3813 = vunpack.c.l.b16 %v3573
      %v3814 = vunpack.c.h.b16 %v3573
      %v3815 = vunpack.c.l.b16 %v3574
      %v3816 = vunpack.c.h.b16 %v3574
      %v3817 = vunpack.c.l.b16 %v3575
      %v3818 = vunpack.c.h.b16 %v3575
      %v3819 = vunpack.c.l.b16 %v3576
      %v3820 = vunpack.c.h.b16 %v3576
      %v3821 = vunpack.c.l.b16 %v3577
      %v3822 = vunpack.c.h.b16 %v3577
      %v3823 = vunpack.c.l.b16 %v3578
      %v3824 = vunpack.c.h.b16 %v3578
      %v3825 = vunpack.c.l.b16 %v3579
      %v3826 = vunpack.c.h.b16 %v3579
      %v3827 = vunpack.c.l.b16 %v3580
      %v3828 = vunpack.c.h.b16 %v3580
      %v3829 = vunpack.c.l.b16 %v3581
      %v3830 = vunpack.c.h.b16 %v3581
      %v3831 = vunpack.c.l.b16 %v3582
      %v3832 = vunpack.c.h.b16 %v3582
      %v3833 = vunpack.c.l.b16 %v3583
      %v3834 = vunpack.c.h.b16 %v3583
      %v3835 = vunpack.c.l.b16 %v3584
      %v3836 = vunpack.c.h.b16 %v3584
      %v3837 = vunpack.c.l.b16 %v3585
      %v3838 = vunpack.c.h.b16 %v3585
      %v3839 = vunpack.c.l.b16 %v3586
      %v3840 = vunpack.c.h.b16 %v3586
      %v3841 = vunpack.c.l.b16 %v3587
      %v3842 = vunpack.c.h.b16 %v3587
      %v3843 = vunpack.c.l.b16 %v3588
      %v3844 = vunpack.c.h.b16 %v3588
      %v3845 = vunpack.c.l.b16 %v3589
      %v3846 = vunpack.c.h.b16 %v3589
      %v3847 = vunpack.c.l.b16 %v3590
      %v3848 = vunpack.c.h.b16 %v3590
      %v3849 = vunpack.c.l.b16 %v3591
      %v3850 = vunpack.c.h.b16 %v3591
      %v3851 = vunpack.c.l.b16 %v3592
      %v3852 = vunpack.c.h.b16 %v3592
      %v3853 = vunpack.c.l.b16 %v3593
      %v3854 = vunpack.c.h.b16 %v3593
      %v3855 = vunpack.c.l.b16 %v3594
      %v3856 = vunpack.c.h.b16 %v3594
      %v3857 = vunpack.c.l.b16 %v3595
      %v3858 = vunpack.c.h.b16 %v3595
      %v3859 = vunpack.c.l.b16 %v3596
      %v3860 = vunpack.c.h.b16 %v3596
      %v3861 = vunpack.c.l.b16 %v3597
      %v3862 = vunpack.c.h.b16 %v3597
      %v3863 = vunpack.c.l.b16 %v3598
      %v3864 = vunpack.c.h.b16 %v3598
      %v3865 = vunpack.c.l.b16 %v3599
      %v3866 = vunpack.c.h.b16 %v3599
      %v3867 = vunpack.c.l.b16 %v3600
      %v3868 = vunpack.c.h.b16 %v3600
      %v3869 = vunpack.c.l.b16 %v3601
      %v3870 = vunpack.c.h.b16 %v3601
      %v3871 = vunpack.c.l.b16 %v3602
      %v3872 = vunpack.c.h.b16 %v3602
      %v3873 = vunpack.c.l.b16 %v3603
      %v3874 = vunpack.c.h.b16 %v3603
      %v3875 = vunpack.c.l.b16 %v3604
      %v3876 = vunpack.c.h.b16 %v3604
      %v3877 = vunpack.c.l.b16 %v3605
      %v3878 = vunpack.c.h.b16 %v3605
      %v3879 = vunpack.c.l.b16 %v3606
      %v3880 = vunpack.c.h.b16 %v3606
      %v3881 = vunpack.c.l.b16 %v3607
      %v3882 = vunpack.c.h.b16 %v3607
      %v3883 = vunpack.c.l.b16 %v3608
      %v3884 = vunpack.c.h.b16 %v3608
      %v3885 = vunpack.c.l.b16 %v3609
      %v3886 = vunpack.c.h.b16 %v3609
      %v3887 = vunpack.c.l.b16 %v3610
      %v3888 = vunpack.c.h.b16 %v3610
      %v3889 = vunpack.c.l.b16 %v3611
      %v3890 = vunpack.c.h.b16 %v3611
      %v3891 = vunpack.c.l.b16 %v3612
      %v3892 = vunpack.c.h.b16 %v3612
      %v3893 = vunpack.c.l.b16 %v3613
      %v3894 = vunpack.c.h.b16 %v3613
      %v3895 = vunpack.c.l.b16 %v3614
      %v3896 = vunpack.c.h.b16 %v3614
      %v3897 = vunpack.c.l.b16 %v3615
      %v3898 = vunpack.c.h.b16 %v3615
      %v3899 = vunpack.c.l.b16 %v3616
      %v3900 = vunpack.c.h.b16 %v3616
      %v3901 = vunpack.c.l.b16 %v3617
      %v3902 = vunpack.c.h.b16 %v3617
      %v3903 = vunpack.c.l.b16 %v3618
      %v3904 = vunpack.c.h.b16 %v3618
      %v3905 = vunpack.c.l.b16 %v3619
      %v3906 = vunpack.c.h.b16 %v3619
      %v3907 = vunpack.c.l.b16 %v3620
      %v3908 = vunpack.c.h.b16 %v3620
      %v3909 = vpack.c.b16 %v3721, %v3717
      %v3910 = vpack.c.b16 %v3722, %v3718
      %v3911 = vpack.c.b16 %v3723, %v3719
      %v3912 = vpack.c.b16 %v3724, %v3720
      %v3913 = vpack.c.b16 %v3729, %v3725
      %v3914 = vpack.c.b16 %v3730, %v3726
      %v3915 = vpack.c.b16 %v3731, %v3727
      %v3916 = vpack.c.b16 %v3732, %v3728
      %v3917 = vpack.c.b16 %v3737, %v3733
      %v3918 = vpack.c.b16 %v3738, %v3734
      %v3919 = vpack.c.b16 %v3739, %v3735
      %v3920 = vpack.c.b16 %v3740, %v3736
      %v3921 = vpack.c.b16 %v3745, %v3741
      %v3922 = vpack.c.b16 %v3746, %v3742
      %v3923 = vpack.c.b16 %v3747, %v3743
      %v3924 = vpack.c.b16 %v3748, %v3744
      %v3925 = vpack.c.b16 %v3753, %v3749
      %v3926 = vpack.c.b16 %v3754, %v3750
      %v3927 = vpack.c.b16 %v3755, %v3751
      %v3928 = vpack.c.b16 %v3756, %v3752
      %v3929 = vpack.c.b16 %v3761, %v3757
      %v3930 = vpack.c.b16 %v3762, %v3758
      %v3931 = vpack.c.b16 %v3763, %v3759
      %v3932 = vpack.c.b16 %v3764, %v3760
      %v3933 = vpack.c.b16 %v3769, %v3765
      %v3934 = vpack.c.b16 %v3770, %v3766
      %v3935 = vpack.c.b16 %v3771, %v3767
      %v3936 = vpack.c.b16 %v3772, %v3768
      %v3937 = vpack.c.b16 %v3777, %v3773
      %v3938 = vpack.c.b16 %v3778, %v3774
      %v3939 = vpack.c.b16 %v3779, %v3775
      %v3940 = vpack.c.b16 %v3780, %v3776
      %v3941 = vpack.c.b16 %v3785, %v3781
      %v3942 = vpack.c.b16 %v3786, %v3782
      %v3943 = vpack.c.b16 %v3787, %v3783
      %v3944 = vpack.c.b16 %v3788, %v3784
      %v3945 = vpack.c.b16 %v3793, %v3789
      %v3946 = vpack.c.b16 %v3794, %v3790
      %v3947 = vpack.c.b16 %v3795, %v3791
      %v3948 = vpack.c.b16 %v3796, %v3792
      %v3949 = vpack.c.b16 %v3801, %v3797
      %v3950 = vpack.c.b16 %v3802, %v3798
      %v3951 = vpack.c.b16 %v3803, %v3799
      %v3952 = vpack.c.b16 %v3804, %v3800
      %v3953 = vpack.c.b16 %v3809, %v3805
      %v3954 = vpack.c.b16 %v3810, %v3806
      %v3955 = vpack.c.b16 %v3811, %v3807
      %v3956 = vpack.c.b16 %v3812, %v3808
      %v3957 = vpack.c.b16 %v3817, %v3813
      %v3958 = vpack.c.b16 %v3818, %v3814
      %v3959 = vpack.c.b16 %v3819, %v3815
      %v3960 = vpack.c.b16 %v3820, %v3816
      %v3961 = vpack.c.b16 %v3825, %v3821
      %v3962 = vpack.c.b16 %v3826, %v3822
      %v3963 = vpack.c.b16 %v3827, %v3823
      %v3964 = vpack.c.b16 %v3828, %v3824
      %v3965 = vpack.c.b16 %v3833, %v3829
      %v3966 = vpack.c.b16 %v3834, %v3830
      %v3967 = vpack.c.b16 %v3835, %v3831
      %v3968 = vpack.c.b16 %v3836, %v3832
      %v3969 = vpack.c.b16 %v3841, %v3837
      %v3970 = vpack.c.b16 %v3842, %v3838
      %v3971 = vpack.c.b16 %v3843, %v3839
      %v3972 = vpack.c.b16 %v3844, %v3840
      %v3973 = vpack.c.b16 %v3849, %v3845
      %v3974 = vpack.c.b16 %v3850, %v3846
      %v3975 = vpack.c.b16 %v3851, %v3847
      %v3976 = vpack.c.b16 %v3852, %v3848
      %v3977 = vpack.c.b16 %v3857, %v3853
      %v3978 = vpack.c.b16 %v3858, %v3854
      %v3979 = vpack.c.b16 %v3859, %v3855
      %v3980 = vpack.c.b16 %v3860, %v3856
      %v3981 = vpack.c.b16 %v3865, %v3861
      %v3982 = vpack.c.b16 %v3866, %v3862
      %v3983 = vpack.c.b16 %v3867, %v3863
      %v3984 = vpack.c.b16 %v3868, %v3864
      %v3985 = vpack.c.b16 %v3873, %v3869
      %v3986 = vpack.c.b16 %v3874, %v3870
      %v3987 = vpack.c.b16 %v3875, %v3871
      %v3988 = vpack.c.b16 %v3876, %v3872
      %v3989 = vpack.c.b16 %v3881, %v3877
      %v3990 = vpack.c.b16 %v3882, %v3878
      %v3991 = vpack.c.b16 %v3883, %v3879
      %v3992 = vpack.c.b16 %v3884, %v3880
      %v3993 = vpack.c.b16 %v3889, %v3885
      %v3994 = vpack.c.b16 %v3890, %v3886
      %v3995 = vpack.c.b16 %v3891, %v3887
      %v3996 = vpack.c.b16 %v3892, %v3888
      %v3997 = vpack.c.b16 %v3897, %v3893
      %v3998 = vpack.c.b16 %v3898, %v3894
      %v3999 = vpack.c.b16 %v3899, %v3895
      %v4000 = vpack.c.b16 %v3900, %v3896
      %v4001 = vpack.c.b16 %v3905, %v3901
      %v4002 = vpack.c.b16 %v3906, %v3902
      %v4003 = vpack.c.b16 %v3907, %v3903
      %v4004 = vpack.c.b16 %v3908, %v3904
      %4101 = vmatprep.subr.bf16.mxu0 %v3938
      %4102 = vmatpush1.bf16.msra.mxu0 %v3937
      %4103 = vmatprep.subr.bf16.mxu0 %v3934
      %4104 = vmatpush1.bf16.msra.mxu0 %v3933
      %4105 = vmatprep.subr.bf16.mxu0 %v3930
      %4106 = vmatpush1.bf16.msra.mxu0 %v3929
      %4107 = vmatprep.subr.bf16.mxu0 %v3926
      %4108 = vmatpush1.bf16.msra.mxu0 %v3925
      %4109 = vmatprep.subr.bf16.mxu0 %v3922
      %4110 = vmatpush1.bf16.msra.mxu0 %v3921
      %4111 = vmatprep.subr.bf16.mxu0 %v3918
      %4112 = vmatpush1.bf16.msra.mxu0 %v3917
      %4113 = vmatprep.subr.bf16.mxu0 %v3914
      %4114 = vmatpush1.bf16.msra.mxu0 %v3913
      %4115 = vmatprep.subr.bf16.mxu0 %v3910
      %4116 = vmatpush1.bf16.msra.mxu0 %v3909
      %4117 = vmatprep.subr.bf16.mxu0 %v3970
      %4118 = vmatpush2.bf16.msra.mxu0 %v3969
      %4119 = vmatprep.subr.bf16.mxu0 %v3966
      %4120 = vmatpush2.bf16.msra.mxu0 %v3965
      %4121 = vmatprep.subr.bf16.mxu0 %v3962
      %4122 = vmatpush2.bf16.msra.mxu0 %v3961
      %4123 = vmatprep.subr.bf16.mxu0 %v3958
      %4124 = vmatpush2.bf16.msra.mxu0 %v3957
      %4125 = vmatprep.subr.bf16.mxu0 %v3954
      %4126 = vmatpush2.bf16.msra.mxu0 %v3953
      %4127 = vmatprep.subr.bf16.mxu0 %v3950
      %4128 = vmatpush2.bf16.msra.mxu0 %v3949
      %4129 = vmatprep.subr.bf16.mxu0 %v3946
      %4130 = vmatpush2.bf16.msra.mxu0 %v3945
      %4131 = vmatprep.subr.bf16.mxu0 %v3942
      %4132 = vmatpush2.bf16.msra.mxu0 %v3941
      %4133 = vmatprep.mubr.bf16.mxu0 %v3476
      %4134 = vmatmul.mubr.bf16.gmra.mxu0 %v3444
      %v4135 = vpop.f32.mrf.mxu0
      %v4136 = vadd.f32 0.0, %v4135
      %v4137 = vpop.f32.mrf.mxu0
      %v4138 = vadd.f32 0.0, %v4137
      %v4139 = vpop.f32.mrf.mxu0
      %v4140 = vadd.f32 0.0, %v4139
      %v4141 = vpop.f32.mrf.mxu0
      %v4142 = vadd.f32 0.0, %v4141
      %4143 = vmatprep.mubr.bf16.mxu0 %v3477
      %4144 = vmatmul.mubr.bf16.gmra.mxu0 %v3445
      %v4145 = vpop.f32.mrf.mxu0
      %v4146 = vadd.f32 0.0, %v4145
      %v4147 = vpop.f32.mrf.mxu0
      %v4148 = vadd.f32 0.0, %v4147
      %v4149 = vpop.f32.mrf.mxu0
      %v4150 = vadd.f32 0.0, %v4149
      %v4151 = vpop.f32.mrf.mxu0
      %v4152 = vadd.f32 0.0, %v4151
      %4153 = vmatprep.mubr.bf16.mxu0 %v3478
      %4154 = vmatmul.mubr.bf16.gmra.mxu0 %v3446
      %v4155 = vpop.f32.mrf.mxu0
      %v4156 = vadd.f32 0.0, %v4155
      %v4157 = vpop.f32.mrf.mxu0
      %v4158 = vadd.f32 0.0, %v4157
      %v4159 = vpop.f32.mrf.mxu0
      %v4160 = vadd.f32 0.0, %v4159
      %v4161 = vpop.f32.mrf.mxu0
      %v4162 = vadd.f32 0.0, %v4161
      %4163 = vmatprep.mubr.bf16.mxu0 %v3479
      %4164 = vmatmul.mubr.bf16.gmra.mxu0 %v3447
      %v4165 = vpop.f32.mrf.mxu0
      %v4166 = vadd.f32 0.0, %v4165
      %v4167 = vpop.f32.mrf.mxu0
      %v4168 = vadd.f32 0.0, %v4167
      %v4169 = vpop.f32.mrf.mxu0
      %v4170 = vadd.f32 0.0, %v4169
      %v4171 = vpop.f32.mrf.mxu0
      %v4172 = vadd.f32 0.0, %v4171
      %4173 = vmatprep.mubr.bf16.mxu0 %v3480
      %4174 = vmatmul.mubr.bf16.gmra.mxu0 %v3448
      %v4175 = vpop.f32.mrf.mxu0
      %v4176 = vadd.f32 0.0, %v4175
      %v4177 = vpop.f32.mrf.mxu0
      %v4178 = vadd.f32 0.0, %v4177
      %v4179 = vpop.f32.mrf.mxu0
      %v4180 = vadd.f32 0.0, %v4179
      %v4181 = vpop.f32.mrf.mxu0
      %v4182 = vadd.f32 0.0, %v4181
      %4183 = vmatprep.mubr.bf16.mxu0 %v3481
      %4184 = vmatmul.mubr.bf16.gmra.mxu0 %v3449
      %v4185 = vpop.f32.mrf.mxu0
      %v4186 = vadd.f32 0.0, %v4185
      %v4187 = vpop.f32.mrf.mxu0
      %v4188 = vadd.f32 0.0, %v4187
      %v4189 = vpop.f32.mrf.mxu0
      %v4190 = vadd.f32 0.0, %v4189
      %v4191 = vpop.f32.mrf.mxu0
      %v4192 = vadd.f32 0.0, %v4191
      %4193 = vmatprep.mubr.bf16.mxu0 %v3482
      %4194 = vmatmul.mubr.bf16.gmra.mxu0 %v3450
      %v4195 = vpop.f32.mrf.mxu0
      %v4196 = vadd.f32 0.0, %v4195
      %v4197 = vpop.f32.mrf.mxu0
      %v4198 = vadd.f32 0.0, %v4197
      %v4199 = vpop.f32.mrf.mxu0
      %v4200 = vadd.f32 0.0, %v4199
      %v4201 = vpop.f32.mrf.mxu0
      %v4202 = vadd.f32 0.0, %v4201
      %4203 = vmatprep.mubr.bf16.mxu0 %v3483
      %4204 = vmatmul.mubr.bf16.gmra.mxu0 %v3451
      %v4205 = vpop.f32.mrf.mxu0
      %v4206 = vadd.f32 0.0, %v4205
      %v4207 = vpop.f32.mrf.mxu0
      %v4208 = vadd.f32 0.0, %v4207
      %v4209 = vpop.f32.mrf.mxu0
      %v4210 = vadd.f32 0.0, %v4209
      %v4211 = vpop.f32.mrf.mxu0
      %v4212 = vadd.f32 0.0, %v4211
      %4213 = vdwg.mxu0
      %4214 = vmatprep.subr.bf16.mxu0 %v4002
      %4215 = vmatpush1.bf16.msra.mxu0 %v4001
      %4216 = vmatprep.subr.bf16.mxu0 %v3998
      %4217 = vmatpush1.bf16.msra.mxu0 %v3997
      %4218 = vmatprep.subr.bf16.mxu0 %v3994
      %4219 = vmatpush1.bf16.msra.mxu0 %v3993
      %4220 = vmatprep.subr.bf16.mxu0 %v3990
      %4221 = vmatpush1.bf16.msra.mxu0 %v3989
      %4222 = vmatprep.subr.bf16.mxu0 %v3986
      %4223 = vmatpush1.bf16.msra.mxu0 %v3985
      %4224 = vmatprep.subr.bf16.mxu0 %v3982
      %4225 = vmatpush1.bf16.msra.mxu0 %v3981
      %4226 = vmatprep.subr.bf16.mxu0 %v3978
      %4227 = vmatpush1.bf16.msra.mxu0 %v3977
      %4228 = vmatprep.subr.bf16.mxu0 %v3974
      %4229 = vmatpush1.bf16.msra.mxu0 %v3973
      %4230 = vmatprep.subr.bf16.mxu0 0
      %4231 = vmatpush2.bf16.msra.mxu0 0
      %4232 = vmatprep.subr.bf16.mxu0 0
      %4233 = vmatpush2.bf16.msra.mxu0 0
      %4234 = vmatprep.subr.bf16.mxu0 0
      %4235 = vmatpush2.bf16.msra.mxu0 0
      %4236 = vmatprep.subr.bf16.mxu0 0
      %4237 = vmatpush2.bf16.msra.mxu0 0
      %4238 = vmatprep.subr.bf16.mxu0 0
      %4239 = vmatpush2.bf16.msra.mxu0 0
      %4240 = vmatprep.subr.bf16.mxu0 0
      %4241 = vmatpush2.bf16.msra.mxu0 0
      %4242 = vmatprep.subr.bf16.mxu0 0
      %4243 = vmatpush2.bf16.msra.mxu0 0
      %4244 = vmatprep.subr.bf16.mxu0 0
      %4245 = vmatpush2.bf16.msra.mxu0 0
      %4246 = vmatprep.mubr.bf16.mxu0 0
      %4247 = vmatmul.mubr.bf16.gmra.mxu0 %v3508
      %v4248 = vpop.f32.mrf.mxu0
      %v4249 = vadd.f32 %v4136, %v4248
      %v4250 = vpop.f32.mrf.mxu0
      %v4251 = vadd.f32 %v4138, %v4250
      %v4252 = vpop.f32.mrf.mxu0
      %v4253 = vadd.f32 %v4140, %v4252
      %v4254 = vpop.f32.mrf.mxu0
      %v4255 = vadd.f32 %v4142, %v4254
      %4256 = vmatprep.mubr.bf16.mxu0 0
      %4257 = vmatmul.mubr.bf16.gmra.mxu0 %v3509
      %v4258 = vpop.f32.mrf.mxu0
      %v4259 = vadd.f32 %v4146, %v4258
      %v4260 = vpop.f32.mrf.mxu0
      %v4261 = vadd.f32 %v4148, %v4260
      %v4262 = vpop.f32.mrf.mxu0
      %v4263 = vadd.f32 %v4150, %v4262
      %v4264 = vpop.f32.mrf.mxu0
      %v4265 = vadd.f32 %v4152, %v4264
      %4266 = vmatprep.mubr.bf16.mxu0 0
      %4267 = vmatmul.mubr.bf16.gmra.mxu0 %v3510
      %v4268 = vpop.f32.mrf.mxu0
      %v4269 = vadd.f32 %v4156, %v4268
      %v4270 = vpop.f32.mrf.mxu0
      %v4271 = vadd.f32 %v4158, %v4270
      %v4272 = vpop.f32.mrf.mxu0
      %v4273 = vadd.f32 %v4160, %v4272
      %v4274 = vpop.f32.mrf.mxu0
      %v4275 = vadd.f32 %v4162, %v4274
      %4276 = vmatprep.mubr.bf16.mxu0 0
      %4277 = vmatmul.mubr.bf16.gmra.mxu0 %v3511
      %v4278 = vpop.f32.mrf.mxu0
      %v4279 = vadd.f32 %v4166, %v4278
      %v4280 = vpop.f32.mrf.mxu0
      %v4281 = vadd.f32 %v4168, %v4280
      %v4282 = vpop.f32.mrf.mxu0
      %v4283 = vadd.f32 %v4170, %v4282
      %v4284 = vpop.f32.mrf.mxu0
      %v4285 = vadd.f32 %v4172, %v4284
      %4286 = vmatprep.mubr.bf16.mxu0 0
      %4287 = vmatmul.mubr.bf16.gmra.mxu0 %v3512
      %v4288 = vpop.f32.mrf.mxu0
      %v4289 = vadd.f32 %v4176, %v4288
      %v4290 = vpop.f32.mrf.mxu0
      %v4291 = vadd.f32 %v4178, %v4290
      %v4292 = vpop.f32.mrf.mxu0
      %v4293 = vadd.f32 %v4180, %v4292
      %v4294 = vpop.f32.mrf.mxu0
      %v4295 = vadd.f32 %v4182, %v4294
      %4296 = vmatprep.mubr.bf16.mxu0 0
      %4297 = vmatmul.mubr.bf16.gmra.mxu0 %v3513
      %v4298 = vpop.f32.mrf.mxu0
      %v4299 = vadd.f32 %v4186, %v4298
      %v4300 = vpop.f32.mrf.mxu0
      %v4301 = vadd.f32 %v4188, %v4300
      %v4302 = vpop.f32.mrf.mxu0
      %v4303 = vadd.f32 %v4190, %v4302
      %v4304 = vpop.f32.mrf.mxu0
      %v4305 = vadd.f32 %v4192, %v4304
      %4306 = vmatprep.mubr.bf16.mxu0 0
      %4307 = vmatmul.mubr.bf16.gmra.mxu0 %v3514
      %v4308 = vpop.f32.mrf.mxu0
      %v4309 = vadd.f32 %v4196, %v4308
      %v4310 = vpop.f32.mrf.mxu0
      %v4311 = vadd.f32 %v4198, %v4310
      %v4312 = vpop.f32.mrf.mxu0
      %v4313 = vadd.f32 %v4200, %v4312
      %v4314 = vpop.f32.mrf.mxu0
      %v4315 = vadd.f32 %v4202, %v4314
      %4316 = vmatprep.mubr.bf16.mxu0 0
      %4317 = vmatmul.mubr.bf16.gmra.mxu0 %v3515
      %v4318 = vpop.f32.mrf.mxu0
      %v4319 = vadd.f32 %v4206, %v4318
      %v4320 = vpop.f32.mrf.mxu0
      %v4321 = vadd.f32 %v4208, %v4320
      %v4322 = vpop.f32.mrf.mxu0
      %v4323 = vadd.f32 %v4210, %v4322
      %v4324 = vpop.f32.mrf.mxu0
      %v4325 = vadd.f32 %v4212, %v4324
      %4326 = vdwg.mxu0
      %4327 = vmatprep.subr.bf16.mxu0 %v3940
      %4328 = vmatpush1.bf16.msra.mxu0 %v3939
      %4329 = vmatprep.subr.bf16.mxu0 %v3936
      %4330 = vmatpush1.bf16.msra.mxu0 %v3935
      %4331 = vmatprep.subr.bf16.mxu0 %v3932
      %4332 = vmatpush1.bf16.msra.mxu0 %v3931
      %4333 = vmatprep.subr.bf16.mxu0 %v3928
      %4334 = vmatpush1.bf16.msra.mxu0 %v3927
      %4335 = vmatprep.subr.bf16.mxu0 %v3924
      %4336 = vmatpush1.bf16.msra.mxu0 %v3923
      %4337 = vmatprep.subr.bf16.mxu0 %v3920
      %4338 = vmatpush1.bf16.msra.mxu0 %v3919
      %4339 = vmatprep.subr.bf16.mxu0 %v3916
      %4340 = vmatpush1.bf16.msra.mxu0 %v3915
      %4341 = vmatprep.subr.bf16.mxu0 %v3912
      %4342 = vmatpush1.bf16.msra.mxu0 %v3911
      %4343 = vmatprep.subr.bf16.mxu0 %v3972
      %4344 = vmatpush2.bf16.msra.mxu0 %v3971
      %4345 = vmatprep.subr.bf16.mxu0 %v3968
      %4346 = vmatpush2.bf16.msra.mxu0 %v3967
      %4347 = vmatprep.subr.bf16.mxu0 %v3964
      %4348 = vmatpush2.bf16.msra.mxu0 %v3963
      %4349 = vmatprep.subr.bf16.mxu0 %v3960
      %4350 = vmatpush2.bf16.msra.mxu0 %v3959
      %4351 = vmatprep.subr.bf16.mxu0 %v3956
      %4352 = vmatpush2.bf16.msra.mxu0 %v3955
      %4353 = vmatprep.subr.bf16.mxu0 %v3952
      %4354 = vmatpush2.bf16.msra.mxu0 %v3951
      %4355 = vmatprep.subr.bf16.mxu0 %v3948
      %4356 = vmatpush2.bf16.msra.mxu0 %v3947
      %4357 = vmatprep.subr.bf16.mxu0 %v3944
      %4358 = vmatpush2.bf16.msra.mxu0 %v3943
      %4359 = vmatprep.mubr.bf16.mxu0 %v3476
      %4360 = vmatmul.mubr.bf16.gmra.mxu0 %v3444
      %v4361 = vpop.f32.mrf.mxu0
      %v4362 = vadd.f32 0.0, %v4361
      %v4363 = vpop.f32.mrf.mxu0
      %v4364 = vadd.f32 0.0, %v4363
      %v4365 = vpop.f32.mrf.mxu0
      %v4366 = vadd.f32 0.0, %v4365
      %v4367 = vpop.f32.mrf.mxu0
      %v4368 = vadd.f32 0.0, %v4367
      %4369 = vmatprep.mubr.bf16.mxu0 %v3477
      %4370 = vmatmul.mubr.bf16.gmra.mxu0 %v3445
      %v4371 = vpop.f32.mrf.mxu0
      %v4372 = vadd.f32 0.0, %v4371
      %v4373 = vpop.f32.mrf.mxu0
      %v4374 = vadd.f32 0.0, %v4373
      %v4375 = vpop.f32.mrf.mxu0
      %v4376 = vadd.f32 0.0, %v4375
      %v4377 = vpop.f32.mrf.mxu0
      %v4378 = vadd.f32 0.0, %v4377
      %4379 = vmatprep.mubr.bf16.mxu0 %v3478
      %4380 = vmatmul.mubr.bf16.gmra.mxu0 %v3446
      %v4381 = vpop.f32.mrf.mxu0
      %v4382 = vadd.f32 0.0, %v4381
      %v4383 = vpop.f32.mrf.mxu0
      %v4384 = vadd.f32 0.0, %v4383
      %v4385 = vpop.f32.mrf.mxu0
      %v4386 = vadd.f32 0.0, %v4385
      %v4387 = vpop.f32.mrf.mxu0
      %v4388 = vadd.f32 0.0, %v4387
      %4389 = vmatprep.mubr.bf16.mxu0 %v3479
      %4390 = vmatmul.mubr.bf16.gmra.mxu0 %v3447
      %v4391 = vpop.f32.mrf.mxu0
      %v4392 = vadd.f32 0.0, %v4391
      %v4393 = vpop.f32.mrf.mxu0
      %v4394 = vadd.f32 0.0, %v4393
      %v4395 = vpop.f32.mrf.mxu0
      %v4396 = vadd.f32 0.0, %v4395
      %v4397 = vpop.f32.mrf.mxu0
      %v4398 = vadd.f32 0.0, %v4397
      %4399 = vmatprep.mubr.bf16.mxu0 %v3480
      %4400 = vmatmul.mubr.bf16.gmra.mxu0 %v3448
      %v4401 = vpop.f32.mrf.mxu0
      %v4402 = vadd.f32 0.0, %v4401
      %v4403 = vpop.f32.mrf.mxu0
      %v4404 = vadd.f32 0.0, %v4403
      %v4405 = vpop.f32.mrf.mxu0
      %v4406 = vadd.f32 0.0, %v4405
      %v4407 = vpop.f32.mrf.mxu0
      %v4408 = vadd.f32 0.0, %v4407
      %4409 = vmatprep.mubr.bf16.mxu0 %v3481
      %4410 = vmatmul.mubr.bf16.gmra.mxu0 %v3449
      %v4411 = vpop.f32.mrf.mxu0
      %v4412 = vadd.f32 0.0, %v4411
      %v4413 = vpop.f32.mrf.mxu0
      %v4414 = vadd.f32 0.0, %v4413
      %v4415 = vpop.f32.mrf.mxu0
      %v4416 = vadd.f32 0.0, %v4415
      %v4417 = vpop.f32.mrf.mxu0
      %v4418 = vadd.f32 0.0, %v4417
      %4419 = vmatprep.mubr.bf16.mxu0 %v3482
      %4420 = vmatmul.mubr.bf16.gmra.mxu0 %v3450
      %v4421 = vpop.f32.mrf.mxu0
      %v4422 = vadd.f32 0.0, %v4421
      %v4423 = vpop.f32.mrf.mxu0
      %v4424 = vadd.f32 0.0, %v4423
      %v4425 = vpop.f32.mrf.mxu0
      %v4426 = vadd.f32 0.0, %v4425
      %v4427 = vpop.f32.mrf.mxu0
      %v4428 = vadd.f32 0.0, %v4427
      %4429 = vmatprep.mubr.bf16.mxu0 %v3483
      %4430 = vmatmul.mubr.bf16.gmra.mxu0 %v3451
      %v4431 = vpop.f32.mrf.mxu0
      %v4432 = vadd.f32 0.0, %v4431
      %v4433 = vpop.f32.mrf.mxu0
      %v4434 = vadd.f32 0.0, %v4433
      %v4435 = vpop.f32.mrf.mxu0
      %v4436 = vadd.f32 0.0, %v4435
      %v4437 = vpop.f32.mrf.mxu0
      %v4438 = vadd.f32 0.0, %v4437
      %4439 = vdwg.mxu0
      %4440 = vmatprep.subr.bf16.mxu0 %v4004
      %4441 = vmatpush1.bf16.msra.mxu0 %v4003
      %4442 = vmatprep.subr.bf16.mxu0 %v4000
      %4443 = vmatpush1.bf16.msra.mxu0 %v3999
      %4444 = vmatprep.subr.bf16.mxu0 %v3996
      %4445 = vmatpush1.bf16.msra.mxu0 %v3995
      %4446 = vmatprep.subr.bf16.mxu0 %v3992
      %4447 = vmatpush1.bf16.msra.mxu0 %v3991
      %4448 = vmatprep.subr.bf16.mxu0 %v3988
      %4449 = vmatpush1.bf16.msra.mxu0 %v3987
      %4450 = vmatprep.subr.bf16.mxu0 %v3984
      %4451 = vmatpush1.bf16.msra.mxu0 %v3983
      %4452 = vmatprep.subr.bf16.mxu0 %v3980
      %4453 = vmatpush1.bf16.msra.mxu0 %v3979
      %4454 = vmatprep.subr.bf16.mxu0 %v3976
      %4455 = vmatpush1.bf16.msra.mxu0 %v3975
      %4456 = vmatprep.subr.bf16.mxu0 0
      %4457 = vmatpush2.bf16.msra.mxu0 0
      %4458 = vmatprep.subr.bf16.mxu0 0
      %4459 = vmatpush2.bf16.msra.mxu0 0
      %4460 = vmatprep.subr.bf16.mxu0 0
      %4461 = vmatpush2.bf16.msra.mxu0 0
      %4462 = vmatprep.subr.bf16.mxu0 0
      %4463 = vmatpush2.bf16.msra.mxu0 0
      %4464 = vmatprep.subr.bf16.mxu0 0
      %4465 = vmatpush2.bf16.msra.mxu0 0
      %4466 = vmatprep.subr.bf16.mxu0 0
      %4467 = vmatpush2.bf16.msra.mxu0 0
      %4468 = vmatprep.subr.bf16.mxu0 0
      %4469 = vmatpush2.bf16.msra.mxu0 0
      %4470 = vmatprep.subr.bf16.mxu0 0
      %4471 = vmatpush2.bf16.msra.mxu0 0
      %4472 = vmatprep.mubr.bf16.mxu0 0
      %4473 = vmatmul.mubr.bf16.gmra.mxu0 %v3508
      %v4474 = vpop.f32.mrf.mxu0
      %v4475 = vadd.f32 %v4362, %v4474
      %v4476 = vpop.f32.mrf.mxu0
      %v4477 = vadd.f32 %v4364, %v4476
      %v4478 = vpop.f32.mrf.mxu0
      %v4479 = vadd.f32 %v4366, %v4478
      %v4480 = vpop.f32.mrf.mxu0
      %v4481 = vadd.f32 %v4368, %v4480
      %4482 = vmatprep.mubr.bf16.mxu0 0
      %4483 = vmatmul.mubr.bf16.gmra.mxu0 %v3509
      %v4484 = vpop.f32.mrf.mxu0
      %v4485 = vadd.f32 %v4372, %v4484
      %v4486 = vpop.f32.mrf.mxu0
      %v4487 = vadd.f32 %v4374, %v4486
      %v4488 = vpop.f32.mrf.mxu0
      %v4489 = vadd.f32 %v4376, %v4488
      %v4490 = vpop.f32.mrf.mxu0
      %v4491 = vadd.f32 %v4378, %v4490
      %4492 = vmatprep.mubr.bf16.mxu0 0
      %4493 = vmatmul.mubr.bf16.gmra.mxu0 %v3510
      %v4494 = vpop.f32.mrf.mxu0
      %v4495 = vadd.f32 %v4382, %v4494
      %v4496 = vpop.f32.mrf.mxu0
      %v4497 = vadd.f32 %v4384, %v4496
      %v4498 = vpop.f32.mrf.mxu0
      %v4499 = vadd.f32 %v4386, %v4498
      %v4500 = vpop.f32.mrf.mxu0
      %v4501 = vadd.f32 %v4388, %v4500
      %4502 = vmatprep.mubr.bf16.mxu0 0
      %4503 = vmatmul.mubr.bf16.gmra.mxu0 %v3511
      %v4504 = vpop.f32.mrf.mxu0
      %v4505 = vadd.f32 %v4392, %v4504
      %v4506 = vpop.f32.mrf.mxu0
      %v4507 = vadd.f32 %v4394, %v4506
      %v4508 = vpop.f32.mrf.mxu0
      %v4509 = vadd.f32 %v4396, %v4508
      %v4510 = vpop.f32.mrf.mxu0
      %v4511 = vadd.f32 %v4398, %v4510
      %4512 = vmatprep.mubr.bf16.mxu0 0
      %4513 = vmatmul.mubr.bf16.gmra.mxu0 %v3512
      %v4514 = vpop.f32.mrf.mxu0
      %v4515 = vadd.f32 %v4402, %v4514
      %v4516 = vpop.f32.mrf.mxu0
      %v4517 = vadd.f32 %v4404, %v4516
      %v4518 = vpop.f32.mrf.mxu0
      %v4519 = vadd.f32 %v4406, %v4518
      %v4520 = vpop.f32.mrf.mxu0
      %v4521 = vadd.f32 %v4408, %v4520
      %4522 = vmatprep.mubr.bf16.mxu0 0
      %4523 = vmatmul.mubr.bf16.gmra.mxu0 %v3513
      %v4524 = vpop.f32.mrf.mxu0
      %v4525 = vadd.f32 %v4412, %v4524
      %v4526 = vpop.f32.mrf.mxu0
      %v4527 = vadd.f32 %v4414, %v4526
      %v4528 = vpop.f32.mrf.mxu0
      %v4529 = vadd.f32 %v4416, %v4528
      %v4530 = vpop.f32.mrf.mxu0
      %v4531 = vadd.f32 %v4418, %v4530
      %4532 = vmatprep.mubr.bf16.mxu0 0
      %4533 = vmatmul.mubr.bf16.gmra.mxu0 %v3514
      %v4534 = vpop.f32.mrf.mxu0
      %v4535 = vadd.f32 %v4422, %v4534
      %v4536 = vpop.f32.mrf.mxu0
      %v4537 = vadd.f32 %v4424, %v4536
      %v4538 = vpop.f32.mrf.mxu0
      %v4539 = vadd.f32 %v4426, %v4538
      %v4540 = vpop.f32.mrf.mxu0
      %v4541 = vadd.f32 %v4428, %v4540
      %4542 = vmatprep.mubr.bf16.mxu0 0
      %4543 = vmatmul.mubr.bf16.gmra.mxu0 %v3515
      %v4544 = vpop.f32.mrf.mxu0
      %v4545 = vadd.f32 %v4432, %v4544
      %v4546 = vpop.f32.mrf.mxu0
      %v4547 = vadd.f32 %v4434, %v4546
      %v4548 = vpop.f32.mrf.mxu0
      %v4549 = vadd.f32 %v4436, %v4548
      %v4550 = vpop.f32.mrf.mxu0
      %v4551 = vadd.f32 %v4438, %v4550
      %4552 = vdwg.mxu0
      %v4553 = vadd.f32 %v2811, %v4249
      %v4554 = vadd.f32 %v2813, %v4251
      %v4555 = vadd.f32 %v3037, %v4475
      %v4556 = vadd.f32 %v3039, %v4477
      %v4557 = vadd.f32 %v2815, %v4253
      %v4558 = vadd.f32 %v2817, %v4255
      %v4559 = vadd.f32 %v3041, %v4479
      %v4560 = vadd.f32 %v3043, %v4481
      %v4561 = vadd.f32 %v2821, %v4259
      %v4562 = vadd.f32 %v2823, %v4261
      %v4563 = vadd.f32 %v3047, %v4485
      %v4564 = vadd.f32 %v3049, %v4487
      %v4565 = vadd.f32 %v2825, %v4263
      %v4566 = vadd.f32 %v2827, %v4265
      %v4567 = vadd.f32 %v3051, %v4489
      %v4568 = vadd.f32 %v3053, %v4491
      %v4569 = vadd.f32 %v2831, %v4269
      %v4570 = vadd.f32 %v2833, %v4271
      %v4571 = vadd.f32 %v3057, %v4495
      %v4572 = vadd.f32 %v3059, %v4497
      %v4573 = vadd.f32 %v2835, %v4273
      %v4574 = vadd.f32 %v2837, %v4275
      %v4575 = vadd.f32 %v3061, %v4499
      %v4576 = vadd.f32 %v3063, %v4501
      %v4577 = vadd.f32 %v2841, %v4279
      %v4578 = vadd.f32 %v2843, %v4281
      %v4579 = vadd.f32 %v3067, %v4505
      %v4580 = vadd.f32 %v3069, %v4507
      %v4581 = vadd.f32 %v2845, %v4283
      %v4582 = vadd.f32 %v2847, %v4285
      %v4583 = vadd.f32 %v3071, %v4509
      %v4584 = vadd.f32 %v3073, %v4511
      %v4585 = vadd.f32 %v2851, %v4289
      %v4586 = vadd.f32 %v2853, %v4291
      %v4587 = vadd.f32 %v3077, %v4515
      %v4588 = vadd.f32 %v3079, %v4517
      %v4589 = vadd.f32 %v2855, %v4293
      %v4590 = vadd.f32 %v2857, %v4295
      %v4591 = vadd.f32 %v3081, %v4519
      %v4592 = vadd.f32 %v3083, %v4521
      %v4593 = vadd.f32 %v2861, %v4299
      %v4594 = vadd.f32 %v2863, %v4301
      %v4595 = vadd.f32 %v3087, %v4525
      %v4596 = vadd.f32 %v3089, %v4527
      %v4597 = vadd.f32 %v2865, %v4303
      %v4598 = vadd.f32 %v2867, %v4305
      %v4599 = vadd.f32 %v3091, %v4529
      %v4600 = vadd.f32 %v3093, %v4531
      %v4601 = vadd.f32 %v2871, %v4309
      %v4602 = vadd.f32 %v2873, %v4311
      %v4603 = vadd.f32 %v3097, %v4535
      %v4604 = vadd.f32 %v3099, %v4537
      %v4605 = vadd.f32 %v2875, %v4313
      %v4606 = vadd.f32 %v2877, %v4315
      %v4607 = vadd.f32 %v3101, %v4539
      %v4608 = vadd.f32 %v3103, %v4541
      %v4609 = vadd.f32 %v2881, %v4319
      %v4610 = vadd.f32 %v2883, %v4321
      %v4611 = vadd.f32 %v3107, %v4545
      %v4612 = vadd.f32 %v3109, %v4547
      %v4613 = vadd.f32 %v2885, %v4323
      %v4614 = vadd.f32 %v2887, %v4325
      %v4615 = vadd.f32 %v3111, %v4549
      %v4616 = vadd.f32 %v3113, %v4551
      %v4617 = vld [vmem:[%s2] sm:$0xf]
      %v4619 = vlaneseq
      %v4620 = vshrl.u32 %v4619, 7
      %v4621 = vsub.s32 0, %v4620
      %v4622 = vrot.slane %v4617, %v4621
      %v4623 = vlaneseq
      %v4624 = vshrl.u32 %v4623, 7
      %v4625 = vsub.s32 1, %v4624
      %v4626 = vrot.slane %v4617, %v4625
      %v4627 = vlaneseq
      %v4628 = vshrl.u32 %v4627, 7
      %v4629 = vsub.s32 2, %v4628
      %v4630 = vrot.slane %v4617, %v4629
      %v4631 = vlaneseq
      %v4632 = vshrl.u32 %v4631, 7
      %v4633 = vsub.s32 3, %v4632
      %v4634 = vrot.slane %v4617, %v4633
      %v4639 = vmul.f32 %v4553, %v4622
      %v4640 = vmul.f32 %v4554, %v4626
      %v4641 = vmul.f32 %v4555, %v4630
      %v4642 = vmul.f32 %v4556, %v4634
      %v4643 = vmul.f32 %v4557, %v4622
      %v4644 = vmul.f32 %v4558, %v4626
      %v4645 = vmul.f32 %v4559, %v4630
      %v4646 = vmul.f32 %v4560, %v4634
      %v4647 = vmul.f32 %v4561, %v4622
      %v4648 = vmul.f32 %v4562, %v4626
      %v4649 = vmul.f32 %v4563, %v4630
      %v4650 = vmul.f32 %v4564, %v4634
      %v4651 = vmul.f32 %v4565, %v4622
      %v4652 = vmul.f32 %v4566, %v4626
      %v4653 = vmul.f32 %v4567, %v4630
      %v4654 = vmul.f32 %v4568, %v4634
      %v4655 = vmul.f32 %v4569, %v4622
      %v4656 = vmul.f32 %v4570, %v4626
      %v4657 = vmul.f32 %v4571, %v4630
      %v4658 = vmul.f32 %v4572, %v4634
      %v4659 = vmul.f32 %v4573, %v4622
      %v4660 = vmul.f32 %v4574, %v4626
      %v4661 = vmul.f32 %v4575, %v4630
      %v4662 = vmul.f32 %v4576, %v4634
      %v4663 = vmul.f32 %v4577, %v4622
      %v4664 = vmul.f32 %v4578, %v4626
      %v4665 = vmul.f32 %v4579, %v4630
      %v4666 = vmul.f32 %v4580, %v4634
      %v4667 = vmul.f32 %v4581, %v4622
      %v4668 = vmul.f32 %v4582, %v4626
      %v4669 = vmul.f32 %v4583, %v4630
      %v4670 = vmul.f32 %v4584, %v4634
      %v4671 = vmul.f32 %v4585, %v4622
      %v4672 = vmul.f32 %v4586, %v4626
      %v4673 = vmul.f32 %v4587, %v4630
      %v4674 = vmul.f32 %v4588, %v4634
      %v4675 = vmul.f32 %v4589, %v4622
      %v4676 = vmul.f32 %v4590, %v4626
      %v4677 = vmul.f32 %v4591, %v4630
      %v4678 = vmul.f32 %v4592, %v4634
      %v4679 = vmul.f32 %v4593, %v4622
      %v4680 = vmul.f32 %v4594, %v4626
      %v4681 = vmul.f32 %v4595, %v4630
      %v4682 = vmul.f32 %v4596, %v4634
      %v4683 = vmul.f32 %v4597, %v4622
      %v4684 = vmul.f32 %v4598, %v4626
      %v4685 = vmul.f32 %v4599, %v4630
      %v4686 = vmul.f32 %v4600, %v4634
      %v4687 = vmul.f32 %v4601, %v4622
      %v4688 = vmul.f32 %v4602, %v4626
      %v4689 = vmul.f32 %v4603, %v4630
      %v4690 = vmul.f32 %v4604, %v4634
      %v4691 = vmul.f32 %v4605, %v4622
      %v4692 = vmul.f32 %v4606, %v4626
      %v4693 = vmul.f32 %v4607, %v4630
      %v4694 = vmul.f32 %v4608, %v4634
      %v4695 = vmul.f32 %v4609, %v4622
      %v4696 = vmul.f32 %v4610, %v4626
      %v4697 = vmul.f32 %v4611, %v4630
      %v4698 = vmul.f32 %v4612, %v4634
      %v4699 = vmul.f32 %v4613, %v4622
      %v4700 = vmul.f32 %v4614, %v4626
      %v4701 = vmul.f32 %v4615, %v4630
      %v4702 = vmul.f32 %v4616, %v4634
      %v4703 = vld [vmem:[%s3] sm:$0xf]
      %v4705 = vlaneseq
      %v4706 = vshrl.u32 %v4705, 7
      %v4707 = vsub.s32 0, %v4706
      %v4708 = vrot.slane %v4703, %v4707
      %v4709 = vlaneseq
      %v4710 = vshrl.u32 %v4709, 7
      %v4711 = vsub.s32 1, %v4710
      %v4712 = vrot.slane %v4703, %v4711
      %v4713 = vlaneseq
      %v4714 = vshrl.u32 %v4713, 7
      %v4715 = vsub.s32 2, %v4714
      %v4716 = vrot.slane %v4703, %v4715
      %v4717 = vlaneseq
      %v4718 = vshrl.u32 %v4717, 7
      %v4719 = vsub.s32 3, %v4718
      %v4720 = vrot.slane %v4703, %v4719
      %v4725 = vadd.f32 %v4639, %v4708
      %v4726 = vadd.f32 %v4640, %v4712
      %v4727 = vadd.f32 %v4641, %v4716
      %v4728 = vadd.f32 %v4642, %v4720
      %v4729 = vadd.f32 %v4643, %v4708
      %v4730 = vadd.f32 %v4644, %v4712
      %v4731 = vadd.f32 %v4645, %v4716
      %v4732 = vadd.f32 %v4646, %v4720
      %v4733 = vadd.f32 %v4647, %v4708
      %v4734 = vadd.f32 %v4648, %v4712
      %v4735 = vadd.f32 %v4649, %v4716
      %v4736 = vadd.f32 %v4650, %v4720
      %v4737 = vadd.f32 %v4651, %v4708
      %v4738 = vadd.f32 %v4652, %v4712
      %v4739 = vadd.f32 %v4653, %v4716
      %v4740 = vadd.f32 %v4654, %v4720
      %v4741 = vadd.f32 %v4655, %v4708
      %v4742 = vadd.f32 %v4656, %v4712
      %v4743 = vadd.f32 %v4657, %v4716
      %v4744 = vadd.f32 %v4658, %v4720
      %v4745 = vadd.f32 %v4659, %v4708
      %v4746 = vadd.f32 %v4660, %v4712
      %v4747 = vadd.f32 %v4661, %v4716
      %v4748 = vadd.f32 %v4662, %v4720
      %v4749 = vadd.f32 %v4663, %v4708
      %v4750 = vadd.f32 %v4664, %v4712
      %v4751 = vadd.f32 %v4665, %v4716
      %v4752 = vadd.f32 %v4666, %v4720
      %v4753 = vadd.f32 %v4667, %v4708
      %v4754 = vadd.f32 %v4668, %v4712
      %v4755 = vadd.f32 %v4669, %v4716
      %v4756 = vadd.f32 %v4670, %v4720
      %v4757 = vadd.f32 %v4671, %v4708
      %v4758 = vadd.f32 %v4672, %v4712
      %v4759 = vadd.f32 %v4673, %v4716
      %v4760 = vadd.f32 %v4674, %v4720
      %v4761 = vadd.f32 %v4675, %v4708
      %v4762 = vadd.f32 %v4676, %v4712
      %v4763 = vadd.f32 %v4677, %v4716
      %v4764 = vadd.f32 %v4678, %v4720
      %v4765 = vadd.f32 %v4679, %v4708
      %v4766 = vadd.f32 %v4680, %v4712
      %v4767 = vadd.f32 %v4681, %v4716
      %v4768 = vadd.f32 %v4682, %v4720
      %v4769 = vadd.f32 %v4683, %v4708
      %v4770 = vadd.f32 %v4684, %v4712
      %v4771 = vadd.f32 %v4685, %v4716
      %v4772 = vadd.f32 %v4686, %v4720
      %v4773 = vadd.f32 %v4687, %v4708
      %v4774 = vadd.f32 %v4688, %v4712
      %v4775 = vadd.f32 %v4689, %v4716
      %v4776 = vadd.f32 %v4690, %v4720
      %v4777 = vadd.f32 %v4691, %v4708
      %v4778 = vadd.f32 %v4692, %v4712
      %v4779 = vadd.f32 %v4693, %v4716
      %v4780 = vadd.f32 %v4694, %v4720
      %v4781 = vadd.f32 %v4695, %v4708
      %v4782 = vadd.f32 %v4696, %v4712
      %v4783 = vadd.f32 %v4697, %v4716
      %v4784 = vadd.f32 %v4698, %v4720
      %v4785 = vadd.f32 %v4699, %v4708
      %v4786 = vadd.f32 %v4700, %v4712
      %v4787 = vadd.f32 %v4701, %v4716
      %v4788 = vadd.f32 %v4702, %v4720
      %v4789 = vmax.f32 %v4725, 0.0
      %v4790 = vmax.f32 %v4726, 0.0
      %v4791 = vmax.f32 %v4727, 0.0
      %v4792 = vmax.f32 %v4728, 0.0
      %v4793 = vmax.f32 %v4729, 0.0
      %v4794 = vmax.f32 %v4730, 0.0
      %v4795 = vmax.f32 %v4731, 0.0
      %v4796 = vmax.f32 %v4732, 0.0
      %v4797 = vmax.f32 %v4733, 0.0
      %v4798 = vmax.f32 %v4734, 0.0
      %v4799 = vmax.f32 %v4735, 0.0
      %v4800 = vmax.f32 %v4736, 0.0
      %v4801 = vmax.f32 %v4737, 0.0
      %v4802 = vmax.f32 %v4738, 0.0
      %v4803 = vmax.f32 %v4739, 0.0
      %v4804 = vmax.f32 %v4740, 0.0
      %v4805 = vmax.f32 %v4741, 0.0
      %v4806 = vmax.f32 %v4742, 0.0
      %v4807 = vmax.f32 %v4743, 0.0
      %v4808 = vmax.f32 %v4744, 0.0
      %v4809 = vmax.f32 %v4745, 0.0
      %v4810 = vmax.f32 %v4746, 0.0
      %v4811 = vmax.f32 %v4747, 0.0
      %v4812 = vmax.f32 %v4748, 0.0
      %v4813 = vmax.f32 %v4749, 0.0
      %v4814 = vmax.f32 %v4750, 0.0
      %v4815 = vmax.f32 %v4751, 0.0
      %v4816 = vmax.f32 %v4752, 0.0
      %v4817 = vmax.f32 %v4753, 0.0
      %v4818 = vmax.f32 %v4754, 0.0
      %v4819 = vmax.f32 %v4755, 0.0
      %v4820 = vmax.f32 %v4756, 0.0
      %v4821 = vmax.f32 %v4757, 0.0
      %v4822 = vmax.f32 %v4758, 0.0
      %v4823 = vmax.f32 %v4759, 0.0
      %v4824 = vmax.f32 %v4760, 0.0
      %v4825 = vmax.f32 %v4761, 0.0
      %v4826 = vmax.f32 %v4762, 0.0
      %v4827 = vmax.f32 %v4763, 0.0
      %v4828 = vmax.f32 %v4764, 0.0
      %v4829 = vmax.f32 %v4765, 0.0
      %v4830 = vmax.f32 %v4766, 0.0
      %v4831 = vmax.f32 %v4767, 0.0
      %v4832 = vmax.f32 %v4768, 0.0
      %v4833 = vmax.f32 %v4769, 0.0
      %v4834 = vmax.f32 %v4770, 0.0
      %v4835 = vmax.f32 %v4771, 0.0
      %v4836 = vmax.f32 %v4772, 0.0
      %v4837 = vmax.f32 %v4773, 0.0
      %v4838 = vmax.f32 %v4774, 0.0
      %v4839 = vmax.f32 %v4775, 0.0
      %v4840 = vmax.f32 %v4776, 0.0
      %v4841 = vmax.f32 %v4777, 0.0
      %v4842 = vmax.f32 %v4778, 0.0
      %v4843 = vmax.f32 %v4779, 0.0
      %v4844 = vmax.f32 %v4780, 0.0
      %v4845 = vmax.f32 %v4781, 0.0
      %v4846 = vmax.f32 %v4782, 0.0
      %v4847 = vmax.f32 %v4783, 0.0
      %v4848 = vmax.f32 %v4784, 0.0
      %v4849 = vmax.f32 %v4785, 0.0
      %v4850 = vmax.f32 %v4786, 0.0
      %v4851 = vmax.f32 %v4787, 0.0
      %v4852 = vmax.f32 %v4788, 0.0
      %4853 = vst [vmem:[%s231] sm:$0xff] %v4789
      %4854 = vst [vmem:[%s231 + $0x8] sm:$0xff] %v4790
      %4855 = vst [vmem:[%s231 + $0x10] sm:$0xff] %v4791
      %4856 = vst [vmem:[%s231 + $0x18] sm:$0xff] %v4792
      %4857 = vst [vmem:[%s231 + $0x20] sm:$0xff] %v4793
      %4858 = vst [vmem:[%s231 + $0x28] sm:$0xff] %v4794
      %4859 = vst [vmem:[%s231 + $0x30] sm:$0xff] %v4795
      %4860 = vst [vmem:[%s231 + $0x38] sm:$0xff] %v4796
      %4861 = vst [vmem:[%s231 + $0x40] sm:$0xff] %v4797
      %4862 = vst [vmem:[%s231 + $0x48] sm:$0xff] %v4798
      %4863 = vst [vmem:[%s231 + $0x50] sm:$0xff] %v4799
      %4864 = vst [vmem:[%s231 + $0x58] sm:$0xff] %v4800
      %4865 = vst [vmem:[%s231 + $0x60] sm:$0xff] %v4801
      %4866 = vst [vmem:[%s231 + $0x68] sm:$0xff] %v4802
      %4867 = vst [vmem:[%s231 + $0x70] sm:$0xff] %v4803
      %4868 = vst [vmem:[%s231 + $0x78] sm:$0xff] %v4804
      %4869 = vst [vmem:[%s231 + $0x80] sm:$0xff] %v4805
      %4870 = vst [vmem:[%s231 + $0x88] sm:$0xff] %v4806
      %4871 = vst [vmem:[%s231 + $0x90] sm:$0xff] %v4807
      %4872 = vst [vmem:[%s231 + $0x98] sm:$0xff] %v4808
      %4873 = vst [vmem:[%s231 + $0xa0] sm:$0xff] %v4809
      %4874 = vst [vmem:[%s231 + $0xa8] sm:$0xff] %v4810
      %4875 = vst [vmem:[%s231 + $0xb0] sm:$0xff] %v4811
      %4876 = vst [vmem:[%s231 + $0xb8] sm:$0xff] %v4812
      %4877 = vst [vmem:[%s231 + $0xc0] sm:$0xff] %v4813
      %4878 = vst [vmem:[%s231 + $0xc8] sm:$0xff] %v4814
      %4879 = vst [vmem:[%s231 + $0xd0] sm:$0xff] %v4815
      %4880 = vst [vmem:[%s231 + $0xd8] sm:$0xff] %v4816
      %4881 = vst [vmem:[%s231 + $0xe0] sm:$0xff] %v4817
      %4882 = vst [vmem:[%s231 + $0xe8] sm:$0xff] %v4818
      %4883 = vst [vmem:[%s231 + $0xf0] sm:$0xff] %v4819
      %4884 = vst [vmem:[%s231 + $0xf8] sm:$0xff] %v4820
      %4885 = vst [vmem:[%s231 + $0x100] sm:$0xff] %v4821
      %4886 = vst [vmem:[%s231 + $0x108] sm:$0xff] %v4822
      %4887 = vst [vmem:[%s231 + $0x110] sm:$0xff] %v4823
      %4888 = vst [vmem:[%s231 + $0x118] sm:$0xff] %v4824
      %4889 = vst [vmem:[%s231 + $0x120] sm:$0xff] %v4825
      %4890 = vst [vmem:[%s231 + $0x128] sm:$0xff] %v4826
      %4891 = vst [vmem:[%s231 + $0x130] sm:$0xff] %v4827
      %4892 = vst [vmem:[%s231 + $0x138] sm:$0xff] %v4828
      %4893 = vst [vmem:[%s231 + $0x140] sm:$0xff] %v4829
      %4894 = vst [vmem:[%s231 + $0x148] sm:$0xff] %v4830
      %4895 = vst [vmem:[%s231 + $0x150] sm:$0xff] %v4831
      %4896 = vst [vmem:[%s231 + $0x158] sm:$0xff] %v4832
      %4897 = vst [vmem:[%s231 + $0x160] sm:$0xff] %v4833
      %4898 = vst [vmem:[%s231 + $0x168] sm:$0xff] %v4834
      %4899 = vst [vmem:[%s231 + $0x170] sm:$0xff] %v4835
      %4900 = vst [vmem:[%s231 + $0x178] sm:$0xff] %v4836
      %4901 = vst [vmem:[%s231 + $0x180] sm:$0xff] %v4837
      %4902 = vst [vmem:[%s231 + $0x188] sm:$0xff] %v4838
      %4903 = vst [vmem:[%s231 + $0x190] sm:$0xff] %v4839
      %4904 = vst [vmem:[%s231 + $0x198] sm:$0xff] %v4840
      %4905 = vst [vmem:[%s231 + $0x1a0] sm:$0xff] %v4841
      %4906 = vst [vmem:[%s231 + $0x1a8] sm:$0xff] %v4842
      %4907 = vst [vmem:[%s231 + $0x1b0] sm:$0xff] %v4843
      %4908 = vst [vmem:[%s231 + $0x1b8] sm:$0xff] %v4844
      %4909 = vst [vmem:[%s231 + $0x1c0] sm:$0xff] %v4845
      %4910 = vst [vmem:[%s231 + $0x1c8] sm:$0xff] %v4846
      %4911 = vst [vmem:[%s231 + $0x1d0] sm:$0xff] %v4847
      %4912 = vst [vmem:[%s231 + $0x1d8] sm:$0xff] %v4848
      %4913 = vst [vmem:[%s231 + $0x1e0] sm:$0xff] %v4849
      %4914 = vst [vmem:[%s231 + $0x1e8] sm:$0xff] %v4850
      %4915 = vst [vmem:[%s231 + $0x1f0] sm:$0xff] %v4851
      %4916 = vst [vmem:[%s231 + $0x1f8] sm:$0xff] %v4852
      %s4917 = smul.u32 %s19, 2
      %s4918 = sadd.s32 %s4917, %s20
      %p4919 = scmp.lt.s32.totalorder %s4918, 3
      %s4920 = scalar_select %p4919, %s4918, 3
      %s4921 = smul.addr %s4920, 64
      %s4922 = smul.addr %s4921, 8
      %s4923 = scalar_lea.vmem %s4, %s4922
      // Predicated region
      $region37: #{singleconv_forward.1} parent=35 // pred_check
        %p4924 = pneg %p142
      $region38: #{singleconv_forward.1} parent=35 // pred_check_branch
        %4926 = sbr.rel (%p4924) target = $region40
      $region39: #{singleconv_forward.1} parent=35 // pred_region
        %s4927 = smul.u32 %s19, 2
        %s4928 = sadd.s32 %s4927, %s20
      $region40: #{singleconv_forward.1} parent=35 // pred_fallthru
        _
    $region36: #{singleconv_forward.1} parent=5 // pred_fallthru
      _
    %p4929 = scmp.le.s32.totalorder 2, %s10
    // Predicated region
    $region41: #{singleconv_forward.1} parent=5 // pred_check
      %p4930 = pneg %p4929
    $region42: #{singleconv_forward.1} parent=5 // pred_check_branch
      %4932 = sbr.rel (%p4930) target = $region44
    $region43: #{singleconv_forward.1} parent=5 // pred_region
      %s4933 = ssub.s32 %s10, 2
      // Predicated region
      $region45: #{singleconv_forward.1} parent=43 // pred_check
        %p4934 = pneg %p148
      $region46: #{singleconv_forward.1} parent=43 // pred_check_branch
        %4936 = sbr.rel (%p4934) target = $region48
      $region47: #{singleconv_forward.1} parent=43 // pred_region
        %s4937 = smul.u32 %s21, 2
        %s4938 = sadd.s32 %s4937, %s22
        %p4939 = scmp.lt.s32.totalorder %s4938, 3
        %s4940 = scalar_select %p4939, %s4938, 3
        %s4941 = smul.addr %s4940, 64
        %s4942 = smul.addr %s4941, 8
        %s4943 = scalar_lea.vmem %s4, %s4942
      $region48: #{singleconv_forward.1} parent=43 // pred_fallthru
        _
    $region44: #{singleconv_forward.1} parent=5 // pred_fallthru
      _
  $region6: #{singleconv_forward.1} parent=0 // loop_footer
    %s14 = sadd.s32 1, %s10
  $region7: #{singleconv_forward.1} parent=0 // loop_footer_branch
    %9 = sbr.rel target = $region3
  $region8: #{singleconv_forward.1} parent=0 // loop_exit
    _

</llo_original>
